<compile_context>
chip_gen: v6e
topology: v6e:2x2x1
jax: 0.10.0
libtpu: 0.0.40
codegen_flags: <defaults>
</compile_context>

<pallas_src>
import functools

import jax
import jax.numpy as jnp
from jax.experimental import pallas as pl
from jax.experimental.pallas import tpu as pltpu

EPS = 1e-5


# ---------------------------------------------------------------------------
# In-kernel helpers (traced inside the Pallas kernels)
# ---------------------------------------------------------------------------
def _conv3x3_im2col(x, w):
    """SAME 3x3 conv of one image via a single im2col matmul.

    x: (H, W, Cin) f32 value; w: (9*Cin, Cout) in matmul dtype.
    Returns (H*W, Cout) f32.
    """
    H, W, Cin = x.shape
    # In-kernel zero padding (no jnp.pad / HBM round trip in the wrapper).
    zrow = jnp.zeros((1, W, Cin), x.dtype)
    xp = jnp.concatenate([zrow, x, zrow], axis=0)            # (H+2, W, Cin)
    zcol = jnp.zeros((H + 2, 1, Cin), x.dtype)
    xp = jnp.concatenate([zcol, xp, zcol], axis=1)           # (H+2, W+2, Cin)
    # im2col: 9 shifted windows concatenated on the channel (lane) axis,
    # tap order (dy, dx, cin) matching the wrapper's weight reshape.
    cols = [xp[dy:dy + H, dx:dx + W, :] for dy in range(3) for dx in range(3)]
    slab = jnp.concatenate(cols, axis=-1).reshape(H * W, 9 * Cin)
    # One MXU matmul, f32 accumulation (operands optionally bf16).
    return jnp.dot(slab.astype(w.dtype), w, preferred_element_type=jnp.float32)


def _channel_stats(y):
    """Per-channel sum and sum-of-squares of a (H*W, C) f32 value -> (2, C)."""
    s = jnp.sum(y, axis=0, keepdims=True)
    ss = jnp.sum(y * y, axis=0, keepdims=True)
    return jnp.concatenate([s, ss], axis=0)


# ---------------------------------------------------------------------------
# Pallas kernels (grid = (N,), one image per step)
# ---------------------------------------------------------------------------
def _conv_stats_kernel(x_ref, w_ref, y_ref, st_ref):
    """Phase 1: y = conv1(x) (bias dropped, cancelled by BN); emit bn1 stats."""
    _, H, W, _ = x_ref.shape
    cout = w_ref.shape[-1]
    y = _conv3x3_im2col(x_ref[0], w_ref[...])                # (H*W, Cout) f32
    y_ref[...] = y.reshape(1, H, W, cout)
    st_ref[...] = _channel_stats(y).reshape(1, 2, cout)


def _bn_relu_conv_stats_kernel(y1_ref, sc_ref, sh_ref, w_ref, y2_ref, st_ref):
    """Phase 2: h = relu(bn1(y1)) via per-channel FMA; y2 = conv2(h); bn2 stats."""
    _, H, W, _ = y1_ref.shape
    cout = w_ref.shape[-1]
    h = jnp.maximum(y1_ref[...] * sc_ref[...] + sh_ref[...], 0.0)   # (1,H,W,C)
    y = _conv3x3_im2col(h[0], w_ref[...])                    # (H*W, Cout) f32
    y2_ref[...] = y.reshape(1, H, W, cout)
    st_ref[...] = _channel_stats(y).reshape(1, 2, cout)


def _bn_add_relu_kernel(y2_ref, x_ref, sc_ref, sh_ref, o_ref):
    """Phase 3: out = relu(bn2(y2) + x) with bn2 as a per-channel FMA."""
    o_ref[...] = jnp.maximum(
        y2_ref[...] * sc_ref[...] + sh_ref[...] + x_ref[...], 0.0)


# ---------------------------------------------------------------------------
# Wrapper: layout glue, per-channel BN scale/shift, pallas_call plumbing
# ---------------------------------------------------------------------------
def _compiler_params():
    # Batch axis -> "parallel" (megacore sharding on v7x).  Default scoped-VMEM
    # budget is ample for per-image blocks of every real ResNet18 stage.
    return pltpu.CompilerParams(dimension_semantics=("parallel",))


def _bn_scale_shift(stats, gamma, beta, count):
    """Fold batch stats into per-channel scale/shift (O(C) work, done once)."""
    s = jnp.sum(stats[:, 0, :], axis=0)                      # (C,)
    ss = jnp.sum(stats[:, 1, :], axis=0)
    mean = s / count
    var = jnp.maximum(ss / count - mean * mean, 0.0)         # biased variance
    scale = gamma * jax.lax.rsqrt(var + EPS)
    shift = beta - mean * scale
    return scale.reshape(1, 1, 1, -1), shift.reshape(1, 1, 1, -1)


@functools.partial(jax.jit, static_argnames=("mm_dtype",))
def residual_forward(x_nchw, params, mm_dtype=jnp.float32):
    x = jnp.transpose(x_nchw, (0, 2, 3, 1)).astype(jnp.float32)   # NCHW -> NHWC
    N, H, W, C = x.shape
    count = jnp.float32(N * H * W)

    # (3,3,Ci,Co) -> (9*Ci, Co), tap order matching the in-kernel im2col.
    w1 = params["w1"].reshape(9 * C, C).astype(mm_dtype)
    w2 = params["w2"].reshape(9 * C, C).astype(mm_dtype)

    img_spec = pl.BlockSpec((1, H, W, C), lambda n: (n, 0, 0, 0))  # lane-dense C
    w_spec = pl.BlockSpec((9 * C, C), lambda n: (0, 0))            # grid-resident
    vec_spec = pl.BlockSpec((1, 1, 1, C), lambda n: (0, 0, 0, 0))
    st_spec = pl.BlockSpec((1, 2, C), lambda n: (n, 0, 0))

    img_sd = jax.ShapeDtypeStruct((N, H, W, C), jnp.float32)
    st_sd = jax.ShapeDtypeStruct((N, 2, C), jnp.float32)

    # Phase 1: conv1 + bn1 statistics.
    y1c, st1 = pl.pallas_call(
        _conv_stats_kernel,
        grid=(N,),
        in_specs=[img_spec, w_spec],
        out_specs=[img_spec, st_spec],
        out_shape=[img_sd, st_sd],
        compiler_params=_compiler_params(),
    )(x, w1)
    sc1, sh1 = _bn_scale_shift(st1, params["g1"], params["be1"], count)

    # Phase 2: apply bn1 + relu, conv2 + bn2 statistics.
    y2c, st2 = pl.pallas_call(
        _bn_relu_conv_stats_kernel,
        grid=(N,),
        in_specs=[img_spec, vec_spec, vec_spec, w_spec],
        out_specs=[img_spec, st_spec],
        out_shape=[img_sd, st_sd],
        compiler_params=_compiler_params(),
    )(y1c, sc1, sh1, w2)
    sc2, sh2 = _bn_scale_shift(st2, params["g2"], params["be2"], count)

    # Phase 3: apply bn2 + residual add + relu.
    out = pl.pallas_call(
        _bn_add_relu_kernel,
        grid=(N,),
        in_specs=[img_spec, img_spec, vec_spec, vec_spec],
        out_specs=img_spec,
        out_shape=img_sd,
        compiler_params=_compiler_params(),
    )(y2c, x, sc2, sh2)

    return jnp.transpose(out, (0, 3, 1, 2))                  # NHWC -> NCHW


# ---------------------------------------------------------------------------
# Pure-JAX reference (includes the conv biases; BN cancels them exactly)
# ---------------------------------------------------------------------------
def residual_reference(x_nchw, p):
    x = jnp.transpose(x_nchw, (0, 2, 3, 1)).astype(jnp.float32)

    def conv(z, w, b):
        return jax.lax.conv_general_dilated(
            z, w, window_strides=(1, 1), padding="SAME",
            dimension_numbers=("NHWC", "HWIO", "NHWC")) + b.reshape(1, 1, 1, -1)

    def bn(y, g, be):
        mean = jnp.mean(y, axis=(0, 1, 2), keepdims=True)
        var = jnp.mean((y - mean) ** 2, axis=(0, 1, 2), keepdims=True)
        return (g.reshape(1, 1, 1, -1) * (y - mean) * jax.lax.rsqrt(var + EPS)
                + be.reshape(1, 1, 1, -1))

    y = jax.nn.relu(bn(conv(x, p["w1"], p["b1"]), p["g1"], p["be1"]))
    y = bn(conv(y, p["w2"], p["b2"]), p["g2"], p["be2"])
    return jnp.transpose(jax.nn.relu(y + x), (0, 3, 1, 2))


# ---------------------------------------------------------------------------
if __name__ == "__main__":
    N, C, H, W = 2, 4, 16, 16

    key = jax.random.PRNGKey(0)
    kx, k1, k2, k3, k4 = jax.random.split(key, 5)

    x = jax.random.normal(kx, (N, C, H, W), jnp.float32)     # NCHW like PyTorch

    params = {
        "w1": jax.random.normal(k1, (3, 3, C, C), jnp.float32) * 0.1,
        "b1": jax.random.normal(k2, (C,), jnp.float32) * 0.1,  # reference only
        "w2": jax.random.normal(k3, (3, 3, C, C), jnp.float32) * 0.1,
        "b2": jax.random.normal(k4, (C,), jnp.float32) * 0.1,  # cancelled by BN
        "g1": jnp.ones((C,), jnp.float32),    # BatchNorm defaults: gamma=1
        "be1": jnp.zeros((C,), jnp.float32),  #                     beta=0
        "g2": jnp.ones((C,), jnp.float32),
        "be2": jnp.zeros((C,), jnp.float32),
    }

    ref = jax.block_until_ready(residual_reference(x, params))

    # f32 matmul path: exact semantics of the f32 PyTorch module.
    out = jax.block_until_ready(residual_forward(x, params))
    assert out.shape == (N, C, H, W), out.shape
    assert jnp.allclose(out, ref, atol=1e-3, rtol=1e-3), \
        float(jnp.max(jnp.abs(out - ref)))

    # bf16 MXU-operand path (f32 accumulation + f32 BN stats): loose tolerance.
    out_bf16 = jax.block_until_ready(
        residual_forward(x, params, mm_dtype=jnp.bfloat16))
    assert out_bf16.shape == (N, C, H, W), out_bf16.shape
    assert jnp.allclose(out_bf16, ref, atol=1e-1, rtol=1e-1), \
        float(jnp.max(jnp.abs(out_bf16 - ref)))

    print("KERNEL_OK")
</pallas_src>

<mosaic_0001>
module attributes {stable_mosaic.version = 11 : i64} {
  func.func @_conv_stats_kernel(%arg0: i32, %arg1: memref<1x16x16x4xf32, #tpu.memory_space<vmem>>, %arg2: memref<36x4xf32, #tpu.memory_space<vmem>>, %arg3: memref<1x16x16x4xf32, #tpu.memory_space<vmem>>, %arg4: memref<1x2x4xf32, #tpu.memory_space<vmem>>) attributes {dimension_semantics = [#tpu.dimension_semantics<parallel>], iteration_bounds = array<i64: 2>, scalar_prefetch = 0 : i64, scratch_operands = 0 : i64, tpu.core_type = #tpu.core_type<tc>, window_params = [{transform_indices = @transform_0, window_bounds = array<i64: 1, 16, 16, 4>}, {pipeline_mode = #tpu.pipeline_mode<synchronous>, transform_indices = @transform_1, window_bounds = array<i64: 36, 4>}, {transform_indices = @transform_2, window_bounds = array<i64: 1, 16, 16, 4>}, {transform_indices = @transform_3, window_bounds = array<i64: 1, 2, 4>}]} {
    %c0 = arith.constant 0 : index
    %c0_0 = arith.constant 0 : index
    %c0_1 = arith.constant 0 : index
    %c0_2 = arith.constant 0 : index
    %0 = vector.load %arg1[%c0, %c0_0, %c0_1, %c0_2] : memref<1x16x16x4xf32, #tpu.memory_space<vmem>>, vector<1x16x16x4xf32>
    %1 = vector.shape_cast %0 : vector<1x16x16x4xf32> to vector<16x16x4xf32>
    %c0_3 = arith.constant 0 : index
    %c0_4 = arith.constant 0 : index
    %2 = vector.load %arg2[%c0_3, %c0_4] : memref<36x4xf32, #tpu.memory_space<vmem>>, vector<36x4xf32>
    %cst = arith.constant 0.000000e+00 : f32
    %3 = vector.broadcast %cst : f32 to vector<1x16x4xf32>
    %4 = tpu.concatenate %3, %1, %3 in 0 : vector<1x16x4xf32>, vector<16x16x4xf32>, vector<1x16x4xf32> -> vector<18x16x4xf32>
    %cst_5 = arith.constant 0.000000e+00 : f32
    %5 = vector.broadcast %cst_5 : f32 to vector<18x1x4xf32>
    %6 = tpu.concatenate %5, %4, %5 in 1 : vector<18x1x4xf32>, vector<18x16x4xf32>, vector<18x1x4xf32> -> vector<18x18x4xf32>
    %7 = vector.extract_strided_slice %6 {offsets = [0, 0, 0], sizes = [16, 16, 4], strides = [1, 1, 1]} : vector<18x18x4xf32> to vector<16x16x4xf32>
    %8 = vector.extract_strided_slice %6 {offsets = [0, 1, 0], sizes = [16, 16, 4], strides = [1, 1, 1]} : vector<18x18x4xf32> to vector<16x16x4xf32>
    %9 = vector.extract_strided_slice %6 {offsets = [0, 2, 0], sizes = [16, 16, 4], strides = [1, 1, 1]} : vector<18x18x4xf32> to vector<16x16x4xf32>
    %10 = vector.extract_strided_slice %6 {offsets = [1, 0, 0], sizes = [16, 16, 4], strides = [1, 1, 1]} : vector<18x18x4xf32> to vector<16x16x4xf32>
    %11 = vector.extract_strided_slice %6 {offsets = [1, 1, 0], sizes = [16, 16, 4], strides = [1, 1, 1]} : vector<18x18x4xf32> to vector<16x16x4xf32>
    %12 = vector.extract_strided_slice %6 {offsets = [1, 2, 0], sizes = [16, 16, 4], strides = [1, 1, 1]} : vector<18x18x4xf32> to vector<16x16x4xf32>
    %13 = vector.extract_strided_slice %6 {offsets = [2, 0, 0], sizes = [16, 16, 4], strides = [1, 1, 1]} : vector<18x18x4xf32> to vector<16x16x4xf32>
    %14 = vector.extract_strided_slice %6 {offsets = [2, 1, 0], sizes = [16, 16, 4], strides = [1, 1, 1]} : vector<18x18x4xf32> to vector<16x16x4xf32>
    %15 = vector.extract_strided_slice %6 {offsets = [2, 2, 0], sizes = [16, 16, 4], strides = [1, 1, 1]} : vector<18x18x4xf32> to vector<16x16x4xf32>
    %16 = tpu.concatenate %7, %8, %9, %10, %11, %12, %13, %14, %15 in 2 : vector<16x16x4xf32>, vector<16x16x4xf32>, vector<16x16x4xf32>, vector<16x16x4xf32>, vector<16x16x4xf32>, vector<16x16x4xf32>, vector<16x16x4xf32>, vector<16x16x4xf32>, vector<16x16x4xf32> -> vector<16x16x36xf32>
    %17 = vector.shape_cast %16 : vector<16x16x36xf32> to vector<256x36xf32>
    %cst_6 = arith.constant dense<0.000000e+00> : vector<256x4xf32>
    %18 = tpu.matmul %17, %2, %cst_6 {dimension_numbers = #tpu.dot_dimension_numbers<[1], [0], [0], [1], [0, 0, 1, 1], [], []>} : vector<256x36xf32>, vector<36x4xf32>, vector<256x4xf32> -> vector<256x4xf32>
    %19 = vector.shape_cast %18 : vector<256x4xf32> to vector<1x16x16x4xf32>
    %c0_7 = arith.constant 0 : index
    %c0_8 = arith.constant 0 : index
    %c0_9 = arith.constant 0 : index
    %c0_10 = arith.constant 0 : index
    %20 = vector.load %arg3[%c0_7, %c0_8, %c0_9, %c0_10] : memref<1x16x16x4xf32, #tpu.memory_space<vmem>>, vector<1x16x16x4xf32>
    tpu.vector_store %arg3[%c0_7, %c0_8, %c0_9, %c0_10], %19 {strides = array<i32>} : memref<1x16x16x4xf32, #tpu.memory_space<vmem>>, vector<1x16x16x4xf32>,
    %cst_11 = arith.constant dense<0.000000e+00> : vector<4xf32>
    %21 = vector.multi_reduction <add>, %18, %cst_11 [0] : vector<256x4xf32> to vector<4xf32>
    %22 = vector.shape_cast %21 : vector<4xf32> to vector<1x4xf32>
    %23 = arith.mulf %18, %18 : vector<256x4xf32>
    %cst_12 = arith.constant dense<0.000000e+00> : vector<4xf32>
    %24 = vector.multi_reduction <add>, %23, %cst_12 [0] : vector<256x4xf32> to vector<4xf32>
    %25 = vector.shape_cast %24 : vector<4xf32> to vector<1x4xf32>
    %26 = tpu.concatenate %22, %25 in 0 : vector<1x4xf32>, vector<1x4xf32> -> vector<2x4xf32>
    %27 = vector.shape_cast %26 : vector<2x4xf32> to vector<1x2x4xf32>
    %c0_13 = arith.constant 0 : index
    %c0_14 = arith.constant 0 : index
    %c0_15 = arith.constant 0 : index
    %28 = vector.load %arg4[%c0_13, %c0_14, %c0_15] : memref<1x2x4xf32, #tpu.memory_space<vmem>>, vector<1x2x4xf32>
    tpu.vector_store %arg4[%c0_13, %c0_14, %c0_15], %27 {strides = array<i32>} : memref<1x2x4xf32, #tpu.memory_space<vmem>>, vector<1x2x4xf32>,
    return
  }
  func.func @transform_0(%arg0: i32) -> (i32, i32, i32, i32) {
    %c0_i32 = arith.constant 0 : i32
    %c0_i32_0 = arith.constant 0 : i32
    %c0_i32_1 = arith.constant 0 : i32
    %c0_i32_2 = arith.constant 0 : i32
    return %arg0, %c0_i32, %c0_i32_0, %c0_i32_1 : i32, i32, i32, i32
  }
  func.func @transform_1(%arg0: i32) -> (i32, i32) {
    %c0_i32 = arith.constant 0 : i32
    %c0_i32_0 = arith.constant 0 : i32
    %c0_i32_1 = arith.constant 0 : i32
    return %c0_i32, %c0_i32_0 : i32, i32
  }
  func.func @transform_2(%arg0: i32) -> (i32, i32, i32, i32) {
    %c0_i32 = arith.constant 0 : i32
    %c0_i32_0 = arith.constant 0 : i32
    %c0_i32_1 = arith.constant 0 : i32
    %c0_i32_2 = arith.constant 0 : i32
    return %arg0, %c0_i32, %c0_i32_0, %c0_i32_1 : i32, i32, i32, i32
  }
  func.func @transform_3(%arg0: i32) -> (i32, i32, i32) {
    %c0_i32 = arith.constant 0 : i32
    %c0_i32_0 = arith.constant 0 : i32
    %c0_i32_1 = arith.constant 0 : i32
    return %arg0, %c0_i32, %c0_i32_0 : i32, i32, i32
  }
}

module attributes {stable_mosaic.version = 11 : i64} {
  func.func @_bn_add_relu_kernel(%arg0: i32, %arg1: memref<1x16x16x4xf32, #tpu.memory_space<vmem>>, %arg2: memref<1x16x16x4xf32, #tpu.memory_space<vmem>>, %arg3: memref<1x1x1x4xf32, #tpu.memory_space<vmem>>, %arg4: memref<1x1x1x4xf32, #tpu.memory_space<vmem>>, %arg5: memref<1x16x16x4xf32, #tpu.memory_space<vmem>>) attributes {dimension_semantics = [#tpu.dimension_semantics<parallel>], iteration_bounds = array<i64: 2>, scalar_prefetch = 0 : i64, scratch_operands = 0 : i64, tpu.core_type = #tpu.core_type<tc>, window_params = [{transform_indices = @transform_0, window_bounds = array<i64: 1, 16, 16, 4>}, {transform_indices = @transform_1, window_bounds = array<i64: 1, 16, 16, 4>}, {pipeline_mode = #tpu.pipeline_mode<synchronous>, transform_indices = @transform_2, window_bounds = array<i64: 1, 1, 1, 4>}, {pipeline_mode = #tpu.pipeline_mode<synchronous>, transform_indices = @transform_3, window_bounds = array<i64: 1, 1, 1, 4>}, {transform_indices = @transform_4, window_bounds = array<i64: 1, 16, 16, 4>}]} {
    %c0 = arith.constant 0 : index
    %c0_0 = arith.constant 0 : index
    %c0_1 = arith.constant 0 : index
    %c0_2 = arith.constant 0 : index
    %0 = vector.load %arg1[%c0, %c0_0, %c0_1, %c0_2] : memref<1x16x16x4xf32, #tpu.memory_space<vmem>>, vector<1x16x16x4xf32>
    %c0_3 = arith.constant 0 : index
    %c0_4 = arith.constant 0 : index
    %c0_5 = arith.constant 0 : index
    %c0_6 = arith.constant 0 : index
    %1 = vector.load %arg3[%c0_3, %c0_4, %c0_5, %c0_6] : memref<1x1x1x4xf32, #tpu.memory_space<vmem>>, vector<1x1x1x4xf32>
    %2 = vector.broadcast %1 : vector<1x1x1x4xf32> to vector<1x16x16x4xf32>
    %3 = arith.mulf %0, %2 : vector<1x16x16x4xf32>
    %c0_7 = arith.constant 0 : index
    %c0_8 = arith.constant 0 : index
    %c0_9 = arith.constant 0 : index
    %c0_10 = arith.constant 0 : index
    %4 = vector.load %arg4[%c0_7, %c0_8, %c0_9, %c0_10] : memref<1x1x1x4xf32, #tpu.memory_space<vmem>>, vector<1x1x1x4xf32>
    %5 = vector.broadcast %4 : vector<1x1x1x4xf32> to vector<1x16x16x4xf32>
    %6 = arith.addf %3, %5 : vector<1x16x16x4xf32>
    %c0_11 = arith.constant 0 : index
    %c0_12 = arith.constant 0 : index
    %c0_13 = arith.constant 0 : index
    %c0_14 = arith.constant 0 : index
    %7 = vector.load %arg2[%c0_11, %c0_12, %c0_13, %c0_14] : memref<1x16x16x4xf32, #tpu.memory_space<vmem>>, vector<1x16x16x4xf32>
    %8 = arith.addf %6, %7 : vector<1x16x16x4xf32>
    %cst = arith.constant 0.000000e+00 : f32
    %9 = vector.broadcast %cst : f32 to vector<1x16x16x4xf32>
    %10 = arith.maximumf %8, %9 : vector<1x16x16x4xf32>
    %c0_15 = arith.constant 0 : index
    %c0_16 = arith.constant 0 : index
    %c0_17 = arith.constant 0 : index
    %c0_18 = arith.constant 0 : index
    %11 = vector.load %arg5[%c0_15, %c0_16, %c0_17, %c0_18] : memref<1x16x16x4xf32, #tpu.memory_space<vmem>>, vector<1x16x16x4xf32>
    tpu.vector_store %arg5[%c0_15, %c0_16, %c0_17, %c0_18], %10 {strides = array<i32>} : memref<1x16x16x4xf32, #tpu.memory_space<vmem>>, vector<1x16x16x4xf32>,
    return
  }
  func.func @transform_0(%arg0: i32) -> (i32, i32, i32, i32) {
    %c0_i32 = arith.constant 0 : i32
    %c0_i32_0 = arith.constant 0 : i32
    %c0_i32_1 = arith.constant 0 : i32
    %c0_i32_2 = arith.constant 0 : i32
    return %arg0, %c0_i32, %c0_i32_0, %c0_i32_1 : i32, i32, i32, i32
  }
  func.func @transform_1(%arg0: i32) -> (i32, i32, i32, i32) {
    %c0_i32 = arith.constant 0 : i32
    %c0_i32_0 = arith.constant 0 : i32
    %c0_i32_1 = arith.constant 0 : i32
    %c0_i32_2 = arith.constant 0 : i32
    return %arg0, %c0_i32, %c0_i32_0, %c0_i32_1 : i32, i32, i32, i32
  }
  func.func @transform_2(%arg0: i32) -> (i32, i32, i32, i32) {
    %c0_i32 = arith.constant 0 : i32
    %c0_i32_0 = arith.constant 0 : i32
    %c0_i32_1 = arith.constant 0 : i32
    %c0_i32_2 = arith.constant 0 : i32
    %c0_i32_3 = arith.constant 0 : i32
    return %c0_i32, %c0_i32_0, %c0_i32_1, %c0_i32_2 : i32, i32, i32, i32
  }
  func.func @transform_3(%arg0: i32) -> (i32, i32, i32, i32) {
    %c0_i32 = arith.constant 0 : i32
    %c0_i32_0 = arith.constant 0 : i32
    %c0_i32_1 = arith.constant 0 : i32
    %c0_i32_2 = arith.constant 0 : i32
    %c0_i32_3 = arith.constant 0 : i32
    return %c0_i32, %c0_i32_0, %c0_i32_1, %c0_i32_2 : i32, i32, i32, i32
  }
  func.func @transform_4(%arg0: i32) -> (i32, i32, i32, i32) {
    %c0_i32 = arith.constant 0 : i32
    %c0_i32_0 = arith.constant 0 : i32
    %c0_i32_1 = arith.constant 0 : i32
    %c0_i32_2 = arith.constant 0 : i32
    return %arg0, %c0_i32, %c0_i32_0, %c0_i32_1 : i32, i32, i32, i32
  }
}

module attributes {stable_mosaic.version = 11 : i64} {
  func.func @_bn_relu_conv_stats_kernel(%arg0: i32, %arg1: memref<1x16x16x4xf32, #tpu.memory_space<vmem>>, %arg2: memref<1x1x1x4xf32, #tpu.memory_space<vmem>>, %arg3: memref<1x1x1x4xf32, #tpu.memory_space<vmem>>, %arg4: memref<36x4xf32, #tpu.memory_space<vmem>>, %arg5: memref<1x16x16x4xf32, #tpu.memory_space<vmem>>, %arg6: memref<1x2x4xf32, #tpu.memory_space<vmem>>) attributes {dimension_semantics = [#tpu.dimension_semantics<parallel>], iteration_bounds = array<i64: 2>, scalar_prefetch = 0 : i64, scratch_operands = 0 : i64, tpu.core_type = #tpu.core_type<tc>, window_params = [{transform_indices = @transform_0, window_bounds = array<i64: 1, 16, 16, 4>}, {pipeline_mode = #tpu.pipeline_mode<synchronous>, transform_indices = @transform_1, window_bounds = array<i64: 1, 1, 1, 4>}, {pipeline_mode = #tpu.pipeline_mode<synchronous>, transform_indices = @transform_2, window_bounds = array<i64: 1, 1, 1, 4>}, {pipeline_mode = #tpu.pipeline_mode<synchronous>, transform_indices = @transform_3, window_bounds = array<i64: 36, 4>}, {transform_indices = @transform_4, window_bounds = array<i64: 1, 16, 16, 4>}, {transform_indices = @transform_5, window_bounds = array<i64: 1, 2, 4>}]} {
    %c0 = arith.constant 0 : index
    %c0_0 = arith.constant 0 : index
    %c0_1 = arith.constant 0 : index
    %c0_2 = arith.constant 0 : index
    %0 = vector.load %arg1[%c0, %c0_0, %c0_1, %c0_2] : memref<1x16x16x4xf32, #tpu.memory_space<vmem>>, vector<1x16x16x4xf32>
    %c0_3 = arith.constant 0 : index
    %c0_4 = arith.constant 0 : index
    %c0_5 = arith.constant 0 : index
    %c0_6 = arith.constant 0 : index
    %1 = vector.load %arg2[%c0_3, %c0_4, %c0_5, %c0_6] : memref<1x1x1x4xf32, #tpu.memory_space<vmem>>, vector<1x1x1x4xf32>
    %2 = vector.broadcast %1 : vector<1x1x1x4xf32> to vector<1x16x16x4xf32>
    %3 = arith.mulf %0, %2 : vector<1x16x16x4xf32>
    %c0_7 = arith.constant 0 : index
    %c0_8 = arith.constant 0 : index
    %c0_9 = arith.constant 0 : index
    %c0_10 = arith.constant 0 : index
    %4 = vector.load %arg3[%c0_7, %c0_8, %c0_9, %c0_10] : memref<1x1x1x4xf32, #tpu.memory_space<vmem>>, vector<1x1x1x4xf32>
    %5 = vector.broadcast %4 : vector<1x1x1x4xf32> to vector<1x16x16x4xf32>
    %6 = arith.addf %3, %5 : vector<1x16x16x4xf32>
    %cst = arith.constant 0.000000e+00 : f32
    %7 = vector.broadcast %cst : f32 to vector<1x16x16x4xf32>
    %8 = arith.maximumf %6, %7 : vector<1x16x16x4xf32>
    %9 = vector.shape_cast %8 : vector<1x16x16x4xf32> to vector<16x16x4xf32>
    %c0_11 = arith.constant 0 : index
    %c0_12 = arith.constant 0 : index
    %10 = vector.load %arg4[%c0_11, %c0_12] : memref<36x4xf32, #tpu.memory_space<vmem>>, vector<36x4xf32>
    %cst_13 = arith.constant 0.000000e+00 : f32
    %11 = vector.broadcast %cst_13 : f32 to vector<1x16x4xf32>
    %12 = tpu.concatenate %11, %9, %11 in 0 : vector<1x16x4xf32>, vector<16x16x4xf32>, vector<1x16x4xf32> -> vector<18x16x4xf32>
    %cst_14 = arith.constant 0.000000e+00 : f32
    %13 = vector.broadcast %cst_14 : f32 to vector<18x1x4xf32>
    %14 = tpu.concatenate %13, %12, %13 in 1 : vector<18x1x4xf32>, vector<18x16x4xf32>, vector<18x1x4xf32> -> vector<18x18x4xf32>
    %15 = vector.extract_strided_slice %14 {offsets = [0, 0, 0], sizes = [16, 16, 4], strides = [1, 1, 1]} : vector<18x18x4xf32> to vector<16x16x4xf32>
    %16 = vector.extract_strided_slice %14 {offsets = [0, 1, 0], sizes = [16, 16, 4], strides = [1, 1, 1]} : vector<18x18x4xf32> to vector<16x16x4xf32>
    %17 = vector.extract_strided_slice %14 {offsets = [0, 2, 0], sizes = [16, 16, 4], strides = [1, 1, 1]} : vector<18x18x4xf32> to vector<16x16x4xf32>
    %18 = vector.extract_strided_slice %14 {offsets = [1, 0, 0], sizes = [16, 16, 4], strides = [1, 1, 1]} : vector<18x18x4xf32> to vector<16x16x4xf32>
    %19 = vector.extract_strided_slice %14 {offsets = [1, 1, 0], sizes = [16, 16, 4], strides = [1, 1, 1]} : vector<18x18x4xf32> to vector<16x16x4xf32>
    %20 = vector.extract_strided_slice %14 {offsets = [1, 2, 0], sizes = [16, 16, 4], strides = [1, 1, 1]} : vector<18x18x4xf32> to vector<16x16x4xf32>
    %21 = vector.extract_strided_slice %14 {offsets = [2, 0, 0], sizes = [16, 16, 4], strides = [1, 1, 1]} : vector<18x18x4xf32> to vector<16x16x4xf32>
    %22 = vector.extract_strided_slice %14 {offsets = [2, 1, 0], sizes = [16, 16, 4], strides = [1, 1, 1]} : vector<18x18x4xf32> to vector<16x16x4xf32>
    %23 = vector.extract_strided_slice %14 {offsets = [2, 2, 0], sizes = [16, 16, 4], strides = [1, 1, 1]} : vector<18x18x4xf32> to vector<16x16x4xf32>
    %24 = tpu.concatenate %15, %16, %17, %18, %19, %20, %21, %22, %23 in 2 : vector<16x16x4xf32>, vector<16x16x4xf32>, vector<16x16x4xf32>, vector<16x16x4xf32>, vector<16x16x4xf32>, vector<16x16x4xf32>, vector<16x16x4xf32>, vector<16x16x4xf32>, vector<16x16x4xf32> -> vector<16x16x36xf32>
    %25 = vector.shape_cast %24 : vector<16x16x36xf32> to vector<256x36xf32>
    %cst_15 = arith.constant dense<0.000000e+00> : vector<256x4xf32>
    %26 = tpu.matmul %25, %10, %cst_15 {dimension_numbers = #tpu.dot_dimension_numbers<[1], [0], [0], [1], [0, 0, 1, 1], [], []>} : vector<256x36xf32>, vector<36x4xf32>, vector<256x4xf32> -> vector<256x4xf32>
    %27 = vector.shape_cast %26 : vector<256x4xf32> to vector<1x16x16x4xf32>
    %c0_16 = arith.constant 0 : index
    %c0_17 = arith.constant 0 : index
    %c0_18 = arith.constant 0 : index
    %c0_19 = arith.constant 0 : index
    %28 = vector.load %arg5[%c0_16, %c0_17, %c0_18, %c0_19] : memref<1x16x16x4xf32, #tpu.memory_space<vmem>>, vector<1x16x16x4xf32>
    tpu.vector_store %arg5[%c0_16, %c0_17, %c0_18, %c0_19], %27 {strides = array<i32>} : memref<1x16x16x4xf32, #tpu.memory_space<vmem>>, vector<1x16x16x4xf32>,
    %cst_20 = arith.constant dense<0.000000e+00> : vector<4xf32>
    %29 = vector.multi_reduction <add>, %26, %cst_20 [0] : vector<256x4xf32> to vector<4xf32>
    %30 = vector.shape_cast %29 : vector<4xf32> to vector<1x4xf32>
    %31 = arith.mulf %26, %26 : vector<256x4xf32>
    %cst_21 = arith.constant dense<0.000000e+00> : vector<4xf32>
    %32 = vector.multi_reduction <add>, %31, %cst_21 [0] : vector<256x4xf32> to vector<4xf32>
    %33 = vector.shape_cast %32 : vector<4xf32> to vector<1x4xf32>
    %34 = tpu.concatenate %30, %33 in 0 : vector<1x4xf32>, vector<1x4xf32> -> vector<2x4xf32>
    %35 = vector.shape_cast %34 : vector<2x4xf32> to vector<1x2x4xf32>
    %c0_22 = arith.constant 0 : index
    %c0_23 = arith.constant 0 : index
    %c0_24 = arith.constant 0 : index
    %36 = vector.load %arg6[%c0_22, %c0_23, %c0_24] : memref<1x2x4xf32, #tpu.memory_space<vmem>>, vector<1x2x4xf32>
    tpu.vector_store %arg6[%c0_22, %c0_23, %c0_24], %35 {strides = array<i32>} : memref<1x2x4xf32, #tpu.memory_space<vmem>>, vector<1x2x4xf32>,
    return
  }
  func.func @transform_0(%arg0: i32) -> (i32, i32, i32, i32) {
    %c0_i32 = arith.constant 0 : i32
    %c0_i32_0 = arith.constant 0 : i32
    %c0_i32_1 = arith.constant 0 : i32
    %c0_i32_2 = arith.constant 0 : i32
    return %arg0, %c0_i32, %c0_i32_0, %c0_i32_1 : i32, i32, i32, i32
  }
  func.func @transform_1(%arg0: i32) -> (i32, i32, i32, i32) {
    %c0_i32 = arith.constant 0 : i32
    %c0_i32_0 = arith.constant 0 : i32
    %c0_i32_1 = arith.constant 0 : i32
    %c0_i32_2 = arith.constant 0 : i32
    %c0_i32_3 = arith.constant 0 : i32
    return %c0_i32, %c0_i32_0, %c0_i32_1, %c0_i32_2 : i32, i32, i32, i32
  }
  func.func @transform_2(%arg0: i32) -> (i32, i32, i32, i32) {
    %c0_i32 = arith.constant 0 : i32
    %c0_i32_0 = arith.constant 0 : i32
    %c0_i32_1 = arith.constant 0 : i32
    %c0_i32_2 = arith.constant 0 : i32
    %c0_i32_3 = arith.constant 0 : i32
    return %c0_i32, %c0_i32_0, %c0_i32_1, %c0_i32_2 : i32, i32, i32, i32
  }
  func.func @transform_3(%arg0: i32) -> (i32, i32) {
    %c0_i32 = arith.constant 0 : i32
    %c0_i32_0 = arith.constant 0 : i32
    %c0_i32_1 = arith.constant 0 : i32
    return %c0_i32, %c0_i32_0 : i32, i32
  }
  func.func @transform_4(%arg0: i32) -> (i32, i32, i32, i32) {
    %c0_i32 = arith.constant 0 : i32
    %c0_i32_0 = arith.constant 0 : i32
    %c0_i32_1 = arith.constant 0 : i32
    %c0_i32_2 = arith.constant 0 : i32
    return %arg0, %c0_i32, %c0_i32_0, %c0_i32_1 : i32, i32, i32, i32
  }
  func.func @transform_5(%arg0: i32) -> (i32, i32, i32) {
    %c0_i32 = arith.constant 0 : i32
    %c0_i32_0 = arith.constant 0 : i32
    %c0_i32_1 = arith.constant 0 : i32
    return %arg0, %c0_i32, %c0_i32_0 : i32, i32, i32
  }
}

</mosaic_0001>

<llo_original>
// kernel: residual_forward.5
$region0: #{residual_forward.5}
  #allocation0 [shape = 'u32[]', space=smem, size = 0x4, offset = 0x4, fixed_abs, tag = 'smem constant byte address 0x4 - core index']
  #allocation1 [shape = 'u32[144,128]{1,0:T(1,128)}', space=vmem, size = 0x12000, scoped, tag = 'internal scratch']
  %s0 = inlined_call_operand.vmem [shape: f32[2,16,16,4], index: 0, kind: input, shape index: {}]
  %s1 = inlined_call_operand.vmem [shape: f32[2,16,16,4], index: 1, kind: input, shape index: {}]
  %s2 = inlined_call_operand.vmem [shape: f32[1,1,1,4], index: 2, kind: input, shape index: {}]
  %s3 = inlined_call_operand.vmem [shape: f32[1,1,1,4], index: 3, kind: input, shape index: {}]
  %s4 = inlined_call_operand.vmem [shape: f32[2,16,16,4], index: 4, kind: output, shape index: {}]
  %s5 = sld [smem:[#allocation0]]
  $region49: #{residual_forward.5} parent=0
    _
  %s7 = ssub.s32 1, %s5
  %s8 = scalar_select 0, %s7, %s5
  loop: start=0, step=1, limit=4
  $region2: #{residual_forward.5} parent=0 // loop_pre_header
    _
  $region3: #{residual_forward.5} parent=0 // loop_header
    %s10 = sphi 0, %s14
    %p11 = scmp.ge.s32.totalorder %s10, 4
    %s20 = sphi 0, %s22
    %s23 = sphi 0, %s20
    %s24 = sphi 0, %s23
    %s40 = sphi 0, %s24
    %s46 = sphi 0, %s48
    %s49 = sphi 0, %s46
    %s50 = sphi 0, %s49
    %s66 = sphi 0, %s50
    %s70 = sphi 0, %s70
    %s72 = sphi 0, %s70
    %s73 = sphi 0, %s72
    %s87 = sphi 0, %s73
    %s91 = sphi 0, %s91
    %s93 = sphi 0, %s91
    %s94 = sphi 0, %s93
    %s108 = sphi 0, %s94
    %s114 = sphi 0, %s116
    %s117 = sphi 0, %s114
    %s118 = sphi 0, %s117
    %s134 = sphi 0, %s118
  $region4: #{residual_forward.5} parent=0 // loop_header_branch
    %13 = sbr.rel (%p11) target = $region8
  $region5: #{residual_forward.5} parent=0 // loop_body
    %s15 = ssub.s32 %s10, 1
    %s16 = ssub.s32 %s10, 2
    %s17 = sadd.s32 %s10, 1
    %s18 = ssub.s32 %s10, %s17
    %p19 = scmp.eq.s32.totalorder %s18, 0
    %s21 = sadd.s32 %s20, 1
    %s22 = scalar_select %p19, %s20, %s21
    %p25 = pneg %p19
    %p26 = scmp.eq.s32.totalorder %s10, 1
    %p27 = por %p25, %p26
    %p28 = scmp.ne.s32.totalorder %s20, %s23
    %p29 = scmp.eq.s32.totalorder %s10, 0
    %p30 = por %p28, %p29
    %p31 = scmp.ne.s32.totalorder %s20, %s23
    %p32 = scmp.eq.s32.totalorder %s15, 1
    %p33 = por %p31, %p32
    %p34 = scmp.ne.s32.totalorder %s23, %s24
    %p35 = scmp.eq.s32.totalorder %s15, 0
    %p36 = por %p34, %p35
    %p37 = scmp.ne.s32.totalorder %s23, %s24
    %p38 = scmp.eq.s32.totalorder %s16, 1
    %p39 = por %p37, %p38
    %p41 = scmp.ne.s32.totalorder %s24, %s40
    %p42 = scmp.eq.s32.totalorder %s16, 0
    %p43 = por %p41, %p42
    %s44 = ssub.s32 %s10, %s17
    %p45 = scmp.eq.s32.totalorder %s44, 0
    %s47 = sadd.s32 %s46, 1
    %s48 = scalar_select %p45, %s46, %s47
    %p51 = pneg %p45
    %p52 = scmp.eq.s32.totalorder %s10, 1
    %p53 = por %p51, %p52
    %p54 = scmp.ne.s32.totalorder %s46, %s49
    %p55 = scmp.eq.s32.totalorder %s10, 0
    %p56 = por %p54, %p55
    %p57 = scmp.ne.s32.totalorder %s46, %s49
    %p58 = scmp.eq.s32.totalorder %s15, 1
    %p59 = por %p57, %p58
    %p60 = scmp.ne.s32.totalorder %s49, %s50
    %p61 = scmp.eq.s32.totalorder %s15, 0
    %p62 = por %p60, %p61
    %p63 = scmp.ne.s32.totalorder %s49, %s50
    %p64 = scmp.eq.s32.totalorder %s16, 1
    %p65 = por %p63, %p64
    %p67 = scmp.ne.s32.totalorder %s50, %s66
    %p68 = scmp.eq.s32.totalorder %s16, 0
    %p69 = por %p67, %p68
    %s71 = sadd.s32 %s70, 1
    %p74 = scmp.eq.s32.totalorder %s10, 1
    %p75 = scmp.ne.s32.totalorder %s70, %s72
    %p76 = scmp.eq.s32.totalorder %s10, 0
    %p77 = por %p75, %p76
    %p78 = scmp.ne.s32.totalorder %s70, %s72
    %p79 = scmp.eq.s32.totalorder %s15, 1
    %p80 = por %p78, %p79
    %p81 = scmp.ne.s32.totalorder %s72, %s73
    %p82 = scmp.eq.s32.totalorder %s15, 0
    %p83 = por %p81, %p82
    %p84 = scmp.ne.s32.totalorder %s72, %s73
    %p85 = scmp.eq.s32.totalorder %s16, 1
    %p86 = por %p84, %p85
    %p88 = scmp.ne.s32.totalorder %s73, %s87
    %p89 = scmp.eq.s32.totalorder %s16, 0
    %p90 = por %p88, %p89
    %s92 = sadd.s32 %s91, 1
    %p95 = scmp.eq.s32.totalorder %s10, 1
    %p96 = scmp.ne.s32.totalorder %s91, %s93
    %p97 = scmp.eq.s32.totalorder %s10, 0
    %p98 = por %p96, %p97
    %p99 = scmp.ne.s32.totalorder %s91, %s93
    %p100 = scmp.eq.s32.totalorder %s15, 1
    %p101 = por %p99, %p100
    %p102 = scmp.ne.s32.totalorder %s93, %s94
    %p103 = scmp.eq.s32.totalorder %s15, 0
    %p104 = por %p102, %p103
    %p105 = scmp.ne.s32.totalorder %s93, %s94
    %p106 = scmp.eq.s32.totalorder %s16, 1
    %p107 = por %p105, %p106
    %p109 = scmp.ne.s32.totalorder %s94, %s108
    %p110 = scmp.eq.s32.totalorder %s16, 0
    %p111 = por %p109, %p110
    %s112 = ssub.s32 %s10, %s17
    %p113 = scmp.eq.s32.totalorder %s112, 0
    %s115 = sadd.s32 %s114, 1
    %s116 = scalar_select %p113, %s114, %s115
    %p119 = pneg %p113
    %p120 = scmp.eq.s32.totalorder %s10, 1
    %p121 = por %p119, %p120
    %p122 = scmp.ne.s32.totalorder %s114, %s117
    %p123 = scmp.eq.s32.totalorder %s10, 0
    %p124 = por %p122, %p123
    %p125 = scmp.ne.s32.totalorder %s114, %s117
    %p126 = scmp.eq.s32.totalorder %s15, 1
    %p127 = por %p125, %p126
    %p128 = scmp.ne.s32.totalorder %s117, %s118
    %p129 = scmp.eq.s32.totalorder %s15, 0
    %p130 = por %p128, %p129
    %p131 = scmp.ne.s32.totalorder %s117, %s118
    %p132 = scmp.eq.s32.totalorder %s16, 1
    %p133 = por %p131, %p132
    %p135 = scmp.ne.s32.totalorder %s118, %s134
    %p136 = scmp.eq.s32.totalorder %s16, 0
    %p137 = por %p135, %p136
    %p138 = scmp.le.s32.totalorder 1, %s10
    %p139 = scmp.lt.s32.totalorder %s10, 3
    %p140 = pnand %p138, %p139
    %p141 = pneg %p140
    // Predicated region
    $region9: #{residual_forward.5} parent=5 // pred_check
      _
    $region10: #{residual_forward.5} parent=5 // pred_check_branch
      %143 = sbr.rel (%p140) target = $region12
    $region11: #{residual_forward.5} parent=5 // pred_region
      %s144 = ssub.s32 %s10, 1
      // Predicated region
      $region13: #{residual_forward.5} parent=11 // pred_check
        %p145 = pneg %p83
      $region14: #{residual_forward.5} parent=11 // pred_check_branch
        %147 = sbr.rel (%p145) target = $region16
      $region15: #{residual_forward.5} parent=11 // pred_region
        _
      $region16: #{residual_forward.5} parent=11 // pred_fallthru
        _
      // Predicated region
      $region17: #{residual_forward.5} parent=11 // pred_check
        %p148 = pneg %p104
      $region18: #{residual_forward.5} parent=11 // pred_check_branch
        %150 = sbr.rel (%p148) target = $region20
      $region19: #{residual_forward.5} parent=11 // pred_region
        _
      $region20: #{residual_forward.5} parent=11 // pred_fallthru
        _
    $region12: #{residual_forward.5} parent=5 // pred_fallthru
      _
    %p151 = scmp.lt.s32.totalorder %s10, 2
    // Predicated region
    $region21: #{residual_forward.5} parent=5 // pred_check
      %p152 = pneg %p151
    $region22: #{residual_forward.5} parent=5 // pred_check_branch
      %154 = sbr.rel (%p152) target = $region24
    $region23: #{residual_forward.5} parent=5 // pred_region
      // Predicated region
      $region25: #{residual_forward.5} parent=23 // pred_check
        %p155 = pneg %p30
      $region26: #{residual_forward.5} parent=23 // pred_check_branch
        %157 = sbr.rel (%p155) target = $region28
      $region27: #{residual_forward.5} parent=23 // pred_region
        %p158 = scmp.lt.s32.totalorder %s10, 1
        %s159 = scalar_select %p158, %s10, 1
        %s160 = smul.addr %s159, 32
        %s161 = smul.addr %s160, 8
        %s162 = scalar_lea.vmem %s0, %s161
      $region28: #{residual_forward.5} parent=23 // pred_fallthru
        _
      // Predicated region
      $region29: #{residual_forward.5} parent=23 // pred_check
        %p163 = pneg %p56
      $region30: #{residual_forward.5} parent=23 // pred_check_branch
        %165 = sbr.rel (%p163) target = $region32
      $region31: #{residual_forward.5} parent=23 // pred_region
        %p166 = scmp.lt.s32.totalorder %s10, 1
        %s167 = scalar_select %p166, %s10, 1
        %s168 = smul.addr %s167, 32
        %s169 = smul.addr %s168, 8
        %s170 = scalar_lea.vmem %s1, %s169
      $region32: #{residual_forward.5} parent=23 // pred_fallthru
        _
    $region24: #{residual_forward.5} parent=5 // pred_fallthru
      _
    %p171 = scmp.le.s32.totalorder 1, %s10
    %p172 = scmp.lt.s32.totalorder %s10, 3
    %p173 = pnand %p171, %p172
    %p174 = pneg %p173
    // Predicated region
    $region33: #{residual_forward.5} parent=5 // pred_check
      _
    $region34: #{residual_forward.5} parent=5 // pred_check_branch
      %176 = sbr.rel (%p173) target = $region36
    $region35: #{residual_forward.5} parent=5 // pred_region
      %s177 = ssub.s32 %s10, 1
      %p178 = scmp.lt.s32.totalorder %s15, 1
      %s179 = scalar_select %p178, %s15, 1
      %s180 = smul.addr %s179, 32
      %s181 = smul.addr %s180, 8
      %s182 = scalar_lea.vmem %s0, %s181
      %p183 = pneg %p36
      %p184 = pneg %p33
      %p185 = scmp.lt.s32.totalorder %s15, 1
      %s186 = scalar_select %p185, %s15, 1
      %s187 = smul.addr %s186, 32
      %s188 = smul.addr %s187, 8
      %s189 = scalar_lea.vmem %s1, %s188
      %p190 = pneg %p62
      %p191 = pneg %p59
      %p192 = pneg %p83
      %p193 = pneg %p80
      %p194 = pneg %p104
      %p195 = pneg %p101
      %p196 = pneg %p130
      %p197 = pneg %p127
      %p198 = scmp.lt.s32.totalorder %s15, 1
      %s199 = scalar_select %p198, %s15, 1
      %s200 = smul.addr %s199, 32
      %s201 = smul.addr %s200, 8
      %s202 = scalar_lea.vmem %s4, %s201
      %p203 = scmp.lt.s32.totalorder %s15, 1
      %s204 = scalar_select %p203, %s15, 1
      %s205 = smul.addr %s204, 32
      %s206 = smul.addr %s205, 8
      %s207 = scalar_lea.vmem %s0, %s206
      %p208 = scmp.lt.s32.totalorder %s15, 1
      %s209 = scalar_select %p208, %s15, 1
      %s210 = smul.addr %s209, 32
      %s211 = smul.addr %s210, 8
      %s212 = scalar_lea.vmem %s1, %s211
      %p213 = scmp.lt.s32.totalorder %s15, 1
      %s214 = scalar_select %p213, %s15, 1
      %s215 = smul.addr %s214, 32
      %s216 = smul.addr %s215, 8
      %s217 = scalar_lea.vmem %s4, %s216
      %v218 = vld [vmem:[%s207] sm:$0xff]
      %v219 = vld [vmem:[%s207 + $0x8] sm:$0xff]
      %v220 = vld [vmem:[%s207 + $0x10] sm:$0xff]
      %v221 = vld [vmem:[%s207 + $0x18] sm:$0xff]
      %v222 = vld [vmem:[%s207 + $0x20] sm:$0xff]
      %v223 = vld [vmem:[%s207 + $0x28] sm:$0xff]
      %v224 = vld [vmem:[%s207 + $0x30] sm:$0xff]
      %v225 = vld [vmem:[%s207 + $0x38] sm:$0xff]
      %v226 = vld [vmem:[%s207 + $0x40] sm:$0xff]
      %v227 = vld [vmem:[%s207 + $0x48] sm:$0xff]
      %v228 = vld [vmem:[%s207 + $0x50] sm:$0xff]
      %v229 = vld [vmem:[%s207 + $0x58] sm:$0xff]
      %v230 = vld [vmem:[%s207 + $0x60] sm:$0xff]
      %v231 = vld [vmem:[%s207 + $0x68] sm:$0xff]
      %v232 = vld [vmem:[%s207 + $0x70] sm:$0xff]
      %v233 = vld [vmem:[%s207 + $0x78] sm:$0xff]
      %v234 = vld [vmem:[%s207 + $0x80] sm:$0xff]
      %v235 = vld [vmem:[%s207 + $0x88] sm:$0xff]
      %v236 = vld [vmem:[%s207 + $0x90] sm:$0xff]
      %v237 = vld [vmem:[%s207 + $0x98] sm:$0xff]
      %v238 = vld [vmem:[%s207 + $0xa0] sm:$0xff]
      %v239 = vld [vmem:[%s207 + $0xa8] sm:$0xff]
      %v240 = vld [vmem:[%s207 + $0xb0] sm:$0xff]
      %v241 = vld [vmem:[%s207 + $0xb8] sm:$0xff]
      %v242 = vld [vmem:[%s207 + $0xc0] sm:$0xff]
      %v243 = vld [vmem:[%s207 + $0xc8] sm:$0xff]
      %v244 = vld [vmem:[%s207 + $0xd0] sm:$0xff]
      %v245 = vld [vmem:[%s207 + $0xd8] sm:$0xff]
      %v246 = vld [vmem:[%s207 + $0xe0] sm:$0xff]
      %v247 = vld [vmem:[%s207 + $0xe8] sm:$0xff]
      %v248 = vld [vmem:[%s207 + $0xf0] sm:$0xff]
      %v249 = vld [vmem:[%s207 + $0xf8] sm:$0xff]
      %v250 = vld [vmem:[%s2] sm:$0x1]
      %v252 = vlaneseq
      %v253 = vshrl.u32 %v252, 7
      %v254 = vsub.s32 0, %v253
      %v255 = vrot.slane %v250, %v254
      %v257 = vmul.f32 %v218, %v255
      %v258 = vmul.f32 %v219, %v255
      %v259 = vmul.f32 %v220, %v255
      %v260 = vmul.f32 %v221, %v255
      %v261 = vmul.f32 %v222, %v255
      %v262 = vmul.f32 %v223, %v255
      %v263 = vmul.f32 %v224, %v255
      %v264 = vmul.f32 %v225, %v255
      %v265 = vmul.f32 %v226, %v255
      %v266 = vmul.f32 %v227, %v255
      %v267 = vmul.f32 %v228, %v255
      %v268 = vmul.f32 %v229, %v255
      %v269 = vmul.f32 %v230, %v255
      %v270 = vmul.f32 %v231, %v255
      %v271 = vmul.f32 %v232, %v255
      %v272 = vmul.f32 %v233, %v255
      %v273 = vmul.f32 %v234, %v255
      %v274 = vmul.f32 %v235, %v255
      %v275 = vmul.f32 %v236, %v255
      %v276 = vmul.f32 %v237, %v255
      %v277 = vmul.f32 %v238, %v255
      %v278 = vmul.f32 %v239, %v255
      %v279 = vmul.f32 %v240, %v255
      %v280 = vmul.f32 %v241, %v255
      %v281 = vmul.f32 %v242, %v255
      %v282 = vmul.f32 %v243, %v255
      %v283 = vmul.f32 %v244, %v255
      %v284 = vmul.f32 %v245, %v255
      %v285 = vmul.f32 %v246, %v255
      %v286 = vmul.f32 %v247, %v255
      %v287 = vmul.f32 %v248, %v255
      %v288 = vmul.f32 %v249, %v255
      %v289 = vld [vmem:[%s3] sm:$0x1]
      %v291 = vlaneseq
      %v292 = vshrl.u32 %v291, 7
      %v293 = vsub.s32 0, %v292
      %v294 = vrot.slane %v289, %v293
      %v296 = vadd.f32 %v257, %v294
      %v297 = vadd.f32 %v258, %v294
      %v298 = vadd.f32 %v259, %v294
      %v299 = vadd.f32 %v260, %v294
      %v300 = vadd.f32 %v261, %v294
      %v301 = vadd.f32 %v262, %v294
      %v302 = vadd.f32 %v263, %v294
      %v303 = vadd.f32 %v264, %v294
      %v304 = vadd.f32 %v265, %v294
      %v305 = vadd.f32 %v266, %v294
      %v306 = vadd.f32 %v267, %v294
      %v307 = vadd.f32 %v268, %v294
      %v308 = vadd.f32 %v269, %v294
      %v309 = vadd.f32 %v270, %v294
      %v310 = vadd.f32 %v271, %v294
      %v311 = vadd.f32 %v272, %v294
      %v312 = vadd.f32 %v273, %v294
      %v313 = vadd.f32 %v274, %v294
      %v314 = vadd.f32 %v275, %v294
      %v315 = vadd.f32 %v276, %v294
      %v316 = vadd.f32 %v277, %v294
      %v317 = vadd.f32 %v278, %v294
      %v318 = vadd.f32 %v279, %v294
      %v319 = vadd.f32 %v280, %v294
      %v320 = vadd.f32 %v281, %v294
      %v321 = vadd.f32 %v282, %v294
      %v322 = vadd.f32 %v283, %v294
      %v323 = vadd.f32 %v284, %v294
      %v324 = vadd.f32 %v285, %v294
      %v325 = vadd.f32 %v286, %v294
      %v326 = vadd.f32 %v287, %v294
      %v327 = vadd.f32 %v288, %v294
      %v328 = vld [vmem:[%s212] sm:$0xff]
      %v329 = vld [vmem:[%s212 + $0x8] sm:$0xff]
      %v330 = vld [vmem:[%s212 + $0x10] sm:$0xff]
      %v331 = vld [vmem:[%s212 + $0x18] sm:$0xff]
      %v332 = vld [vmem:[%s212 + $0x20] sm:$0xff]
      %v333 = vld [vmem:[%s212 + $0x28] sm:$0xff]
      %v334 = vld [vmem:[%s212 + $0x30] sm:$0xff]
      %v335 = vld [vmem:[%s212 + $0x38] sm:$0xff]
      %v336 = vld [vmem:[%s212 + $0x40] sm:$0xff]
      %v337 = vld [vmem:[%s212 + $0x48] sm:$0xff]
      %v338 = vld [vmem:[%s212 + $0x50] sm:$0xff]
      %v339 = vld [vmem:[%s212 + $0x58] sm:$0xff]
      %v340 = vld [vmem:[%s212 + $0x60] sm:$0xff]
      %v341 = vld [vmem:[%s212 + $0x68] sm:$0xff]
      %v342 = vld [vmem:[%s212 + $0x70] sm:$0xff]
      %v343 = vld [vmem:[%s212 + $0x78] sm:$0xff]
      %v344 = vld [vmem:[%s212 + $0x80] sm:$0xff]
      %v345 = vld [vmem:[%s212 + $0x88] sm:$0xff]
      %v346 = vld [vmem:[%s212 + $0x90] sm:$0xff]
      %v347 = vld [vmem:[%s212 + $0x98] sm:$0xff]
      %v348 = vld [vmem:[%s212 + $0xa0] sm:$0xff]
      %v349 = vld [vmem:[%s212 + $0xa8] sm:$0xff]
      %v350 = vld [vmem:[%s212 + $0xb0] sm:$0xff]
      %v351 = vld [vmem:[%s212 + $0xb8] sm:$0xff]
      %v352 = vld [vmem:[%s212 + $0xc0] sm:$0xff]
      %v353 = vld [vmem:[%s212 + $0xc8] sm:$0xff]
      %v354 = vld [vmem:[%s212 + $0xd0] sm:$0xff]
      %v355 = vld [vmem:[%s212 + $0xd8] sm:$0xff]
      %v356 = vld [vmem:[%s212 + $0xe0] sm:$0xff]
      %v357 = vld [vmem:[%s212 + $0xe8] sm:$0xff]
      %v358 = vld [vmem:[%s212 + $0xf0] sm:$0xff]
      %v359 = vld [vmem:[%s212 + $0xf8] sm:$0xff]
      %v360 = vadd.f32 %v296, %v328
      %v361 = vadd.f32 %v297, %v329
      %v362 = vadd.f32 %v298, %v330
      %v363 = vadd.f32 %v299, %v331
      %v364 = vadd.f32 %v300, %v332
      %v365 = vadd.f32 %v301, %v333
      %v366 = vadd.f32 %v302, %v334
      %v367 = vadd.f32 %v303, %v335
      %v368 = vadd.f32 %v304, %v336
      %v369 = vadd.f32 %v305, %v337
      %v370 = vadd.f32 %v306, %v338
      %v371 = vadd.f32 %v307, %v339
      %v372 = vadd.f32 %v308, %v340
      %v373 = vadd.f32 %v309, %v341
      %v374 = vadd.f32 %v310, %v342
      %v375 = vadd.f32 %v311, %v343
      %v376 = vadd.f32 %v312, %v344
      %v377 = vadd.f32 %v313, %v345
      %v378 = vadd.f32 %v314, %v346
      %v379 = vadd.f32 %v315, %v347
      %v380 = vadd.f32 %v316, %v348
      %v381 = vadd.f32 %v317, %v349
      %v382 = vadd.f32 %v318, %v350
      %v383 = vadd.f32 %v319, %v351
      %v384 = vadd.f32 %v320, %v352
      %v385 = vadd.f32 %v321, %v353
      %v386 = vadd.f32 %v322, %v354
      %v387 = vadd.f32 %v323, %v355
      %v388 = vadd.f32 %v324, %v356
      %v389 = vadd.f32 %v325, %v357
      %v390 = vadd.f32 %v326, %v358
      %v391 = vadd.f32 %v327, %v359
      %v392 = vmax.f32 %v360, 0.0
      %v393 = vmax.f32 %v361, 0.0
      %v394 = vmax.f32 %v362, 0.0
      %v395 = vmax.f32 %v363, 0.0
      %v396 = vmax.f32 %v364, 0.0
      %v397 = vmax.f32 %v365, 0.0
      %v398 = vmax.f32 %v366, 0.0
      %v399 = vmax.f32 %v367, 0.0
      %v400 = vmax.f32 %v368, 0.0
      %v401 = vmax.f32 %v369, 0.0
      %v402 = vmax.f32 %v370, 0.0
      %v403 = vmax.f32 %v371, 0.0
      %v404 = vmax.f32 %v372, 0.0
      %v405 = vmax.f32 %v373, 0.0
      %v406 = vmax.f32 %v374, 0.0
      %v407 = vmax.f32 %v375, 0.0
      %v408 = vmax.f32 %v376, 0.0
      %v409 = vmax.f32 %v377, 0.0
      %v410 = vmax.f32 %v378, 0.0
      %v411 = vmax.f32 %v379, 0.0
      %v412 = vmax.f32 %v380, 0.0
      %v413 = vmax.f32 %v381, 0.0
      %v414 = vmax.f32 %v382, 0.0
      %v415 = vmax.f32 %v383, 0.0
      %v416 = vmax.f32 %v384, 0.0
      %v417 = vmax.f32 %v385, 0.0
      %v418 = vmax.f32 %v386, 0.0
      %v419 = vmax.f32 %v387, 0.0
      %v420 = vmax.f32 %v388, 0.0
      %v421 = vmax.f32 %v389, 0.0
      %v422 = vmax.f32 %v390, 0.0
      %v423 = vmax.f32 %v391, 0.0
      %vm424 = vcmask 31744
      %425 = vst.msk [vmem:[%s217] sm:$0xff] %vm424, %v392
      %426 = vst.msk [vmem:[%s217 + $0x8] sm:$0xff] %vm424, %v393
      %427 = vst.msk [vmem:[%s217 + $0x10] sm:$0xff] %vm424, %v394
      %428 = vst.msk [vmem:[%s217 + $0x18] sm:$0xff] %vm424, %v395
      %429 = vst.msk [vmem:[%s217 + $0x20] sm:$0xff] %vm424, %v396
      %430 = vst.msk [vmem:[%s217 + $0x28] sm:$0xff] %vm424, %v397
      %431 = vst.msk [vmem:[%s217 + $0x30] sm:$0xff] %vm424, %v398
      %432 = vst.msk [vmem:[%s217 + $0x38] sm:$0xff] %vm424, %v399
      %433 = vst.msk [vmem:[%s217 + $0x40] sm:$0xff] %vm424, %v400
      %434 = vst.msk [vmem:[%s217 + $0x48] sm:$0xff] %vm424, %v401
      %435 = vst.msk [vmem:[%s217 + $0x50] sm:$0xff] %vm424, %v402
      %436 = vst.msk [vmem:[%s217 + $0x58] sm:$0xff] %vm424, %v403
      %437 = vst.msk [vmem:[%s217 + $0x60] sm:$0xff] %vm424, %v404
      %438 = vst.msk [vmem:[%s217 + $0x68] sm:$0xff] %vm424, %v405
      %439 = vst.msk [vmem:[%s217 + $0x70] sm:$0xff] %vm424, %v406
      %440 = vst.msk [vmem:[%s217 + $0x78] sm:$0xff] %vm424, %v407
      %441 = vst.msk [vmem:[%s217 + $0x80] sm:$0xff] %vm424, %v408
      %442 = vst.msk [vmem:[%s217 + $0x88] sm:$0xff] %vm424, %v409
      %443 = vst.msk [vmem:[%s217 + $0x90] sm:$0xff] %vm424, %v410
      %444 = vst.msk [vmem:[%s217 + $0x98] sm:$0xff] %vm424, %v411
      %445 = vst.msk [vmem:[%s217 + $0xa0] sm:$0xff] %vm424, %v412
      %446 = vst.msk [vmem:[%s217 + $0xa8] sm:$0xff] %vm424, %v413
      %447 = vst.msk [vmem:[%s217 + $0xb0] sm:$0xff] %vm424, %v414
      %448 = vst.msk [vmem:[%s217 + $0xb8] sm:$0xff] %vm424, %v415
      %449 = vst.msk [vmem:[%s217 + $0xc0] sm:$0xff] %vm424, %v416
      %450 = vst.msk [vmem:[%s217 + $0xc8] sm:$0xff] %vm424, %v417
      %451 = vst.msk [vmem:[%s217 + $0xd0] sm:$0xff] %vm424, %v418
      %452 = vst.msk [vmem:[%s217 + $0xd8] sm:$0xff] %vm424, %v419
      %453 = vst.msk [vmem:[%s217 + $0xe0] sm:$0xff] %vm424, %v420
      %454 = vst.msk [vmem:[%s217 + $0xe8] sm:$0xff] %vm424, %v421
      %455 = vst.msk [vmem:[%s217 + $0xf0] sm:$0xff] %vm424, %v422
      %456 = vst.msk [vmem:[%s217 + $0xf8] sm:$0xff] %vm424, %v423
      %p457 = scmp.lt.s32.totalorder %s15, 1
      %s458 = scalar_select %p457, %s15, 1
      %s459 = smul.addr %s458, 32
      %s460 = smul.addr %s459, 8
      %s461 = scalar_lea.vmem %s4, %s460
      // Predicated region
      $region37: #{residual_forward.5} parent=35 // pred_check
        %p462 = pneg %p127
      $region38: #{residual_forward.5} parent=35 // pred_check_branch
        %464 = sbr.rel (%p462) target = $region40
      $region39: #{residual_forward.5} parent=35 // pred_region
        _
      $region40: #{residual_forward.5} parent=35 // pred_fallthru
        _
    $region36: #{residual_forward.5} parent=5 // pred_fallthru
      _
    %p465 = scmp.le.s32.totalorder 2, %s10
    // Predicated region
    $region41: #{residual_forward.5} parent=5 // pred_check
      %p466 = pneg %p465
    $region42: #{residual_forward.5} parent=5 // pred_check_branch
      %468 = sbr.rel (%p466) target = $region44
    $region43: #{residual_forward.5} parent=5 // pred_region
      %s469 = ssub.s32 %s10, 2
      // Predicated region
      $region45: #{residual_forward.5} parent=43 // pred_check
        %p470 = pneg %p133
      $region46: #{residual_forward.5} parent=43 // pred_check_branch
        %472 = sbr.rel (%p470) target = $region48
      $region47: #{residual_forward.5} parent=43 // pred_region
        %p473 = scmp.lt.s32.totalorder %s16, 1
        %s474 = scalar_select %p473, %s16, 1
        %s475 = smul.addr %s474, 32
        %s476 = smul.addr %s475, 8
        %s477 = scalar_lea.vmem %s4, %s476
      $region48: #{residual_forward.5} parent=43 // pred_fallthru
        _
    $region44: #{residual_forward.5} parent=5 // pred_fallthru
      _
  $region6: #{residual_forward.5} parent=0 // loop_footer
    %s14 = sadd.s32 1, %s10
  $region7: #{residual_forward.5} parent=0 // loop_footer_branch
    %9 = sbr.rel target = $region3
  $region8: #{residual_forward.5} parent=0 // loop_exit
    _

// kernel: residual_forward.3
$region0: #{residual_forward.3}
  #allocation0 [shape = 'u32[]', space=smem, size = 0x4, offset = 0x4, fixed_abs, tag = 'smem constant byte address 0x4 - core index']
  #allocation1 [shape = 'u32[144,128]{1,0:T(1,128)}', space=vmem, size = 0x12000, scoped, tag = 'internal scratch']
  %s0 = inlined_call_operand.vmem [shape: f32[2,16,16,4], index: 0, kind: input, shape index: {}]
  %s1 = inlined_call_operand.vmem [shape: f32[36,4], index: 1, kind: input, shape index: {}]
  %s2 = inlined_call_operand.vmem [shape: f32[2,16,16,4], index: 2, kind: output, shape index: {0}]
  %s3 = inlined_call_operand.vmem [shape: f32[2,2,4], index: 3, kind: output, shape index: {1}]
  %4 = xla_tuple %s2, %s3
  %s5 = sld [smem:[#allocation0]]
  $region49: #{residual_forward.3} parent=0
    _
  %s7 = ssub.s32 1, %s5
  %s8 = scalar_select 0, %s7, %s5
  loop: start=0, step=1, limit=4
  $region2: #{residual_forward.3} parent=0 // loop_pre_header
    _
  $region3: #{residual_forward.3} parent=0 // loop_header
    %s10 = sphi 0, %s14
    %p11 = scmp.ge.s32.totalorder %s10, 4
    %s20 = sphi 0, %s22
    %s23 = sphi 0, %s20
    %s24 = sphi 0, %s23
    %s40 = sphi 0, %s24
    %s44 = sphi 0, %s44
    %s46 = sphi 0, %s44
    %s47 = sphi 0, %s46
    %s61 = sphi 0, %s47
    %s67 = sphi 0, %s69
    %s70 = sphi 0, %s67
    %s71 = sphi 0, %s70
    %s87 = sphi 0, %s71
    %s93 = sphi 0, %s95
    %s96 = sphi 0, %s93
    %s97 = sphi 0, %s96
    %s113 = sphi 0, %s97
  $region4: #{residual_forward.3} parent=0 // loop_header_branch
    %13 = sbr.rel (%p11) target = $region8
  $region5: #{residual_forward.3} parent=0 // loop_body
    %s15 = ssub.s32 %s10, 1
    %s16 = ssub.s32 %s10, 2
    %s17 = sadd.s32 %s10, 1
    %s18 = ssub.s32 %s10, %s17
    %p19 = scmp.eq.s32.totalorder %s18, 0
    %s21 = sadd.s32 %s20, 1
    %s22 = scalar_select %p19, %s20, %s21
    %p25 = pneg %p19
    %p26 = scmp.eq.s32.totalorder %s10, 1
    %p27 = por %p25, %p26
    %p28 = scmp.ne.s32.totalorder %s20, %s23
    %p29 = scmp.eq.s32.totalorder %s10, 0
    %p30 = por %p28, %p29
    %p31 = scmp.ne.s32.totalorder %s20, %s23
    %p32 = scmp.eq.s32.totalorder %s15, 1
    %p33 = por %p31, %p32
    %p34 = scmp.ne.s32.totalorder %s23, %s24
    %p35 = scmp.eq.s32.totalorder %s15, 0
    %p36 = por %p34, %p35
    %p37 = scmp.ne.s32.totalorder %s23, %s24
    %p38 = scmp.eq.s32.totalorder %s16, 1
    %p39 = por %p37, %p38
    %p41 = scmp.ne.s32.totalorder %s24, %s40
    %p42 = scmp.eq.s32.totalorder %s16, 0
    %p43 = por %p41, %p42
    %s45 = sadd.s32 %s44, 1
    %p48 = scmp.eq.s32.totalorder %s10, 1
    %p49 = scmp.ne.s32.totalorder %s44, %s46
    %p50 = scmp.eq.s32.totalorder %s10, 0
    %p51 = por %p49, %p50
    %p52 = scmp.ne.s32.totalorder %s44, %s46
    %p53 = scmp.eq.s32.totalorder %s15, 1
    %p54 = por %p52, %p53
    %p55 = scmp.ne.s32.totalorder %s46, %s47
    %p56 = scmp.eq.s32.totalorder %s15, 0
    %p57 = por %p55, %p56
    %p58 = scmp.ne.s32.totalorder %s46, %s47
    %p59 = scmp.eq.s32.totalorder %s16, 1
    %p60 = por %p58, %p59
    %p62 = scmp.ne.s32.totalorder %s47, %s61
    %p63 = scmp.eq.s32.totalorder %s16, 0
    %p64 = por %p62, %p63
    %s65 = ssub.s32 %s10, %s17
    %p66 = scmp.eq.s32.totalorder %s65, 0
    %s68 = sadd.s32 %s67, 1
    %s69 = scalar_select %p66, %s67, %s68
    %p72 = pneg %p66
    %p73 = scmp.eq.s32.totalorder %s10, 1
    %p74 = por %p72, %p73
    %p75 = scmp.ne.s32.totalorder %s67, %s70
    %p76 = scmp.eq.s32.totalorder %s10, 0
    %p77 = por %p75, %p76
    %p78 = scmp.ne.s32.totalorder %s67, %s70
    %p79 = scmp.eq.s32.totalorder %s15, 1
    %p80 = por %p78, %p79
    %p81 = scmp.ne.s32.totalorder %s70, %s71
    %p82 = scmp.eq.s32.totalorder %s15, 0
    %p83 = por %p81, %p82
    %p84 = scmp.ne.s32.totalorder %s70, %s71
    %p85 = scmp.eq.s32.totalorder %s16, 1
    %p86 = por %p84, %p85
    %p88 = scmp.ne.s32.totalorder %s71, %s87
    %p89 = scmp.eq.s32.totalorder %s16, 0
    %p90 = por %p88, %p89
    %s91 = ssub.s32 %s10, %s17
    %p92 = scmp.eq.s32.totalorder %s91, 0
    %s94 = sadd.s32 %s93, 1
    %s95 = scalar_select %p92, %s93, %s94
    %p98 = pneg %p92
    %p99 = scmp.eq.s32.totalorder %s10, 1
    %p100 = por %p98, %p99
    %p101 = scmp.ne.s32.totalorder %s93, %s96
    %p102 = scmp.eq.s32.totalorder %s10, 0
    %p103 = por %p101, %p102
    %p104 = scmp.ne.s32.totalorder %s93, %s96
    %p105 = scmp.eq.s32.totalorder %s15, 1
    %p106 = por %p104, %p105
    %p107 = scmp.ne.s32.totalorder %s96, %s97
    %p108 = scmp.eq.s32.totalorder %s15, 0
    %p109 = por %p107, %p108
    %p110 = scmp.ne.s32.totalorder %s96, %s97
    %p111 = scmp.eq.s32.totalorder %s16, 1
    %p112 = por %p110, %p111
    %p114 = scmp.ne.s32.totalorder %s97, %s113
    %p115 = scmp.eq.s32.totalorder %s16, 0
    %p116 = por %p114, %p115
    %p117 = scmp.le.s32.totalorder 1, %s10
    %p118 = scmp.lt.s32.totalorder %s10, 3
    %p119 = pnand %p117, %p118
    %p120 = pneg %p119
    // Predicated region
    $region9: #{residual_forward.3} parent=5 // pred_check
      _
    $region10: #{residual_forward.3} parent=5 // pred_check_branch
      %122 = sbr.rel (%p119) target = $region12
    $region11: #{residual_forward.3} parent=5 // pred_region
      %s123 = ssub.s32 %s10, 1
      // Predicated region
      $region13: #{residual_forward.3} parent=11 // pred_check
        %p124 = pneg %p57
      $region14: #{residual_forward.3} parent=11 // pred_check_branch
        %126 = sbr.rel (%p124) target = $region16
      $region15: #{residual_forward.3} parent=11 // pred_region
        _
      $region16: #{residual_forward.3} parent=11 // pred_fallthru
        _
    $region12: #{residual_forward.3} parent=5 // pred_fallthru
      _
    %p127 = scmp.lt.s32.totalorder %s10, 2
    // Predicated region
    $region17: #{residual_forward.3} parent=5 // pred_check
      %p128 = pneg %p127
    $region18: #{residual_forward.3} parent=5 // pred_check_branch
      %130 = sbr.rel (%p128) target = $region20
    $region19: #{residual_forward.3} parent=5 // pred_region
      // Predicated region
      $region21: #{residual_forward.3} parent=19 // pred_check
        %p131 = pneg %p30
      $region22: #{residual_forward.3} parent=19 // pred_check_branch
        %133 = sbr.rel (%p131) target = $region24
      $region23: #{residual_forward.3} parent=19 // pred_region
        %p134 = scmp.lt.s32.totalorder %s10, 1
        %s135 = scalar_select %p134, %s10, 1
        %s136 = smul.addr %s135, 32
        %s137 = smul.addr %s136, 8
        %s138 = scalar_lea.vmem %s0, %s137
      $region24: #{residual_forward.3} parent=19 // pred_fallthru
        _
    $region20: #{residual_forward.3} parent=5 // pred_fallthru
      _
    %p139 = scmp.le.s32.totalorder 1, %s10
    %p140 = scmp.lt.s32.totalorder %s10, 3
    %p141 = pnand %p139, %p140
    %p142 = pneg %p141
    // Predicated region
    $region25: #{residual_forward.3} parent=5 // pred_check
      _
    $region26: #{residual_forward.3} parent=5 // pred_check_branch
      %144 = sbr.rel (%p141) target = $region28
    $region27: #{residual_forward.3} parent=5 // pred_region
      %s145 = ssub.s32 %s10, 1
      %p146 = scmp.lt.s32.totalorder %s15, 1
      %s147 = scalar_select %p146, %s15, 1
      %s148 = smul.addr %s147, 32
      %s149 = smul.addr %s148, 8
      %s150 = scalar_lea.vmem %s0, %s149
      %p151 = pneg %p36
      %p152 = pneg %p33
      %p153 = pneg %p57
      %p154 = pneg %p54
      %p155 = pneg %p83
      %p156 = pneg %p80
      %p157 = scmp.lt.s32.totalorder %s15, 1
      %s158 = scalar_select %p157, %s15, 1
      %s159 = smul.addr %s158, 32
      %s160 = smul.addr %s159, 8
      %s161 = scalar_lea.vmem %s2, %s160
      %p162 = pneg %p109
      %p163 = pneg %p106
      %p164 = scmp.lt.s32.totalorder %s15, 1
      %s165 = scalar_select %p164, %s15, 1
      %s166 = smul.addr %s165, 2
      %s167 = scalar_lea.vmem %s3, %s166
      %p168 = scmp.lt.s32.totalorder %s15, 1
      %s169 = scalar_select %p168, %s15, 1
      %s170 = smul.addr %s169, 32
      %s171 = smul.addr %s170, 8
      %s172 = scalar_lea.vmem %s0, %s171
      %p173 = scmp.lt.s32.totalorder %s15, 1
      %s174 = scalar_select %p173, %s15, 1
      %s175 = smul.addr %s174, 32
      %s176 = smul.addr %s175, 8
      %s177 = scalar_lea.vmem %s2, %s176
      %p178 = scmp.lt.s32.totalorder %s15, 1
      %s179 = scalar_select %p178, %s15, 1
      %s180 = smul.addr %s179, 2
      %s181 = scalar_lea.vmem %s3, %s180
      %v182 = vld [vmem:[%s172] sm:$0xff]
      %v183 = vld [vmem:[%s172 + $0x8] sm:$0xff]
      %v184 = vld [vmem:[%s172 + $0x10] sm:$0xff]
      %v185 = vld [vmem:[%s172 + $0x18] sm:$0xff]
      %v186 = vld [vmem:[%s172 + $0x20] sm:$0xff]
      %v187 = vld [vmem:[%s172 + $0x28] sm:$0xff]
      %v188 = vld [vmem:[%s172 + $0x30] sm:$0xff]
      %v189 = vld [vmem:[%s172 + $0x38] sm:$0xff]
      %v190 = vld [vmem:[%s172 + $0x40] sm:$0xff]
      %v191 = vld [vmem:[%s172 + $0x48] sm:$0xff]
      %v192 = vld [vmem:[%s172 + $0x50] sm:$0xff]
      %v193 = vld [vmem:[%s172 + $0x58] sm:$0xff]
      %v194 = vld [vmem:[%s172 + $0x60] sm:$0xff]
      %v195 = vld [vmem:[%s172 + $0x68] sm:$0xff]
      %v196 = vld [vmem:[%s172 + $0x70] sm:$0xff]
      %v197 = vld [vmem:[%s172 + $0x78] sm:$0xff]
      %v198 = vld [vmem:[%s172 + $0x80] sm:$0xff]
      %v199 = vld [vmem:[%s172 + $0x88] sm:$0xff]
      %v200 = vld [vmem:[%s172 + $0x90] sm:$0xff]
      %v201 = vld [vmem:[%s172 + $0x98] sm:$0xff]
      %v202 = vld [vmem:[%s172 + $0xa0] sm:$0xff]
      %v203 = vld [vmem:[%s172 + $0xa8] sm:$0xff]
      %v204 = vld [vmem:[%s172 + $0xb0] sm:$0xff]
      %v205 = vld [vmem:[%s172 + $0xb8] sm:$0xff]
      %v206 = vld [vmem:[%s172 + $0xc0] sm:$0xff]
      %v207 = vld [vmem:[%s172 + $0xc8] sm:$0xff]
      %v208 = vld [vmem:[%s172 + $0xd0] sm:$0xff]
      %v209 = vld [vmem:[%s172 + $0xd8] sm:$0xff]
      %v210 = vld [vmem:[%s172 + $0xe0] sm:$0xff]
      %v211 = vld [vmem:[%s172 + $0xe8] sm:$0xff]
      %v212 = vld [vmem:[%s172 + $0xf0] sm:$0xff]
      %v213 = vld [vmem:[%s172 + $0xf8] sm:$0xff]
      %v214 = vld [vmem:[%s1] sm:$0xff]
      %v215 = vld [vmem:[%s1 + $0x8] sm:$0xff]
      %v216 = vld [vmem:[%s1 + $0x10] sm:$0xff]
      %v217 = vld [vmem:[%s1 + $0x18] sm:$0xff]
      %v218 = vld [vmem:[%s1 + $0x20] sm:$0xf]
      %vm252 = vcmask 1040384
      %v253 = vrot.slane 0.0, 7
      %v254 = vsel %vm252, %v253, %v253
      %v255 = vrot.slane %v182, 7
      %v256 = vrot.slane %v183, 7
      %v257 = vsel %vm252, %v255, %v256
      %v258 = vrot.slane %v184, 7
      %v259 = vrot.slane %v185, 7
      %v260 = vsel %vm252, %v258, %v259
      %v261 = vrot.slane %v186, 7
      %v262 = vrot.slane %v187, 7
      %v263 = vsel %vm252, %v261, %v262
      %v264 = vrot.slane %v188, 7
      %v265 = vrot.slane %v189, 7
      %v266 = vsel %vm252, %v264, %v265
      %v267 = vrot.slane %v190, 7
      %v268 = vrot.slane %v191, 7
      %v269 = vsel %vm252, %v267, %v268
      %v270 = vrot.slane %v192, 7
      %v271 = vrot.slane %v193, 7
      %v272 = vsel %vm252, %v270, %v271
      %v273 = vrot.slane %v194, 7
      %v274 = vrot.slane %v195, 7
      %v275 = vsel %vm252, %v273, %v274
      %v276 = vrot.slane %v196, 7
      %v277 = vrot.slane %v197, 7
      %v278 = vsel %vm252, %v276, %v277
      %v279 = vrot.slane %v198, 7
      %v280 = vrot.slane %v199, 7
      %v281 = vsel %vm252, %v279, %v280
      %v282 = vrot.slane %v200, 7
      %v283 = vrot.slane %v201, 7
      %v284 = vsel %vm252, %v282, %v283
      %v285 = vrot.slane %v202, 7
      %v286 = vrot.slane %v203, 7
      %v287 = vsel %vm252, %v285, %v286
      %v288 = vrot.slane %v204, 7
      %v289 = vrot.slane %v205, 7
      %v290 = vsel %vm252, %v288, %v289
      %v291 = vrot.slane %v206, 7
      %v292 = vrot.slane %v207, 7
      %v293 = vsel %vm252, %v291, %v292
      %v294 = vrot.slane %v208, 7
      %v295 = vrot.slane %v209, 7
      %v296 = vsel %vm252, %v294, %v295
      %v297 = vrot.slane %v210, 7
      %v298 = vrot.slane %v211, 7
      %v299 = vsel %vm252, %v297, %v298
      %v300 = vrot.slane %v212, 7
      %v301 = vrot.slane %v213, 7
      %v302 = vsel %vm252, %v300, %v301
      %v352 = vsel %vm252, 0.0, %v253
      %v353 = vsel %vm252, 0.0, %v255
      %v354 = vsel %vm252, 0.0, %v258
      %v355 = vsel %vm252, 0.0, %v261
      %v356 = vsel %vm252, 0.0, %v264
      %v357 = vsel %vm252, 0.0, %v267
      %v358 = vsel %vm252, 0.0, %v270
      %v359 = vsel %vm252, 0.0, %v273
      %v360 = vsel %vm252, 0.0, %v276
      %v361 = vsel %vm252, 0.0, %v279
      %v362 = vsel %vm252, 0.0, %v282
      %v363 = vsel %vm252, 0.0, %v285
      %v364 = vsel %vm252, 0.0, %v288
      %v365 = vsel %vm252, 0.0, %v291
      %v366 = vsel %vm252, 0.0, %v294
      %v367 = vsel %vm252, 0.0, %v297
      %v368 = vsel %vm252, 0.0, %v300
      %v369 = vsel %vm252, %v253, 0.0
      %v370 = vsel %vm252, %v256, 0.0
      %v371 = vsel %vm252, %v259, 0.0
      %v372 = vsel %vm252, %v262, 0.0
      %v373 = vsel %vm252, %v265, 0.0
      %v374 = vsel %vm252, %v268, 0.0
      %v375 = vsel %vm252, %v271, 0.0
      %v376 = vsel %vm252, %v274, 0.0
      %v377 = vsel %vm252, %v277, 0.0
      %v378 = vsel %vm252, %v280, 0.0
      %v379 = vsel %vm252, %v283, 0.0
      %v380 = vsel %vm252, %v286, 0.0
      %v381 = vsel %vm252, %v289, 0.0
      %v382 = vsel %vm252, %v292, 0.0
      %v383 = vsel %vm252, %v295, 0.0
      %v384 = vsel %vm252, %v298, 0.0
      %v385 = vsel %vm252, %v301, 0.0
      %vm418 = vcmask 1046528
      %v419 = vrot.slane %v352, 1
      %v420 = vrot.slane %v254, 1
      %v421 = vsel %vm418, %v419, %v420
      %v422 = vrot.slane %v369, 1
      %v423 = vsel %vm418, %v420, %v422
      %v424 = vrot.slane %v353, 1
      %v425 = vrot.slane %v257, 1
      %v426 = vsel %vm418, %v424, %v425
      %v427 = vrot.slane %v370, 1
      %v428 = vsel %vm418, %v425, %v427
      %v429 = vrot.slane %v354, 1
      %v430 = vrot.slane %v260, 1
      %v431 = vsel %vm418, %v429, %v430
      %v432 = vrot.slane %v371, 1
      %v433 = vsel %vm418, %v430, %v432
      %v434 = vrot.slane %v355, 1
      %v435 = vrot.slane %v263, 1
      %v436 = vsel %vm418, %v434, %v435
      %v437 = vrot.slane %v372, 1
      %v438 = vsel %vm418, %v435, %v437
      %v439 = vrot.slane %v356, 1
      %v440 = vrot.slane %v266, 1
      %v441 = vsel %vm418, %v439, %v440
      %v442 = vrot.slane %v373, 1
      %v443 = vsel %vm418, %v440, %v442
      %v444 = vrot.slane %v357, 1
      %v445 = vrot.slane %v269, 1
      %v446 = vsel %vm418, %v444, %v445
      %v447 = vrot.slane %v374, 1
      %v448 = vsel %vm418, %v445, %v447
      %v449 = vrot.slane %v358, 1
      %v450 = vrot.slane %v272, 1
      %v451 = vsel %vm418, %v449, %v450
      %v452 = vrot.slane %v375, 1
      %v453 = vsel %vm418, %v450, %v452
      %v454 = vrot.slane %v359, 1
      %v455 = vrot.slane %v275, 1
      %v456 = vsel %vm418, %v454, %v455
      %v457 = vrot.slane %v376, 1
      %v458 = vsel %vm418, %v455, %v457
      %v459 = vrot.slane %v360, 1
      %v460 = vrot.slane %v278, 1
      %v461 = vsel %vm418, %v459, %v460
      %v462 = vrot.slane %v377, 1
      %v463 = vsel %vm418, %v460, %v462
      %v464 = vrot.slane %v361, 1
      %v465 = vrot.slane %v281, 1
      %v466 = vsel %vm418, %v464, %v465
      %v467 = vrot.slane %v378, 1
      %v468 = vsel %vm418, %v465, %v467
      %v469 = vrot.slane %v362, 1
      %v470 = vrot.slane %v284, 1
      %v471 = vsel %vm418, %v469, %v470
      %v472 = vrot.slane %v379, 1
      %v473 = vsel %vm418, %v470, %v472
      %v474 = vrot.slane %v363, 1
      %v475 = vrot.slane %v287, 1
      %v476 = vsel %vm418, %v474, %v475
      %v477 = vrot.slane %v380, 1
      %v478 = vsel %vm418, %v475, %v477
      %v479 = vrot.slane %v364, 1
      %v480 = vrot.slane %v290, 1
      %v481 = vsel %vm418, %v479, %v480
      %v482 = vrot.slane %v381, 1
      %v483 = vsel %vm418, %v480, %v482
      %v484 = vrot.slane %v365, 1
      %v485 = vrot.slane %v293, 1
      %v486 = vsel %vm418, %v484, %v485
      %v487 = vrot.slane %v382, 1
      %v488 = vsel %vm418, %v485, %v487
      %v489 = vrot.slane %v366, 1
      %v490 = vrot.slane %v296, 1
      %v491 = vsel %vm418, %v489, %v490
      %v492 = vrot.slane %v383, 1
      %v493 = vsel %vm418, %v490, %v492
      %v494 = vrot.slane %v367, 1
      %v495 = vrot.slane %v299, 1
      %v496 = vsel %vm418, %v494, %v495
      %v497 = vrot.slane %v384, 1
      %v498 = vsel %vm418, %v495, %v497
      %499 = vrot.lane.b32.xlu0 %v421, 4
      %v500 = vpop.permute.xlu0 %499
      %501 = vrot.lane.b32.xlu0 %v423, 4
      %v502 = vpop.permute.xlu0 %501
      %503 = vrot.lane.b32.xlu0 %v426, 4
      %v504 = vpop.permute.xlu0 %503
      %505 = vrot.lane.b32.xlu0 %v428, 4
      %v506 = vpop.permute.xlu0 %505
      %507 = vrot.lane.b32.xlu0 %v431, 4
      %v508 = vpop.permute.xlu0 %507
      %509 = vrot.lane.b32.xlu0 %v433, 4
      %v510 = vpop.permute.xlu0 %509
      %511 = vrot.lane.b32.xlu0 %v436, 4
      %v512 = vpop.permute.xlu0 %511
      %513 = vrot.lane.b32.xlu0 %v438, 4
      %v514 = vpop.permute.xlu0 %513
      %515 = vrot.lane.b32.xlu0 %v441, 4
      %v516 = vpop.permute.xlu0 %515
      %517 = vrot.lane.b32.xlu0 %v443, 4
      %v518 = vpop.permute.xlu0 %517
      %519 = vrot.lane.b32.xlu0 %v446, 4
      %v520 = vpop.permute.xlu0 %519
      %521 = vrot.lane.b32.xlu0 %v448, 4
      %v522 = vpop.permute.xlu0 %521
      %523 = vrot.lane.b32.xlu0 %v451, 4
      %v524 = vpop.permute.xlu0 %523
      %525 = vrot.lane.b32.xlu0 %v453, 4
      %v526 = vpop.permute.xlu0 %525
      %527 = vrot.lane.b32.xlu0 %v456, 4
      %v528 = vpop.permute.xlu0 %527
      %529 = vrot.lane.b32.xlu0 %v458, 4
      %v530 = vpop.permute.xlu0 %529
      %531 = vrot.lane.b32.xlu0 %v461, 4
      %v532 = vpop.permute.xlu0 %531
      %533 = vrot.lane.b32.xlu0 %v463, 4
      %v534 = vpop.permute.xlu0 %533
      %535 = vrot.lane.b32.xlu0 %v466, 4
      %v536 = vpop.permute.xlu0 %535
      %537 = vrot.lane.b32.xlu0 %v468, 4
      %v538 = vpop.permute.xlu0 %537
      %539 = vrot.lane.b32.xlu0 %v471, 4
      %v540 = vpop.permute.xlu0 %539
      %541 = vrot.lane.b32.xlu0 %v473, 4
      %v542 = vpop.permute.xlu0 %541
      %543 = vrot.lane.b32.xlu0 %v476, 4
      %v544 = vpop.permute.xlu0 %543
      %545 = vrot.lane.b32.xlu0 %v478, 4
      %v546 = vpop.permute.xlu0 %545
      %547 = vrot.lane.b32.xlu0 %v481, 4
      %v548 = vpop.permute.xlu0 %547
      %549 = vrot.lane.b32.xlu0 %v483, 4
      %v550 = vpop.permute.xlu0 %549
      %551 = vrot.lane.b32.xlu0 %v486, 4
      %v552 = vpop.permute.xlu0 %551
      %553 = vrot.lane.b32.xlu0 %v488, 4
      %v554 = vpop.permute.xlu0 %553
      %555 = vrot.lane.b32.xlu0 %v491, 4
      %v556 = vpop.permute.xlu0 %555
      %557 = vrot.lane.b32.xlu0 %v493, 4
      %v558 = vpop.permute.xlu0 %557
      %559 = vrot.lane.b32.xlu0 %v496, 4
      %v560 = vpop.permute.xlu0 %559
      %561 = vrot.lane.b32.xlu0 %v498, 4
      %v562 = vpop.permute.xlu0 %561
      %vm595 = vcmask 1045504
      %v596 = vrot.slane %v352, 2
      %v597 = vrot.slane %v254, 2
      %v598 = vsel %vm595, %v596, %v597
      %v599 = vrot.slane %v369, 2
      %v600 = vsel %vm595, %v597, %v599
      %v601 = vrot.slane %v353, 2
      %v602 = vrot.slane %v257, 2
      %v603 = vsel %vm595, %v601, %v602
      %v604 = vrot.slane %v370, 2
      %v605 = vsel %vm595, %v602, %v604
      %v606 = vrot.slane %v354, 2
      %v607 = vrot.slane %v260, 2
      %v608 = vsel %vm595, %v606, %v607
      %v609 = vrot.slane %v371, 2
      %v610 = vsel %vm595, %v607, %v609
      %v611 = vrot.slane %v355, 2
      %v612 = vrot.slane %v263, 2
      %v613 = vsel %vm595, %v611, %v612
      %v614 = vrot.slane %v372, 2
      %v615 = vsel %vm595, %v612, %v614
      %v616 = vrot.slane %v356, 2
      %v617 = vrot.slane %v266, 2
      %v618 = vsel %vm595, %v616, %v617
      %v619 = vrot.slane %v373, 2
      %v620 = vsel %vm595, %v617, %v619
      %v621 = vrot.slane %v357, 2
      %v622 = vrot.slane %v269, 2
      %v623 = vsel %vm595, %v621, %v622
      %v624 = vrot.slane %v374, 2
      %v625 = vsel %vm595, %v622, %v624
      %v626 = vrot.slane %v358, 2
      %v627 = vrot.slane %v272, 2
      %v628 = vsel %vm595, %v626, %v627
      %v629 = vrot.slane %v375, 2
      %v630 = vsel %vm595, %v627, %v629
      %v631 = vrot.slane %v359, 2
      %v632 = vrot.slane %v275, 2
      %v633 = vsel %vm595, %v631, %v632
      %v634 = vrot.slane %v376, 2
      %v635 = vsel %vm595, %v632, %v634
      %v636 = vrot.slane %v360, 2
      %v637 = vrot.slane %v278, 2
      %v638 = vsel %vm595, %v636, %v637
      %v639 = vrot.slane %v377, 2
      %v640 = vsel %vm595, %v637, %v639
      %v641 = vrot.slane %v361, 2
      %v642 = vrot.slane %v281, 2
      %v643 = vsel %vm595, %v641, %v642
      %v644 = vrot.slane %v378, 2
      %v645 = vsel %vm595, %v642, %v644
      %v646 = vrot.slane %v362, 2
      %v647 = vrot.slane %v284, 2
      %v648 = vsel %vm595, %v646, %v647
      %v649 = vrot.slane %v379, 2
      %v650 = vsel %vm595, %v647, %v649
      %v651 = vrot.slane %v363, 2
      %v652 = vrot.slane %v287, 2
      %v653 = vsel %vm595, %v651, %v652
      %v654 = vrot.slane %v380, 2
      %v655 = vsel %vm595, %v652, %v654
      %v656 = vrot.slane %v364, 2
      %v657 = vrot.slane %v290, 2
      %v658 = vsel %vm595, %v656, %v657
      %v659 = vrot.slane %v381, 2
      %v660 = vsel %vm595, %v657, %v659
      %v661 = vrot.slane %v365, 2
      %v662 = vrot.slane %v293, 2
      %v663 = vsel %vm595, %v661, %v662
      %v664 = vrot.slane %v382, 2
      %v665 = vsel %vm595, %v662, %v664
      %v666 = vrot.slane %v366, 2
      %v667 = vrot.slane %v296, 2
      %v668 = vsel %vm595, %v666, %v667
      %v669 = vrot.slane %v383, 2
      %v670 = vsel %vm595, %v667, %v669
      %v671 = vrot.slane %v367, 2
      %v672 = vrot.slane %v299, 2
      %v673 = vsel %vm595, %v671, %v672
      %v674 = vrot.slane %v384, 2
      %v675 = vsel %vm595, %v672, %v674
      %676 = vrot.lane.b32.xlu0 %v598, 8
      %v677 = vpop.permute.xlu0 %676
      %678 = vrot.lane.b32.xlu0 %v600, 8
      %v679 = vpop.permute.xlu0 %678
      %680 = vrot.lane.b32.xlu0 %v603, 8
      %v681 = vpop.permute.xlu0 %680
      %682 = vrot.lane.b32.xlu0 %v605, 8
      %v683 = vpop.permute.xlu0 %682
      %684 = vrot.lane.b32.xlu0 %v608, 8
      %v685 = vpop.permute.xlu0 %684
      %686 = vrot.lane.b32.xlu0 %v610, 8
      %v687 = vpop.permute.xlu0 %686
      %688 = vrot.lane.b32.xlu0 %v613, 8
      %v689 = vpop.permute.xlu0 %688
      %690 = vrot.lane.b32.xlu0 %v615, 8
      %v691 = vpop.permute.xlu0 %690
      %692 = vrot.lane.b32.xlu0 %v618, 8
      %v693 = vpop.permute.xlu0 %692
      %694 = vrot.lane.b32.xlu0 %v620, 8
      %v695 = vpop.permute.xlu0 %694
      %696 = vrot.lane.b32.xlu0 %v623, 8
      %v697 = vpop.permute.xlu0 %696
      %698 = vrot.lane.b32.xlu0 %v625, 8
      %v699 = vpop.permute.xlu0 %698
      %700 = vrot.lane.b32.xlu0 %v628, 8
      %v701 = vpop.permute.xlu0 %700
      %702 = vrot.lane.b32.xlu0 %v630, 8
      %v703 = vpop.permute.xlu0 %702
      %704 = vrot.lane.b32.xlu0 %v633, 8
      %v705 = vpop.permute.xlu0 %704
      %706 = vrot.lane.b32.xlu0 %v635, 8
      %v707 = vpop.permute.xlu0 %706
      %708 = vrot.lane.b32.xlu0 %v638, 8
      %v709 = vpop.permute.xlu0 %708
      %710 = vrot.lane.b32.xlu0 %v640, 8
      %v711 = vpop.permute.xlu0 %710
      %712 = vrot.lane.b32.xlu0 %v643, 8
      %v713 = vpop.permute.xlu0 %712
      %714 = vrot.lane.b32.xlu0 %v645, 8
      %v715 = vpop.permute.xlu0 %714
      %716 = vrot.lane.b32.xlu0 %v648, 8
      %v717 = vpop.permute.xlu0 %716
      %718 = vrot.lane.b32.xlu0 %v650, 8
      %v719 = vpop.permute.xlu0 %718
      %720 = vrot.lane.b32.xlu0 %v653, 8
      %v721 = vpop.permute.xlu0 %720
      %722 = vrot.lane.b32.xlu0 %v655, 8
      %v723 = vpop.permute.xlu0 %722
      %724 = vrot.lane.b32.xlu0 %v658, 8
      %v725 = vpop.permute.xlu0 %724
      %726 = vrot.lane.b32.xlu0 %v660, 8
      %v727 = vpop.permute.xlu0 %726
      %728 = vrot.lane.b32.xlu0 %v663, 8
      %v729 = vpop.permute.xlu0 %728
      %730 = vrot.lane.b32.xlu0 %v665, 8
      %v731 = vpop.permute.xlu0 %730
      %732 = vrot.lane.b32.xlu0 %v668, 8
      %v733 = vpop.permute.xlu0 %732
      %734 = vrot.lane.b32.xlu0 %v670, 8
      %v735 = vpop.permute.xlu0 %734
      %736 = vrot.lane.b32.xlu0 %v673, 8
      %v737 = vpop.permute.xlu0 %736
      %738 = vrot.lane.b32.xlu0 %v675, 8
      %v739 = vpop.permute.xlu0 %738
      %773 = vrot.lane.b32.xlu0 %v353, 12
      %v774 = vpop.permute.xlu0 %773
      %775 = vrot.lane.b32.xlu0 %v257, 12
      %v776 = vpop.permute.xlu0 %775
      %777 = vrot.lane.b32.xlu0 %v354, 12
      %v778 = vpop.permute.xlu0 %777
      %779 = vrot.lane.b32.xlu0 %v260, 12
      %v780 = vpop.permute.xlu0 %779
      %781 = vrot.lane.b32.xlu0 %v355, 12
      %v782 = vpop.permute.xlu0 %781
      %783 = vrot.lane.b32.xlu0 %v263, 12
      %v784 = vpop.permute.xlu0 %783
      %785 = vrot.lane.b32.xlu0 %v356, 12
      %v786 = vpop.permute.xlu0 %785
      %787 = vrot.lane.b32.xlu0 %v266, 12
      %v788 = vpop.permute.xlu0 %787
      %789 = vrot.lane.b32.xlu0 %v357, 12
      %v790 = vpop.permute.xlu0 %789
      %791 = vrot.lane.b32.xlu0 %v269, 12
      %v792 = vpop.permute.xlu0 %791
      %793 = vrot.lane.b32.xlu0 %v358, 12
      %v794 = vpop.permute.xlu0 %793
      %795 = vrot.lane.b32.xlu0 %v272, 12
      %v796 = vpop.permute.xlu0 %795
      %797 = vrot.lane.b32.xlu0 %v359, 12
      %v798 = vpop.permute.xlu0 %797
      %799 = vrot.lane.b32.xlu0 %v275, 12
      %v800 = vpop.permute.xlu0 %799
      %801 = vrot.lane.b32.xlu0 %v360, 12
      %v802 = vpop.permute.xlu0 %801
      %803 = vrot.lane.b32.xlu0 %v278, 12
      %v804 = vpop.permute.xlu0 %803
      %805 = vrot.lane.b32.xlu0 %v361, 12
      %v806 = vpop.permute.xlu0 %805
      %807 = vrot.lane.b32.xlu0 %v281, 12
      %v808 = vpop.permute.xlu0 %807
      %809 = vrot.lane.b32.xlu0 %v362, 12
      %v810 = vpop.permute.xlu0 %809
      %811 = vrot.lane.b32.xlu0 %v284, 12
      %v812 = vpop.permute.xlu0 %811
      %813 = vrot.lane.b32.xlu0 %v363, 12
      %v814 = vpop.permute.xlu0 %813
      %815 = vrot.lane.b32.xlu0 %v287, 12
      %v816 = vpop.permute.xlu0 %815
      %817 = vrot.lane.b32.xlu0 %v364, 12
      %v818 = vpop.permute.xlu0 %817
      %819 = vrot.lane.b32.xlu0 %v290, 12
      %v820 = vpop.permute.xlu0 %819
      %821 = vrot.lane.b32.xlu0 %v365, 12
      %v822 = vpop.permute.xlu0 %821
      %823 = vrot.lane.b32.xlu0 %v293, 12
      %v824 = vpop.permute.xlu0 %823
      %825 = vrot.lane.b32.xlu0 %v366, 12
      %v826 = vpop.permute.xlu0 %825
      %827 = vrot.lane.b32.xlu0 %v296, 12
      %v828 = vpop.permute.xlu0 %827
      %829 = vrot.lane.b32.xlu0 %v367, 12
      %v830 = vpop.permute.xlu0 %829
      %831 = vrot.lane.b32.xlu0 %v299, 12
      %v832 = vpop.permute.xlu0 %831
      %833 = vrot.lane.b32.xlu0 %v368, 12
      %v834 = vpop.permute.xlu0 %833
      %835 = vrot.lane.b32.xlu0 %v302, 12
      %v836 = vpop.permute.xlu0 %835
      %v870 = vrot.slane %v368, 1
      %v871 = vrot.slane %v302, 1
      %v872 = vsel %vm418, %v870, %v871
      %v873 = vrot.slane %v385, 1
      %v874 = vsel %vm418, %v871, %v873
      %875 = vrot.lane.b32.xlu0 %v426, 16
      %v876 = vpop.permute.xlu0 %875
      %877 = vrot.lane.b32.xlu0 %v428, 16
      %v878 = vpop.permute.xlu0 %877
      %879 = vrot.lane.b32.xlu0 %v431, 16
      %v880 = vpop.permute.xlu0 %879
      %881 = vrot.lane.b32.xlu0 %v433, 16
      %v882 = vpop.permute.xlu0 %881
      %883 = vrot.lane.b32.xlu0 %v436, 16
      %v884 = vpop.permute.xlu0 %883
      %885 = vrot.lane.b32.xlu0 %v438, 16
      %v886 = vpop.permute.xlu0 %885
      %887 = vrot.lane.b32.xlu0 %v441, 16
      %v888 = vpop.permute.xlu0 %887
      %889 = vrot.lane.b32.xlu0 %v443, 16
      %v890 = vpop.permute.xlu0 %889
      %891 = vrot.lane.b32.xlu0 %v446, 16
      %v892 = vpop.permute.xlu0 %891
      %893 = vrot.lane.b32.xlu0 %v448, 16
      %v894 = vpop.permute.xlu0 %893
      %895 = vrot.lane.b32.xlu0 %v451, 16
      %v896 = vpop.permute.xlu0 %895
      %897 = vrot.lane.b32.xlu0 %v453, 16
      %v898 = vpop.permute.xlu0 %897
      %899 = vrot.lane.b32.xlu0 %v456, 16
      %v900 = vpop.permute.xlu0 %899
      %901 = vrot.lane.b32.xlu0 %v458, 16
      %v902 = vpop.permute.xlu0 %901
      %903 = vrot.lane.b32.xlu0 %v461, 16
      %v904 = vpop.permute.xlu0 %903
      %905 = vrot.lane.b32.xlu0 %v463, 16
      %v906 = vpop.permute.xlu0 %905
      %907 = vrot.lane.b32.xlu0 %v466, 16
      %v908 = vpop.permute.xlu0 %907
      %909 = vrot.lane.b32.xlu0 %v468, 16
      %v910 = vpop.permute.xlu0 %909
      %911 = vrot.lane.b32.xlu0 %v471, 16
      %v912 = vpop.permute.xlu0 %911
      %913 = vrot.lane.b32.xlu0 %v473, 16
      %v914 = vpop.permute.xlu0 %913
      %915 = vrot.lane.b32.xlu0 %v476, 16
      %v916 = vpop.permute.xlu0 %915
      %917 = vrot.lane.b32.xlu0 %v478, 16
      %v918 = vpop.permute.xlu0 %917
      %919 = vrot.lane.b32.xlu0 %v481, 16
      %v920 = vpop.permute.xlu0 %919
      %921 = vrot.lane.b32.xlu0 %v483, 16
      %v922 = vpop.permute.xlu0 %921
      %923 = vrot.lane.b32.xlu0 %v486, 16
      %v924 = vpop.permute.xlu0 %923
      %925 = vrot.lane.b32.xlu0 %v488, 16
      %v926 = vpop.permute.xlu0 %925
      %927 = vrot.lane.b32.xlu0 %v491, 16
      %v928 = vpop.permute.xlu0 %927
      %929 = vrot.lane.b32.xlu0 %v493, 16
      %v930 = vpop.permute.xlu0 %929
      %931 = vrot.lane.b32.xlu0 %v496, 16
      %v932 = vpop.permute.xlu0 %931
      %933 = vrot.lane.b32.xlu0 %v498, 16
      %v934 = vpop.permute.xlu0 %933
      %935 = vrot.lane.b32.xlu0 %v872, 16
      %v936 = vpop.permute.xlu0 %935
      %937 = vrot.lane.b32.xlu0 %v874, 16
      %v938 = vpop.permute.xlu0 %937
      %v971 = vrot.slane %v368, 2
      %v972 = vrot.slane %v302, 2
      %v973 = vsel %vm595, %v971, %v972
      %v974 = vrot.slane %v385, 2
      %v975 = vsel %vm595, %v972, %v974
      %976 = vrot.lane.b32.xlu0 %v603, 20
      %v977 = vpop.permute.xlu0 %976
      %978 = vrot.lane.b32.xlu0 %v605, 20
      %v979 = vpop.permute.xlu0 %978
      %980 = vrot.lane.b32.xlu0 %v608, 20
      %v981 = vpop.permute.xlu0 %980
      %982 = vrot.lane.b32.xlu0 %v610, 20
      %v983 = vpop.permute.xlu0 %982
      %984 = vrot.lane.b32.xlu0 %v613, 20
      %v985 = vpop.permute.xlu0 %984
      %986 = vrot.lane.b32.xlu0 %v615, 20
      %v987 = vpop.permute.xlu0 %986
      %988 = vrot.lane.b32.xlu0 %v618, 20
      %v989 = vpop.permute.xlu0 %988
      %990 = vrot.lane.b32.xlu0 %v620, 20
      %v991 = vpop.permute.xlu0 %990
      %992 = vrot.lane.b32.xlu0 %v623, 20
      %v993 = vpop.permute.xlu0 %992
      %994 = vrot.lane.b32.xlu0 %v625, 20
      %v995 = vpop.permute.xlu0 %994
      %996 = vrot.lane.b32.xlu0 %v628, 20
      %v997 = vpop.permute.xlu0 %996
      %998 = vrot.lane.b32.xlu0 %v630, 20
      %v999 = vpop.permute.xlu0 %998
      %1000 = vrot.lane.b32.xlu0 %v633, 20
      %v1001 = vpop.permute.xlu0 %1000
      %1002 = vrot.lane.b32.xlu0 %v635, 20
      %v1003 = vpop.permute.xlu0 %1002
      %1004 = vrot.lane.b32.xlu0 %v638, 20
      %v1005 = vpop.permute.xlu0 %1004
      %1006 = vrot.lane.b32.xlu0 %v640, 20
      %v1007 = vpop.permute.xlu0 %1006
      %1008 = vrot.lane.b32.xlu0 %v643, 20
      %v1009 = vpop.permute.xlu0 %1008
      %1010 = vrot.lane.b32.xlu0 %v645, 20
      %v1011 = vpop.permute.xlu0 %1010
      %1012 = vrot.lane.b32.xlu0 %v648, 20
      %v1013 = vpop.permute.xlu0 %1012
      %1014 = vrot.lane.b32.xlu0 %v650, 20
      %v1015 = vpop.permute.xlu0 %1014
      %1016 = vrot.lane.b32.xlu0 %v653, 20
      %v1017 = vpop.permute.xlu0 %1016
      %1018 = vrot.lane.b32.xlu0 %v655, 20
      %v1019 = vpop.permute.xlu0 %1018
      %1020 = vrot.lane.b32.xlu0 %v658, 20
      %v1021 = vpop.permute.xlu0 %1020
      %1022 = vrot.lane.b32.xlu0 %v660, 20
      %v1023 = vpop.permute.xlu0 %1022
      %1024 = vrot.lane.b32.xlu0 %v663, 20
      %v1025 = vpop.permute.xlu0 %1024
      %1026 = vrot.lane.b32.xlu0 %v665, 20
      %v1027 = vpop.permute.xlu0 %1026
      %1028 = vrot.lane.b32.xlu0 %v668, 20
      %v1029 = vpop.permute.xlu0 %1028
      %1030 = vrot.lane.b32.xlu0 %v670, 20
      %v1031 = vpop.permute.xlu0 %1030
      %1032 = vrot.lane.b32.xlu0 %v673, 20
      %v1033 = vpop.permute.xlu0 %1032
      %1034 = vrot.lane.b32.xlu0 %v675, 20
      %v1035 = vpop.permute.xlu0 %1034
      %1036 = vrot.lane.b32.xlu0 %v973, 20
      %v1037 = vpop.permute.xlu0 %1036
      %1038 = vrot.lane.b32.xlu0 %v975, 20
      %v1039 = vpop.permute.xlu0 %1038
      %1072 = vrot.lane.b32.xlu0 %v354, 24
      %v1073 = vpop.permute.xlu0 %1072
      %1074 = vrot.lane.b32.xlu0 %v260, 24
      %v1075 = vpop.permute.xlu0 %1074
      %1076 = vrot.lane.b32.xlu0 %v355, 24
      %v1077 = vpop.permute.xlu0 %1076
      %1078 = vrot.lane.b32.xlu0 %v263, 24
      %v1079 = vpop.permute.xlu0 %1078
      %1080 = vrot.lane.b32.xlu0 %v356, 24
      %v1081 = vpop.permute.xlu0 %1080
      %1082 = vrot.lane.b32.xlu0 %v266, 24
      %v1083 = vpop.permute.xlu0 %1082
      %1084 = vrot.lane.b32.xlu0 %v357, 24
      %v1085 = vpop.permute.xlu0 %1084
      %1086 = vrot.lane.b32.xlu0 %v269, 24
      %v1087 = vpop.permute.xlu0 %1086
      %1088 = vrot.lane.b32.xlu0 %v358, 24
      %v1089 = vpop.permute.xlu0 %1088
      %1090 = vrot.lane.b32.xlu0 %v272, 24
      %v1091 = vpop.permute.xlu0 %1090
      %1092 = vrot.lane.b32.xlu0 %v359, 24
      %v1093 = vpop.permute.xlu0 %1092
      %1094 = vrot.lane.b32.xlu0 %v275, 24
      %v1095 = vpop.permute.xlu0 %1094
      %1096 = vrot.lane.b32.xlu0 %v360, 24
      %v1097 = vpop.permute.xlu0 %1096
      %1098 = vrot.lane.b32.xlu0 %v278, 24
      %v1099 = vpop.permute.xlu0 %1098
      %1100 = vrot.lane.b32.xlu0 %v361, 24
      %v1101 = vpop.permute.xlu0 %1100
      %1102 = vrot.lane.b32.xlu0 %v281, 24
      %v1103 = vpop.permute.xlu0 %1102
      %1104 = vrot.lane.b32.xlu0 %v362, 24
      %v1105 = vpop.permute.xlu0 %1104
      %1106 = vrot.lane.b32.xlu0 %v284, 24
      %v1107 = vpop.permute.xlu0 %1106
      %1108 = vrot.lane.b32.xlu0 %v363, 24
      %v1109 = vpop.permute.xlu0 %1108
      %1110 = vrot.lane.b32.xlu0 %v287, 24
      %v1111 = vpop.permute.xlu0 %1110
      %1112 = vrot.lane.b32.xlu0 %v364, 24
      %v1113 = vpop.permute.xlu0 %1112
      %1114 = vrot.lane.b32.xlu0 %v290, 24
      %v1115 = vpop.permute.xlu0 %1114
      %1116 = vrot.lane.b32.xlu0 %v365, 24
      %v1117 = vpop.permute.xlu0 %1116
      %1118 = vrot.lane.b32.xlu0 %v293, 24
      %v1119 = vpop.permute.xlu0 %1118
      %1120 = vrot.lane.b32.xlu0 %v366, 24
      %v1121 = vpop.permute.xlu0 %1120
      %1122 = vrot.lane.b32.xlu0 %v296, 24
      %v1123 = vpop.permute.xlu0 %1122
      %1124 = vrot.lane.b32.xlu0 %v367, 24
      %v1125 = vpop.permute.xlu0 %1124
      %1126 = vrot.lane.b32.xlu0 %v299, 24
      %v1127 = vpop.permute.xlu0 %1126
      %1128 = vrot.lane.b32.xlu0 %v368, 24
      %v1129 = vpop.permute.xlu0 %1128
      %1130 = vrot.lane.b32.xlu0 %v302, 24
      %v1131 = vpop.permute.xlu0 %1130
      %1132 = vrot.lane.b32.xlu0 %v352, 24
      %v1133 = vpop.permute.xlu0 %1132
      %1134 = vrot.lane.b32.xlu0 %v254, 24
      %v1135 = vpop.permute.xlu0 %1134
      %1168 = vrot.lane.b32.xlu0 %v431, 28
      %v1169 = vpop.permute.xlu0 %1168
      %1170 = vrot.lane.b32.xlu0 %v433, 28
      %v1171 = vpop.permute.xlu0 %1170
      %1172 = vrot.lane.b32.xlu0 %v436, 28
      %v1173 = vpop.permute.xlu0 %1172
      %1174 = vrot.lane.b32.xlu0 %v438, 28
      %v1175 = vpop.permute.xlu0 %1174
      %1176 = vrot.lane.b32.xlu0 %v441, 28
      %v1177 = vpop.permute.xlu0 %1176
      %1178 = vrot.lane.b32.xlu0 %v443, 28
      %v1179 = vpop.permute.xlu0 %1178
      %1180 = vrot.lane.b32.xlu0 %v446, 28
      %v1181 = vpop.permute.xlu0 %1180
      %1182 = vrot.lane.b32.xlu0 %v448, 28
      %v1183 = vpop.permute.xlu0 %1182
      %1184 = vrot.lane.b32.xlu0 %v451, 28
      %v1185 = vpop.permute.xlu0 %1184
      %1186 = vrot.lane.b32.xlu0 %v453, 28
      %v1187 = vpop.permute.xlu0 %1186
      %1188 = vrot.lane.b32.xlu0 %v456, 28
      %v1189 = vpop.permute.xlu0 %1188
      %1190 = vrot.lane.b32.xlu0 %v458, 28
      %v1191 = vpop.permute.xlu0 %1190
      %1192 = vrot.lane.b32.xlu0 %v461, 28
      %v1193 = vpop.permute.xlu0 %1192
      %1194 = vrot.lane.b32.xlu0 %v463, 28
      %v1195 = vpop.permute.xlu0 %1194
      %1196 = vrot.lane.b32.xlu0 %v466, 28
      %v1197 = vpop.permute.xlu0 %1196
      %1198 = vrot.lane.b32.xlu0 %v468, 28
      %v1199 = vpop.permute.xlu0 %1198
      %1200 = vrot.lane.b32.xlu0 %v471, 28
      %v1201 = vpop.permute.xlu0 %1200
      %1202 = vrot.lane.b32.xlu0 %v473, 28
      %v1203 = vpop.permute.xlu0 %1202
      %1204 = vrot.lane.b32.xlu0 %v476, 28
      %v1205 = vpop.permute.xlu0 %1204
      %1206 = vrot.lane.b32.xlu0 %v478, 28
      %v1207 = vpop.permute.xlu0 %1206
      %1208 = vrot.lane.b32.xlu0 %v481, 28
      %v1209 = vpop.permute.xlu0 %1208
      %1210 = vrot.lane.b32.xlu0 %v483, 28
      %v1211 = vpop.permute.xlu0 %1210
      %1212 = vrot.lane.b32.xlu0 %v486, 28
      %v1213 = vpop.permute.xlu0 %1212
      %1214 = vrot.lane.b32.xlu0 %v488, 28
      %v1215 = vpop.permute.xlu0 %1214
      %1216 = vrot.lane.b32.xlu0 %v491, 28
      %v1217 = vpop.permute.xlu0 %1216
      %1218 = vrot.lane.b32.xlu0 %v493, 28
      %v1219 = vpop.permute.xlu0 %1218
      %1220 = vrot.lane.b32.xlu0 %v496, 28
      %v1221 = vpop.permute.xlu0 %1220
      %1222 = vrot.lane.b32.xlu0 %v498, 28
      %v1223 = vpop.permute.xlu0 %1222
      %1224 = vrot.lane.b32.xlu0 %v872, 28
      %v1225 = vpop.permute.xlu0 %1224
      %1226 = vrot.lane.b32.xlu0 %v874, 28
      %v1227 = vpop.permute.xlu0 %1226
      %1228 = vrot.lane.b32.xlu0 %v421, 28
      %v1229 = vpop.permute.xlu0 %1228
      %1230 = vrot.lane.b32.xlu0 %v423, 28
      %v1231 = vpop.permute.xlu0 %1230
      %1264 = vrot.lane.b32.xlu0 %v608, 32
      %v1265 = vpop.permute.xlu0 %1264
      %1266 = vrot.lane.b32.xlu0 %v610, 32
      %v1267 = vpop.permute.xlu0 %1266
      %1268 = vrot.lane.b32.xlu0 %v613, 32
      %v1269 = vpop.permute.xlu0 %1268
      %1270 = vrot.lane.b32.xlu0 %v615, 32
      %v1271 = vpop.permute.xlu0 %1270
      %1272 = vrot.lane.b32.xlu0 %v618, 32
      %v1273 = vpop.permute.xlu0 %1272
      %1274 = vrot.lane.b32.xlu0 %v620, 32
      %v1275 = vpop.permute.xlu0 %1274
      %1276 = vrot.lane.b32.xlu0 %v623, 32
      %v1277 = vpop.permute.xlu0 %1276
      %1278 = vrot.lane.b32.xlu0 %v625, 32
      %v1279 = vpop.permute.xlu0 %1278
      %1280 = vrot.lane.b32.xlu0 %v628, 32
      %v1281 = vpop.permute.xlu0 %1280
      %1282 = vrot.lane.b32.xlu0 %v630, 32
      %v1283 = vpop.permute.xlu0 %1282
      %1284 = vrot.lane.b32.xlu0 %v633, 32
      %v1285 = vpop.permute.xlu0 %1284
      %1286 = vrot.lane.b32.xlu0 %v635, 32
      %v1287 = vpop.permute.xlu0 %1286
      %1288 = vrot.lane.b32.xlu0 %v638, 32
      %v1289 = vpop.permute.xlu0 %1288
      %1290 = vrot.lane.b32.xlu0 %v640, 32
      %v1291 = vpop.permute.xlu0 %1290
      %1292 = vrot.lane.b32.xlu0 %v643, 32
      %v1293 = vpop.permute.xlu0 %1292
      %1294 = vrot.lane.b32.xlu0 %v645, 32
      %v1295 = vpop.permute.xlu0 %1294
      %1296 = vrot.lane.b32.xlu0 %v648, 32
      %v1297 = vpop.permute.xlu0 %1296
      %1298 = vrot.lane.b32.xlu0 %v650, 32
      %v1299 = vpop.permute.xlu0 %1298
      %1300 = vrot.lane.b32.xlu0 %v653, 32
      %v1301 = vpop.permute.xlu0 %1300
      %1302 = vrot.lane.b32.xlu0 %v655, 32
      %v1303 = vpop.permute.xlu0 %1302
      %1304 = vrot.lane.b32.xlu0 %v658, 32
      %v1305 = vpop.permute.xlu0 %1304
      %1306 = vrot.lane.b32.xlu0 %v660, 32
      %v1307 = vpop.permute.xlu0 %1306
      %1308 = vrot.lane.b32.xlu0 %v663, 32
      %v1309 = vpop.permute.xlu0 %1308
      %1310 = vrot.lane.b32.xlu0 %v665, 32
      %v1311 = vpop.permute.xlu0 %1310
      %1312 = vrot.lane.b32.xlu0 %v668, 32
      %v1313 = vpop.permute.xlu0 %1312
      %1314 = vrot.lane.b32.xlu0 %v670, 32
      %v1315 = vpop.permute.xlu0 %1314
      %1316 = vrot.lane.b32.xlu0 %v673, 32
      %v1317 = vpop.permute.xlu0 %1316
      %1318 = vrot.lane.b32.xlu0 %v675, 32
      %v1319 = vpop.permute.xlu0 %1318
      %1320 = vrot.lane.b32.xlu0 %v973, 32
      %v1321 = vpop.permute.xlu0 %1320
      %1322 = vrot.lane.b32.xlu0 %v975, 32
      %v1323 = vpop.permute.xlu0 %1322
      %1324 = vrot.lane.b32.xlu0 %v598, 32
      %v1325 = vpop.permute.xlu0 %1324
      %1326 = vrot.lane.b32.xlu0 %v600, 32
      %v1327 = vpop.permute.xlu0 %1326
      %vm1360 = vcmask 31744
      %v1361 = vsel %vm1360, %v352, %v500
      %v1362 = vsel %vm1360, %v254, %v502
      %v1363 = vsel %vm1360, %v353, %v504
      %v1364 = vsel %vm1360, %v257, %v506
      %v1365 = vsel %vm1360, %v354, %v508
      %v1366 = vsel %vm1360, %v260, %v510
      %v1367 = vsel %vm1360, %v355, %v512
      %v1368 = vsel %vm1360, %v263, %v514
      %v1369 = vsel %vm1360, %v356, %v516
      %v1370 = vsel %vm1360, %v266, %v518
      %v1371 = vsel %vm1360, %v357, %v520
      %v1372 = vsel %vm1360, %v269, %v522
      %v1373 = vsel %vm1360, %v358, %v524
      %v1374 = vsel %vm1360, %v272, %v526
      %v1375 = vsel %vm1360, %v359, %v528
      %v1376 = vsel %vm1360, %v275, %v530
      %v1377 = vsel %vm1360, %v360, %v532
      %v1378 = vsel %vm1360, %v278, %v534
      %v1379 = vsel %vm1360, %v361, %v536
      %v1380 = vsel %vm1360, %v281, %v538
      %v1381 = vsel %vm1360, %v362, %v540
      %v1382 = vsel %vm1360, %v284, %v542
      %v1383 = vsel %vm1360, %v363, %v544
      %v1384 = vsel %vm1360, %v287, %v546
      %v1385 = vsel %vm1360, %v364, %v548
      %v1386 = vsel %vm1360, %v290, %v550
      %v1387 = vsel %vm1360, %v365, %v552
      %v1388 = vsel %vm1360, %v293, %v554
      %v1389 = vsel %vm1360, %v366, %v556
      %v1390 = vsel %vm1360, %v296, %v558
      %v1391 = vsel %vm1360, %v367, %v560
      %v1392 = vsel %vm1360, %v299, %v562
      %vm1393 = vcmask 64512
      %v1394 = vsel %vm1393, %v1361, %v677
      %v1395 = vsel %vm1393, %v1362, %v679
      %v1396 = vsel %vm1393, %v1363, %v681
      %v1397 = vsel %vm1393, %v1364, %v683
      %v1398 = vsel %vm1393, %v1365, %v685
      %v1399 = vsel %vm1393, %v1366, %v687
      %v1400 = vsel %vm1393, %v1367, %v689
      %v1401 = vsel %vm1393, %v1368, %v691
      %v1402 = vsel %vm1393, %v1369, %v693
      %v1403 = vsel %vm1393, %v1370, %v695
      %v1404 = vsel %vm1393, %v1371, %v697
      %v1405 = vsel %vm1393, %v1372, %v699
      %v1406 = vsel %vm1393, %v1373, %v701
      %v1407 = vsel %vm1393, %v1374, %v703
      %v1408 = vsel %vm1393, %v1375, %v705
      %v1409 = vsel %vm1393, %v1376, %v707
      %v1410 = vsel %vm1393, %v1377, %v709
      %v1411 = vsel %vm1393, %v1378, %v711
      %v1412 = vsel %vm1393, %v1379, %v713
      %v1413 = vsel %vm1393, %v1380, %v715
      %v1414 = vsel %vm1393, %v1381, %v717
      %v1415 = vsel %vm1393, %v1382, %v719
      %v1416 = vsel %vm1393, %v1383, %v721
      %v1417 = vsel %vm1393, %v1384, %v723
      %v1418 = vsel %vm1393, %v1385, %v725
      %v1419 = vsel %vm1393, %v1386, %v727
      %v1420 = vsel %vm1393, %v1387, %v729
      %v1421 = vsel %vm1393, %v1388, %v731
      %v1422 = vsel %vm1393, %v1389, %v733
      %v1423 = vsel %vm1393, %v1390, %v735
      %v1424 = vsel %vm1393, %v1391, %v737
      %v1425 = vsel %vm1393, %v1392, %v739
      %vm1426 = vcmask 97280
      %v1427 = vsel %vm1426, %v1394, %v774
      %v1428 = vsel %vm1426, %v1395, %v776
      %v1429 = vsel %vm1426, %v1396, %v778
      %v1430 = vsel %vm1426, %v1397, %v780
      %v1431 = vsel %vm1426, %v1398, %v782
      %v1432 = vsel %vm1426, %v1399, %v784
      %v1433 = vsel %vm1426, %v1400, %v786
      %v1434 = vsel %vm1426, %v1401, %v788
      %v1435 = vsel %vm1426, %v1402, %v790
      %v1436 = vsel %vm1426, %v1403, %v792
      %v1437 = vsel %vm1426, %v1404, %v794
      %v1438 = vsel %vm1426, %v1405, %v796
      %v1439 = vsel %vm1426, %v1406, %v798
      %v1440 = vsel %vm1426, %v1407, %v800
      %v1441 = vsel %vm1426, %v1408, %v802
      %v1442 = vsel %vm1426, %v1409, %v804
      %v1443 = vsel %vm1426, %v1410, %v806
      %v1444 = vsel %vm1426, %v1411, %v808
      %v1445 = vsel %vm1426, %v1412, %v810
      %v1446 = vsel %vm1426, %v1413, %v812
      %v1447 = vsel %vm1426, %v1414, %v814
      %v1448 = vsel %vm1426, %v1415, %v816
      %v1449 = vsel %vm1426, %v1416, %v818
      %v1450 = vsel %vm1426, %v1417, %v820
      %v1451 = vsel %vm1426, %v1418, %v822
      %v1452 = vsel %vm1426, %v1419, %v824
      %v1453 = vsel %vm1426, %v1420, %v826
      %v1454 = vsel %vm1426, %v1421, %v828
      %v1455 = vsel %vm1426, %v1422, %v830
      %v1456 = vsel %vm1426, %v1423, %v832
      %v1457 = vsel %vm1426, %v1424, %v834
      %v1458 = vsel %vm1426, %v1425, %v836
      %vm1459 = vcmask 130048
      %v1460 = vsel %vm1459, %v1427, %v876
      %v1461 = vsel %vm1459, %v1428, %v878
      %v1462 = vsel %vm1459, %v1429, %v880
      %v1463 = vsel %vm1459, %v1430, %v882
      %v1464 = vsel %vm1459, %v1431, %v884
      %v1465 = vsel %vm1459, %v1432, %v886
      %v1466 = vsel %vm1459, %v1433, %v888
      %v1467 = vsel %vm1459, %v1434, %v890
      %v1468 = vsel %vm1459, %v1435, %v892
      %v1469 = vsel %vm1459, %v1436, %v894
      %v1470 = vsel %vm1459, %v1437, %v896
      %v1471 = vsel %vm1459, %v1438, %v898
      %v1472 = vsel %vm1459, %v1439, %v900
      %v1473 = vsel %vm1459, %v1440, %v902
      %v1474 = vsel %vm1459, %v1441, %v904
      %v1475 = vsel %vm1459, %v1442, %v906
      %v1476 = vsel %vm1459, %v1443, %v908
      %v1477 = vsel %vm1459, %v1444, %v910
      %v1478 = vsel %vm1459, %v1445, %v912
      %v1479 = vsel %vm1459, %v1446, %v914
      %v1480 = vsel %vm1459, %v1447, %v916
      %v1481 = vsel %vm1459, %v1448, %v918
      %v1482 = vsel %vm1459, %v1449, %v920
      %v1483 = vsel %vm1459, %v1450, %v922
      %v1484 = vsel %vm1459, %v1451, %v924
      %v1485 = vsel %vm1459, %v1452, %v926
      %v1486 = vsel %vm1459, %v1453, %v928
      %v1487 = vsel %vm1459, %v1454, %v930
      %v1488 = vsel %vm1459, %v1455, %v932
      %v1489 = vsel %vm1459, %v1456, %v934
      %v1490 = vsel %vm1459, %v1457, %v936
      %v1491 = vsel %vm1459, %v1458, %v938
      %vm1492 = vcmask 162816
      %v1493 = vsel %vm1492, %v1460, %v977
      %v1494 = vsel %vm1492, %v1461, %v979
      %v1495 = vsel %vm1492, %v1462, %v981
      %v1496 = vsel %vm1492, %v1463, %v983
      %v1497 = vsel %vm1492, %v1464, %v985
      %v1498 = vsel %vm1492, %v1465, %v987
      %v1499 = vsel %vm1492, %v1466, %v989
      %v1500 = vsel %vm1492, %v1467, %v991
      %v1501 = vsel %vm1492, %v1468, %v993
      %v1502 = vsel %vm1492, %v1469, %v995
      %v1503 = vsel %vm1492, %v1470, %v997
      %v1504 = vsel %vm1492, %v1471, %v999
      %v1505 = vsel %vm1492, %v1472, %v1001
      %v1506 = vsel %vm1492, %v1473, %v1003
      %v1507 = vsel %vm1492, %v1474, %v1005
      %v1508 = vsel %vm1492, %v1475, %v1007
      %v1509 = vsel %vm1492, %v1476, %v1009
      %v1510 = vsel %vm1492, %v1477, %v1011
      %v1511 = vsel %vm1492, %v1478, %v1013
      %v1512 = vsel %vm1492, %v1479, %v1015
      %v1513 = vsel %vm1492, %v1480, %v1017
      %v1514 = vsel %vm1492, %v1481, %v1019
      %v1515 = vsel %vm1492, %v1482, %v1021
      %v1516 = vsel %vm1492, %v1483, %v1023
      %v1517 = vsel %vm1492, %v1484, %v1025
      %v1518 = vsel %vm1492, %v1485, %v1027
      %v1519 = vsel %vm1492, %v1486, %v1029
      %v1520 = vsel %vm1492, %v1487, %v1031
      %v1521 = vsel %vm1492, %v1488, %v1033
      %v1522 = vsel %vm1492, %v1489, %v1035
      %v1523 = vsel %vm1492, %v1490, %v1037
      %v1524 = vsel %vm1492, %v1491, %v1039
      %vm1525 = vcmask 195584
      %v1526 = vsel %vm1525, %v1493, %v1073
      %v1527 = vsel %vm1525, %v1494, %v1075
      %v1528 = vsel %vm1525, %v1495, %v1077
      %v1529 = vsel %vm1525, %v1496, %v1079
      %v1530 = vsel %vm1525, %v1497, %v1081
      %v1531 = vsel %vm1525, %v1498, %v1083
      %v1532 = vsel %vm1525, %v1499, %v1085
      %v1533 = vsel %vm1525, %v1500, %v1087
      %v1534 = vsel %vm1525, %v1501, %v1089
      %v1535 = vsel %vm1525, %v1502, %v1091
      %v1536 = vsel %vm1525, %v1503, %v1093
      %v1537 = vsel %vm1525, %v1504, %v1095
      %v1538 = vsel %vm1525, %v1505, %v1097
      %v1539 = vsel %vm1525, %v1506, %v1099
      %v1540 = vsel %vm1525, %v1507, %v1101
      %v1541 = vsel %vm1525, %v1508, %v1103
      %v1542 = vsel %vm1525, %v1509, %v1105
      %v1543 = vsel %vm1525, %v1510, %v1107
      %v1544 = vsel %vm1525, %v1511, %v1109
      %v1545 = vsel %vm1525, %v1512, %v1111
      %v1546 = vsel %vm1525, %v1513, %v1113
      %v1547 = vsel %vm1525, %v1514, %v1115
      %v1548 = vsel %vm1525, %v1515, %v1117
      %v1549 = vsel %vm1525, %v1516, %v1119
      %v1550 = vsel %vm1525, %v1517, %v1121
      %v1551 = vsel %vm1525, %v1518, %v1123
      %v1552 = vsel %vm1525, %v1519, %v1125
      %v1553 = vsel %vm1525, %v1520, %v1127
      %v1554 = vsel %vm1525, %v1521, %v1129
      %v1555 = vsel %vm1525, %v1522, %v1131
      %v1556 = vsel %vm1525, %v1523, %v1133
      %v1557 = vsel %vm1525, %v1524, %v1135
      %vm1558 = vcmask 228352
      %v1559 = vsel %vm1558, %v1526, %v1169
      %v1560 = vsel %vm1558, %v1527, %v1171
      %v1561 = vsel %vm1558, %v1528, %v1173
      %v1562 = vsel %vm1558, %v1529, %v1175
      %v1563 = vsel %vm1558, %v1530, %v1177
      %v1564 = vsel %vm1558, %v1531, %v1179
      %v1565 = vsel %vm1558, %v1532, %v1181
      %v1566 = vsel %vm1558, %v1533, %v1183
      %v1567 = vsel %vm1558, %v1534, %v1185
      %v1568 = vsel %vm1558, %v1535, %v1187
      %v1569 = vsel %vm1558, %v1536, %v1189
      %v1570 = vsel %vm1558, %v1537, %v1191
      %v1571 = vsel %vm1558, %v1538, %v1193
      %v1572 = vsel %vm1558, %v1539, %v1195
      %v1573 = vsel %vm1558, %v1540, %v1197
      %v1574 = vsel %vm1558, %v1541, %v1199
      %v1575 = vsel %vm1558, %v1542, %v1201
      %v1576 = vsel %vm1558, %v1543, %v1203
      %v1577 = vsel %vm1558, %v1544, %v1205
      %v1578 = vsel %vm1558, %v1545, %v1207
      %v1579 = vsel %vm1558, %v1546, %v1209
      %v1580 = vsel %vm1558, %v1547, %v1211
      %v1581 = vsel %vm1558, %v1548, %v1213
      %v1582 = vsel %vm1558, %v1549, %v1215
      %v1583 = vsel %vm1558, %v1550, %v1217
      %v1584 = vsel %vm1558, %v1551, %v1219
      %v1585 = vsel %vm1558, %v1552, %v1221
      %v1586 = vsel %vm1558, %v1553, %v1223
      %v1587 = vsel %vm1558, %v1554, %v1225
      %v1588 = vsel %vm1558, %v1555, %v1227
      %v1589 = vsel %vm1558, %v1556, %v1229
      %v1590 = vsel %vm1558, %v1557, %v1231
      %vm1591 = vcmask 261120
      %v1592 = vsel %vm1591, %v1559, %v1265
      %v1593 = vsel %vm1591, %v1560, %v1267
      %v1594 = vsel %vm1591, %v1561, %v1269
      %v1595 = vsel %vm1591, %v1562, %v1271
      %v1596 = vsel %vm1591, %v1563, %v1273
      %v1597 = vsel %vm1591, %v1564, %v1275
      %v1598 = vsel %vm1591, %v1565, %v1277
      %v1599 = vsel %vm1591, %v1566, %v1279
      %v1600 = vsel %vm1591, %v1567, %v1281
      %v1601 = vsel %vm1591, %v1568, %v1283
      %v1602 = vsel %vm1591, %v1569, %v1285
      %v1603 = vsel %vm1591, %v1570, %v1287
      %v1604 = vsel %vm1591, %v1571, %v1289
      %v1605 = vsel %vm1591, %v1572, %v1291
      %v1606 = vsel %vm1591, %v1573, %v1293
      %v1607 = vsel %vm1591, %v1574, %v1295
      %v1608 = vsel %vm1591, %v1575, %v1297
      %v1609 = vsel %vm1591, %v1576, %v1299
      %v1610 = vsel %vm1591, %v1577, %v1301
      %v1611 = vsel %vm1591, %v1578, %v1303
      %v1612 = vsel %vm1591, %v1579, %v1305
      %v1613 = vsel %vm1591, %v1580, %v1307
      %v1614 = vsel %vm1591, %v1581, %v1309
      %v1615 = vsel %vm1591, %v1582, %v1311
      %v1616 = vsel %vm1591, %v1583, %v1313
      %v1617 = vsel %vm1591, %v1584, %v1315
      %v1618 = vsel %vm1591, %v1585, %v1317
      %v1619 = vsel %vm1591, %v1586, %v1319
      %v1620 = vsel %vm1591, %v1587, %v1321
      %v1621 = vsel %vm1591, %v1588, %v1323
      %v1622 = vsel %vm1591, %v1589, %v1325
      %v1623 = vsel %vm1591, %v1590, %v1327
      %vm1624 = vcmask 293888
      %v1626 = vsel %vm1624, %v1592, 0
      %v1629 = vsel %vm1624, %v1593, 0
      %v1632 = vsel %vm1624, %v1594, 0
      %v1635 = vsel %vm1624, %v1595, 0
      %v1638 = vsel %vm1624, %v1596, 0
      %v1641 = vsel %vm1624, %v1597, 0
      %v1644 = vsel %vm1624, %v1598, 0
      %v1647 = vsel %vm1624, %v1599, 0
      %v1650 = vsel %vm1624, %v1600, 0
      %v1653 = vsel %vm1624, %v1601, 0
      %v1656 = vsel %vm1624, %v1602, 0
      %v1659 = vsel %vm1624, %v1603, 0
      %v1662 = vsel %vm1624, %v1604, 0
      %v1665 = vsel %vm1624, %v1605, 0
      %v1668 = vsel %vm1624, %v1606, 0
      %v1671 = vsel %vm1624, %v1607, 0
      %v1674 = vsel %vm1624, %v1608, 0
      %v1677 = vsel %vm1624, %v1609, 0
      %v1680 = vsel %vm1624, %v1610, 0
      %v1683 = vsel %vm1624, %v1611, 0
      %v1686 = vsel %vm1624, %v1612, 0
      %v1689 = vsel %vm1624, %v1613, 0
      %v1692 = vsel %vm1624, %v1614, 0
      %v1695 = vsel %vm1624, %v1615, 0
      %v1698 = vsel %vm1624, %v1616, 0
      %v1701 = vsel %vm1624, %v1617, 0
      %v1704 = vsel %vm1624, %v1618, 0
      %v1707 = vsel %vm1624, %v1619, 0
      %v1710 = vsel %vm1624, %v1620, 0
      %v1713 = vsel %vm1624, %v1621, 0
      %v1716 = vsel %vm1624, %v1622, 0
      %v1719 = vsel %vm1624, %v1623, 0
      %vm1721 = vcmask 1043456
      %v1723 = vsel %vm1721, %v218, 0
      %1725 = vmatprep.subr.mxu0 0.0
      %1726 = vmatpush1.msra.mxu0 0.0
      %1727 = vmatprep.subr.mxu0 0.0
      %1728 = vmatpush1.msra.mxu0 0.0
      %1729 = vmatprep.subr.mxu0 0.0
      %1730 = vmatpush1.msra.mxu0 0.0
      %1731 = vmatprep.subr.mxu0 0.0
      %1732 = vmatpush1.msra.mxu0 0.0
      %1733 = vmatprep.subr.mxu0 0.0
      %1734 = vmatpush1.msra.mxu0 0.0
      %1735 = vmatprep.subr.mxu0 0.0
      %1736 = vmatpush1.msra.mxu0 0.0
      %1737 = vmatprep.subr.mxu0 0.0
      %1738 = vmatpush1.msra.mxu0 0.0
      %1739 = vmatprep.subr.mxu0 0.0
      %1740 = vmatpush1.msra.mxu0 0.0
      %1741 = vmatprep.subr.mxu0 0.0
      %1742 = vmatpush1.msra.mxu0 0.0
      %1743 = vmatprep.subr.mxu0 0.0
      %1744 = vmatpush1.msra.mxu0 0.0
      %1745 = vmatprep.subr.mxu0 0.0
      %1746 = vmatpush1.msra.mxu0 0.0
      %1747 = vmatprep.subr.mxu0 0.0
      %1748 = vmatpush1.msra.mxu0 %v1723
      %1749 = vmatprep.subr.mxu0 0.0
      %1750 = vmatpush1.msra.mxu0 %v217
      %1751 = vmatprep.subr.mxu0 0.0
      %1752 = vmatpush1.msra.mxu0 %v216
      %1753 = vmatprep.subr.mxu0 0.0
      %1754 = vmatpush1.msra.mxu0 %v215
      %1755 = vmatprep.subr.mxu0 0.0
      %1756 = vmatpush1.msra.mxu0 %v214
      %1757 = vmatprep.subr.mxu0 0.0
      %1758 = vmatpush2.msra.mxu0 0.0
      %1759 = vmatprep.subr.mxu0 0.0
      %1760 = vmatpush2.msra.mxu0 0.0
      %1761 = vmatprep.subr.mxu0 0.0
      %1762 = vmatpush2.msra.mxu0 0.0
      %1763 = vmatprep.subr.mxu0 0.0
      %1764 = vmatpush2.msra.mxu0 0.0
      %1765 = vmatprep.subr.mxu0 0.0
      %1766 = vmatpush2.msra.mxu0 0.0
      %1767 = vmatprep.subr.mxu0 0.0
      %1768 = vmatpush2.msra.mxu0 0.0
      %1769 = vmatprep.subr.mxu0 0.0
      %1770 = vmatpush2.msra.mxu0 0.0
      %1771 = vmatprep.subr.mxu0 0.0
      %1772 = vmatpush2.msra.mxu0 0.0
      %1773 = vmatprep.subr.mxu0 0.0
      %1774 = vmatpush2.msra.mxu0 0.0
      %1775 = vmatprep.subr.mxu0 0.0
      %1776 = vmatpush2.msra.mxu0 0.0
      %1777 = vmatprep.subr.mxu0 0.0
      %1778 = vmatpush2.msra.mxu0 0.0
      %1779 = vmatprep.subr.mxu0 0.0
      %1780 = vmatpush2.msra.mxu0 0.0
      %1781 = vmatprep.subr.mxu0 0.0
      %1782 = vmatpush2.msra.mxu0 0.0
      %1783 = vmatprep.subr.mxu0 0.0
      %1784 = vmatpush2.msra.mxu0 0.0
      %1785 = vmatprep.subr.mxu0 0.0
      %1786 = vmatpush2.msra.mxu0 0.0
      %1787 = vmatprep.subr.mxu0 0.0
      %1788 = vmatpush2.msra.mxu0 0.0
      %1789 = vmatprep.mubr.f32.mxu0 0.0
      %1790 = vmatmul.mubr.f32.gmra.mxu0 %v1626
      %v1791 = vpop.f32.mrf.mxu0
      %v1792 = vadd.f32 0.0, %v1791
      %v1793 = vpop.f32.mrf.mxu0
      %1794 = vmatprep.mubr.f32.mxu0 0.0
      %1795 = vmatmul.mubr.f32.gmra.mxu0 %v1629
      %v1796 = vpop.f32.mrf.mxu0
      %v1797 = vadd.f32 0.0, %v1796
      %v1798 = vpop.f32.mrf.mxu0
      %1799 = vmatprep.mubr.f32.mxu0 0.0
      %1800 = vmatmul.mubr.f32.gmra.mxu0 %v1632
      %v1801 = vpop.f32.mrf.mxu0
      %v1802 = vadd.f32 0.0, %v1801
      %v1803 = vpop.f32.mrf.mxu0
      %1804 = vmatprep.mubr.f32.mxu0 0.0
      %1805 = vmatmul.mubr.f32.gmra.mxu0 %v1635
      %v1806 = vpop.f32.mrf.mxu0
      %v1807 = vadd.f32 0.0, %v1806
      %v1808 = vpop.f32.mrf.mxu0
      %1809 = vmatprep.mubr.f32.mxu0 0.0
      %1810 = vmatmul.mubr.f32.gmra.mxu0 %v1638
      %v1811 = vpop.f32.mrf.mxu0
      %v1812 = vadd.f32 0.0, %v1811
      %v1813 = vpop.f32.mrf.mxu0
      %1814 = vmatprep.mubr.f32.mxu0 0.0
      %1815 = vmatmul.mubr.f32.gmra.mxu0 %v1641
      %v1816 = vpop.f32.mrf.mxu0
      %v1817 = vadd.f32 0.0, %v1816
      %v1818 = vpop.f32.mrf.mxu0
      %1819 = vmatprep.mubr.f32.mxu0 0.0
      %1820 = vmatmul.mubr.f32.gmra.mxu0 %v1644
      %v1821 = vpop.f32.mrf.mxu0
      %v1822 = vadd.f32 0.0, %v1821
      %v1823 = vpop.f32.mrf.mxu0
      %1824 = vmatprep.mubr.f32.mxu0 0.0
      %1825 = vmatmul.mubr.f32.gmra.mxu0 %v1647
      %v1826 = vpop.f32.mrf.mxu0
      %v1827 = vadd.f32 0.0, %v1826
      %v1828 = vpop.f32.mrf.mxu0
      %1829 = vmatprep.mubr.f32.mxu0 0.0
      %1830 = vmatmul.mubr.f32.gmra.mxu0 %v1650
      %v1831 = vpop.f32.mrf.mxu0
      %v1832 = vadd.f32 0.0, %v1831
      %v1833 = vpop.f32.mrf.mxu0
      %1834 = vmatprep.mubr.f32.mxu0 0.0
      %1835 = vmatmul.mubr.f32.gmra.mxu0 %v1653
      %v1836 = vpop.f32.mrf.mxu0
      %v1837 = vadd.f32 0.0, %v1836
      %v1838 = vpop.f32.mrf.mxu0
      %1839 = vmatprep.mubr.f32.mxu0 0.0
      %1840 = vmatmul.mubr.f32.gmra.mxu0 %v1656
      %v1841 = vpop.f32.mrf.mxu0
      %v1842 = vadd.f32 0.0, %v1841
      %v1843 = vpop.f32.mrf.mxu0
      %1844 = vmatprep.mubr.f32.mxu0 0.0
      %1845 = vmatmul.mubr.f32.gmra.mxu0 %v1659
      %v1846 = vpop.f32.mrf.mxu0
      %v1847 = vadd.f32 0.0, %v1846
      %v1848 = vpop.f32.mrf.mxu0
      %1849 = vmatprep.mubr.f32.mxu0 0.0
      %1850 = vmatmul.mubr.f32.gmra.mxu0 %v1662
      %v1851 = vpop.f32.mrf.mxu0
      %v1852 = vadd.f32 0.0, %v1851
      %v1853 = vpop.f32.mrf.mxu0
      %1854 = vmatprep.mubr.f32.mxu0 0.0
      %1855 = vmatmul.mubr.f32.gmra.mxu0 %v1665
      %v1856 = vpop.f32.mrf.mxu0
      %v1857 = vadd.f32 0.0, %v1856
      %v1858 = vpop.f32.mrf.mxu0
      %1859 = vmatprep.mubr.f32.mxu0 0.0
      %1860 = vmatmul.mubr.f32.gmra.mxu0 %v1668
      %v1861 = vpop.f32.mrf.mxu0
      %v1862 = vadd.f32 0.0, %v1861
      %v1863 = vpop.f32.mrf.mxu0
      %1864 = vmatprep.mubr.f32.mxu0 0.0
      %1865 = vmatmul.mubr.f32.gmra.mxu0 %v1671
      %v1866 = vpop.f32.mrf.mxu0
      %v1867 = vadd.f32 0.0, %v1866
      %v1868 = vpop.f32.mrf.mxu0
      %1869 = vmatprep.mubr.f32.mxu0 0.0
      %1870 = vmatmul.mubr.f32.gmra.mxu0 %v1674
      %v1871 = vpop.f32.mrf.mxu0
      %v1872 = vadd.f32 0.0, %v1871
      %v1873 = vpop.f32.mrf.mxu0
      %1874 = vmatprep.mubr.f32.mxu0 0.0
      %1875 = vmatmul.mubr.f32.gmra.mxu0 %v1677
      %v1876 = vpop.f32.mrf.mxu0
      %v1877 = vadd.f32 0.0, %v1876
      %v1878 = vpop.f32.mrf.mxu0
      %1879 = vmatprep.mubr.f32.mxu0 0.0
      %1880 = vmatmul.mubr.f32.gmra.mxu0 %v1680
      %v1881 = vpop.f32.mrf.mxu0
      %v1882 = vadd.f32 0.0, %v1881
      %v1883 = vpop.f32.mrf.mxu0
      %1884 = vmatprep.mubr.f32.mxu0 0.0
      %1885 = vmatmul.mubr.f32.gmra.mxu0 %v1683
      %v1886 = vpop.f32.mrf.mxu0
      %v1887 = vadd.f32 0.0, %v1886
      %v1888 = vpop.f32.mrf.mxu0
      %1889 = vmatprep.mubr.f32.mxu0 0.0
      %1890 = vmatmul.mubr.f32.gmra.mxu0 %v1686
      %v1891 = vpop.f32.mrf.mxu0
      %v1892 = vadd.f32 0.0, %v1891
      %v1893 = vpop.f32.mrf.mxu0
      %1894 = vmatprep.mubr.f32.mxu0 0.0
      %1895 = vmatmul.mubr.f32.gmra.mxu0 %v1689
      %v1896 = vpop.f32.mrf.mxu0
      %v1897 = vadd.f32 0.0, %v1896
      %v1898 = vpop.f32.mrf.mxu0
      %1899 = vmatprep.mubr.f32.mxu0 0.0
      %1900 = vmatmul.mubr.f32.gmra.mxu0 %v1692
      %v1901 = vpop.f32.mrf.mxu0
      %v1902 = vadd.f32 0.0, %v1901
      %v1903 = vpop.f32.mrf.mxu0
      %1904 = vmatprep.mubr.f32.mxu0 0.0
      %1905 = vmatmul.mubr.f32.gmra.mxu0 %v1695
      %v1906 = vpop.f32.mrf.mxu0
      %v1907 = vadd.f32 0.0, %v1906
      %v1908 = vpop.f32.mrf.mxu0
      %1909 = vmatprep.mubr.f32.mxu0 0.0
      %1910 = vmatmul.mubr.f32.gmra.mxu0 %v1698
      %v1911 = vpop.f32.mrf.mxu0
      %v1912 = vadd.f32 0.0, %v1911
      %v1913 = vpop.f32.mrf.mxu0
      %1914 = vmatprep.mubr.f32.mxu0 0.0
      %1915 = vmatmul.mubr.f32.gmra.mxu0 %v1701
      %v1916 = vpop.f32.mrf.mxu0
      %v1917 = vadd.f32 0.0, %v1916
      %v1918 = vpop.f32.mrf.mxu0
      %1919 = vmatprep.mubr.f32.mxu0 0.0
      %1920 = vmatmul.mubr.f32.gmra.mxu0 %v1704
      %v1921 = vpop.f32.mrf.mxu0
      %v1922 = vadd.f32 0.0, %v1921
      %v1923 = vpop.f32.mrf.mxu0
      %1924 = vmatprep.mubr.f32.mxu0 0.0
      %1925 = vmatmul.mubr.f32.gmra.mxu0 %v1707
      %v1926 = vpop.f32.mrf.mxu0
      %v1927 = vadd.f32 0.0, %v1926
      %v1928 = vpop.f32.mrf.mxu0
      %1929 = vmatprep.mubr.f32.mxu0 0.0
      %1930 = vmatmul.mubr.f32.gmra.mxu0 %v1710
      %v1931 = vpop.f32.mrf.mxu0
      %v1932 = vadd.f32 0.0, %v1931
      %v1933 = vpop.f32.mrf.mxu0
      %1934 = vmatprep.mubr.f32.mxu0 0.0
      %1935 = vmatmul.mubr.f32.gmra.mxu0 %v1713
      %v1936 = vpop.f32.mrf.mxu0
      %v1937 = vadd.f32 0.0, %v1936
      %v1938 = vpop.f32.mrf.mxu0
      %1939 = vmatprep.mubr.f32.mxu0 0.0
      %1940 = vmatmul.mubr.f32.gmra.mxu0 %v1716
      %v1941 = vpop.f32.mrf.mxu0
      %v1942 = vadd.f32 0.0, %v1941
      %v1943 = vpop.f32.mrf.mxu0
      %1944 = vmatprep.mubr.f32.mxu0 0.0
      %1945 = vmatmul.mubr.f32.gmra.mxu0 %v1719
      %v1946 = vpop.f32.mrf.mxu0
      %v1947 = vadd.f32 0.0, %v1946
      %v1948 = vpop.f32.mrf.mxu0
      %1949 = vdwg.mxu0
      %1950 = vst.msk [vmem:[%s177] sm:$0xff] %vm1360, %v1792
      %1951 = vst.msk [vmem:[%s177 + $0x8] sm:$0xff] %vm1360, %v1797
      %1952 = vst.msk [vmem:[%s177 + $0x10] sm:$0xff] %vm1360, %v1802
      %1953 = vst.msk [vmem:[%s177 + $0x18] sm:$0xff] %vm1360, %v1807
      %1954 = vst.msk [vmem:[%s177 + $0x20] sm:$0xff] %vm1360, %v1812
      %1955 = vst.msk [vmem:[%s177 + $0x28] sm:$0xff] %vm1360, %v1817
      %1956 = vst.msk [vmem:[%s177 + $0x30] sm:$0xff] %vm1360, %v1822
      %1957 = vst.msk [vmem:[%s177 + $0x38] sm:$0xff] %vm1360, %v1827
      %1958 = vst.msk [vmem:[%s177 + $0x40] sm:$0xff] %vm1360, %v1832
      %1959 = vst.msk [vmem:[%s177 + $0x48] sm:$0xff] %vm1360, %v1837
      %1960 = vst.msk [vmem:[%s177 + $0x50] sm:$0xff] %vm1360, %v1842
      %1961 = vst.msk [vmem:[%s177 + $0x58] sm:$0xff] %vm1360, %v1847
      %1962 = vst.msk [vmem:[%s177 + $0x60] sm:$0xff] %vm1360, %v1852
      %1963 = vst.msk [vmem:[%s177 + $0x68] sm:$0xff] %vm1360, %v1857
      %1964 = vst.msk [vmem:[%s177 + $0x70] sm:$0xff] %vm1360, %v1862
      %1965 = vst.msk [vmem:[%s177 + $0x78] sm:$0xff] %vm1360, %v1867
      %1966 = vst.msk [vmem:[%s177 + $0x80] sm:$0xff] %vm1360, %v1872
      %1967 = vst.msk [vmem:[%s177 + $0x88] sm:$0xff] %vm1360, %v1877
      %1968 = vst.msk [vmem:[%s177 + $0x90] sm:$0xff] %vm1360, %v1882
      %1969 = vst.msk [vmem:[%s177 + $0x98] sm:$0xff] %vm1360, %v1887
      %1970 = vst.msk [vmem:[%s177 + $0xa0] sm:$0xff] %vm1360, %v1892
      %1971 = vst.msk [vmem:[%s177 + $0xa8] sm:$0xff] %vm1360, %v1897
      %1972 = vst.msk [vmem:[%s177 + $0xb0] sm:$0xff] %vm1360, %v1902
      %1973 = vst.msk [vmem:[%s177 + $0xb8] sm:$0xff] %vm1360, %v1907
      %1974 = vst.msk [vmem:[%s177 + $0xc0] sm:$0xff] %vm1360, %v1912
      %1975 = vst.msk [vmem:[%s177 + $0xc8] sm:$0xff] %vm1360, %v1917
      %1976 = vst.msk [vmem:[%s177 + $0xd0] sm:$0xff] %vm1360, %v1922
      %1977 = vst.msk [vmem:[%s177 + $0xd8] sm:$0xff] %vm1360, %v1927
      %1978 = vst.msk [vmem:[%s177 + $0xe0] sm:$0xff] %vm1360, %v1932
      %1979 = vst.msk [vmem:[%s177 + $0xe8] sm:$0xff] %vm1360, %v1937
      %1980 = vst.msk [vmem:[%s177 + $0xf0] sm:$0xff] %vm1360, %v1942
      %1981 = vst.msk [vmem:[%s177 + $0xf8] sm:$0xff] %vm1360, %v1947
      %v1982 = vsel %vm1360, %v1792, 0.0
      %v1983 = vsel %vm1360, %v1797, 0.0
      %v1984 = vadd.f32 %v1982, %v1983
      %v1985 = vsel %vm1360, %v1802, 0.0
      %v1986 = vadd.f32 %v1984, %v1985
      %v1987 = vsel %vm1360, %v1807, 0.0
      %v1988 = vadd.f32 %v1986, %v1987
      %v1989 = vsel %vm1360, %v1812, 0.0
      %v1990 = vadd.f32 %v1988, %v1989
      %v1991 = vsel %vm1360, %v1817, 0.0
      %v1992 = vadd.f32 %v1990, %v1991
      %v1993 = vsel %vm1360, %v1822, 0.0
      %v1994 = vadd.f32 %v1992, %v1993
      %v1995 = vsel %vm1360, %v1827, 0.0
      %v1996 = vadd.f32 %v1994, %v1995
      %v1997 = vsel %vm1360, %v1832, 0.0
      %v1998 = vadd.f32 %v1996, %v1997
      %v1999 = vsel %vm1360, %v1837, 0.0
      %v2000 = vadd.f32 %v1998, %v1999
      %v2001 = vsel %vm1360, %v1842, 0.0
      %v2002 = vadd.f32 %v2000, %v2001
      %v2003 = vsel %vm1360, %v1847, 0.0
      %v2004 = vadd.f32 %v2002, %v2003
      %v2005 = vsel %vm1360, %v1852, 0.0
      %v2006 = vadd.f32 %v2004, %v2005
      %v2007 = vsel %vm1360, %v1857, 0.0
      %v2008 = vadd.f32 %v2006, %v2007
      %v2009 = vsel %vm1360, %v1862, 0.0
      %v2010 = vadd.f32 %v2008, %v2009
      %v2011 = vsel %vm1360, %v1867, 0.0
      %v2012 = vadd.f32 %v2010, %v2011
      %v2013 = vsel %vm1360, %v1872, 0.0
      %v2014 = vadd.f32 %v2012, %v2013
      %v2015 = vsel %vm1360, %v1877, 0.0
      %v2016 = vadd.f32 %v2014, %v2015
      %v2017 = vsel %vm1360, %v1882, 0.0
      %v2018 = vadd.f32 %v2016, %v2017
      %v2019 = vsel %vm1360, %v1887, 0.0
      %v2020 = vadd.f32 %v2018, %v2019
      %v2021 = vsel %vm1360, %v1892, 0.0
      %v2022 = vadd.f32 %v2020, %v2021
      %v2023 = vsel %vm1360, %v1897, 0.0
      %v2024 = vadd.f32 %v2022, %v2023
      %v2025 = vsel %vm1360, %v1902, 0.0
      %v2026 = vadd.f32 %v2024, %v2025
      %v2027 = vsel %vm1360, %v1907, 0.0
      %v2028 = vadd.f32 %v2026, %v2027
      %v2029 = vsel %vm1360, %v1912, 0.0
      %v2030 = vadd.f32 %v2028, %v2029
      %v2031 = vsel %vm1360, %v1917, 0.0
      %v2032 = vadd.f32 %v2030, %v2031
      %v2033 = vsel %vm1360, %v1922, 0.0
      %v2034 = vadd.f32 %v2032, %v2033
      %v2035 = vsel %vm1360, %v1927, 0.0
      %v2036 = vadd.f32 %v2034, %v2035
      %v2037 = vsel %vm1360, %v1932, 0.0
      %v2038 = vadd.f32 %v2036, %v2037
      %v2039 = vsel %vm1360, %v1937, 0.0
      %v2040 = vadd.f32 %v2038, %v2039
      %v2041 = vsel %vm1360, %v1942, 0.0
      %v2042 = vadd.f32 %v2040, %v2041
      %v2043 = vsel %vm1360, %v1947, 0.0
      %v2044 = vadd.f32 %v2042, %v2043
      %v2045 = vrot.slane %v2044, 4
      %v2046 = vadd.f32 %v2044, %v2045
      %v2047 = vrot.slane %v2046, 2
      %v2048 = vadd.f32 %v2046, %v2047
      %v2049 = vrot.slane %v2048, 1
      %v2050 = vadd.f32 %v2048, %v2049
      %v2051 = vmul.f32 %v1792, %v1792
      %v2052 = vmul.f32 %v1797, %v1797
      %v2053 = vmul.f32 %v1802, %v1802
      %v2054 = vmul.f32 %v1807, %v1807
      %v2055 = vmul.f32 %v1812, %v1812
      %v2056 = vmul.f32 %v1817, %v1817
      %v2057 = vmul.f32 %v1822, %v1822
      %v2058 = vmul.f32 %v1827, %v1827
      %v2059 = vmul.f32 %v1832, %v1832
      %v2060 = vmul.f32 %v1837, %v1837
      %v2061 = vmul.f32 %v1842, %v1842
      %v2062 = vmul.f32 %v1847, %v1847
      %v2063 = vmul.f32 %v1852, %v1852
      %v2064 = vmul.f32 %v1857, %v1857
      %v2065 = vmul.f32 %v1862, %v1862
      %v2066 = vmul.f32 %v1867, %v1867
      %v2067 = vmul.f32 %v1872, %v1872
      %v2068 = vmul.f32 %v1877, %v1877
      %v2069 = vmul.f32 %v1882, %v1882
      %v2070 = vmul.f32 %v1887, %v1887
      %v2071 = vmul.f32 %v1892, %v1892
      %v2072 = vmul.f32 %v1897, %v1897
      %v2073 = vmul.f32 %v1902, %v1902
      %v2074 = vmul.f32 %v1907, %v1907
      %v2075 = vmul.f32 %v1912, %v1912
      %v2076 = vmul.f32 %v1917, %v1917
      %v2077 = vmul.f32 %v1922, %v1922
      %v2078 = vmul.f32 %v1927, %v1927
      %v2079 = vmul.f32 %v1932, %v1932
      %v2080 = vmul.f32 %v1937, %v1937
      %v2081 = vmul.f32 %v1942, %v1942
      %v2082 = vmul.f32 %v1947, %v1947
      %v2083 = vsel %vm1360, %v2051, 0.0
      %v2084 = vsel %vm1360, %v2052, 0.0
      %v2085 = vadd.f32 %v2083, %v2084
      %v2086 = vsel %vm1360, %v2053, 0.0
      %v2087 = vadd.f32 %v2085, %v2086
      %v2088 = vsel %vm1360, %v2054, 0.0
      %v2089 = vadd.f32 %v2087, %v2088
      %v2090 = vsel %vm1360, %v2055, 0.0
      %v2091 = vadd.f32 %v2089, %v2090
      %v2092 = vsel %vm1360, %v2056, 0.0
      %v2093 = vadd.f32 %v2091, %v2092
      %v2094 = vsel %vm1360, %v2057, 0.0
      %v2095 = vadd.f32 %v2093, %v2094
      %v2096 = vsel %vm1360, %v2058, 0.0
      %v2097 = vadd.f32 %v2095, %v2096
      %v2098 = vsel %vm1360, %v2059, 0.0
      %v2099 = vadd.f32 %v2097, %v2098
      %v2100 = vsel %vm1360, %v2060, 0.0
      %v2101 = vadd.f32 %v2099, %v2100
      %v2102 = vsel %vm1360, %v2061, 0.0
      %v2103 = vadd.f32 %v2101, %v2102
      %v2104 = vsel %vm1360, %v2062, 0.0
      %v2105 = vadd.f32 %v2103, %v2104
      %v2106 = vsel %vm1360, %v2063, 0.0
      %v2107 = vadd.f32 %v2105, %v2106
      %v2108 = vsel %vm1360, %v2064, 0.0
      %v2109 = vadd.f32 %v2107, %v2108
      %v2110 = vsel %vm1360, %v2065, 0.0
      %v2111 = vadd.f32 %v2109, %v2110
      %v2112 = vsel %vm1360, %v2066, 0.0
      %v2113 = vadd.f32 %v2111, %v2112
      %v2114 = vsel %vm1360, %v2067, 0.0
      %v2115 = vadd.f32 %v2113, %v2114
      %v2116 = vsel %vm1360, %v2068, 0.0
      %v2117 = vadd.f32 %v2115, %v2116
      %v2118 = vsel %vm1360, %v2069, 0.0
      %v2119 = vadd.f32 %v2117, %v2118
      %v2120 = vsel %vm1360, %v2070, 0.0
      %v2121 = vadd.f32 %v2119, %v2120
      %v2122 = vsel %vm1360, %v2071, 0.0
      %v2123 = vadd.f32 %v2121, %v2122
      %v2124 = vsel %vm1360, %v2072, 0.0
      %v2125 = vadd.f32 %v2123, %v2124
      %v2126 = vsel %vm1360, %v2073, 0.0
      %v2127 = vadd.f32 %v2125, %v2126
      %v2128 = vsel %vm1360, %v2074, 0.0
      %v2129 = vadd.f32 %v2127, %v2128
      %v2130 = vsel %vm1360, %v2075, 0.0
      %v2131 = vadd.f32 %v2129, %v2130
      %v2132 = vsel %vm1360, %v2076, 0.0
      %v2133 = vadd.f32 %v2131, %v2132
      %v2134 = vsel %vm1360, %v2077, 0.0
      %v2135 = vadd.f32 %v2133, %v2134
      %v2136 = vsel %vm1360, %v2078, 0.0
      %v2137 = vadd.f32 %v2135, %v2136
      %v2138 = vsel %vm1360, %v2079, 0.0
      %v2139 = vadd.f32 %v2137, %v2138
      %v2140 = vsel %vm1360, %v2080, 0.0
      %v2141 = vadd.f32 %v2139, %v2140
      %v2142 = vsel %vm1360, %v2081, 0.0
      %v2143 = vadd.f32 %v2141, %v2142
      %v2144 = vsel %vm1360, %v2082, 0.0
      %v2145 = vadd.f32 %v2143, %v2144
      %v2146 = vrot.slane %v2145, 4
      %v2147 = vadd.f32 %v2145, %v2146
      %v2148 = vrot.slane %v2147, 2
      %v2149 = vadd.f32 %v2147, %v2148
      %v2150 = vrot.slane %v2149, 1
      %v2151 = vadd.f32 %v2149, %v2150
      %v2152 = vsel %vm252, %v2050, %v2151
      %vm2153 = vcmask 25600
      %2154 = vst.msk [vmem:[%s181] sm:$0x3] %vm2153, %v2152
      %p2155 = scmp.lt.s32.totalorder %s15, 1
      %s2156 = scalar_select %p2155, %s15, 1
      %s2157 = smul.addr %s2156, 32
      %s2158 = smul.addr %s2157, 8
      %s2159 = scalar_lea.vmem %s2, %s2158
      %p2160 = scmp.lt.s32.totalorder %s15, 1
      %s2161 = scalar_select %p2160, %s15, 1
      %s2162 = smul.addr %s2161, 2
      %s2163 = scalar_lea.vmem %s3, %s2162
      // Predicated region
      $region29: #{residual_forward.3} parent=27 // pred_check
        %p2164 = pneg %p80
      $region30: #{residual_forward.3} parent=27 // pred_check_branch
        %2166 = sbr.rel (%p2164) target = $region32
      $region31: #{residual_forward.3} parent=27 // pred_region
        _
      $region32: #{residual_forward.3} parent=27 // pred_fallthru
        _
      // Predicated region
      $region33: #{residual_forward.3} parent=27 // pred_check
        %p2167 = pneg %p106
      $region34: #{residual_forward.3} parent=27 // pred_check_branch
        %2169 = sbr.rel (%p2167) target = $region36
      $region35: #{residual_forward.3} parent=27 // pred_region
        _
      $region36: #{residual_forward.3} parent=27 // pred_fallthru
        _
    $region28: #{residual_forward.3} parent=5 // pred_fallthru
      _
    %p2170 = scmp.le.s32.totalorder 2, %s10
    // Predicated region
    $region37: #{residual_forward.3} parent=5 // pred_check
      %p2171 = pneg %p2170
    $region38: #{residual_forward.3} parent=5 // pred_check_branch
      %2173 = sbr.rel (%p2171) target = $region40
    $region39: #{residual_forward.3} parent=5 // pred_region
      %s2174 = ssub.s32 %s10, 2
      // Predicated region
      $region41: #{residual_forward.3} parent=39 // pred_check
        %p2175 = pneg %p86
      $region42: #{residual_forward.3} parent=39 // pred_check_branch
        %2177 = sbr.rel (%p2175) target = $region44
      $region43: #{residual_forward.3} parent=39 // pred_region
        %p2178 = scmp.lt.s32.totalorder %s16, 1
        %s2179 = scalar_select %p2178, %s16, 1
        %s2180 = smul.addr %s2179, 32
        %s2181 = smul.addr %s2180, 8
        %s2182 = scalar_lea.vmem %s2, %s2181
      $region44: #{residual_forward.3} parent=39 // pred_fallthru
        _
      // Predicated region
      $region45: #{residual_forward.3} parent=39 // pred_check
        %p2183 = pneg %p112
      $region46: #{residual_forward.3} parent=39 // pred_check_branch
        %2185 = sbr.rel (%p2183) target = $region48
      $region47: #{residual_forward.3} parent=39 // pred_region
        %p2186 = scmp.lt.s32.totalorder %s16, 1
        %s2187 = scalar_select %p2186, %s16, 1
        %s2188 = smul.addr %s2187, 2
        %s2189 = scalar_lea.vmem %s3, %s2188
      $region48: #{residual_forward.3} parent=39 // pred_fallthru
        _
    $region40: #{residual_forward.3} parent=5 // pred_fallthru
      _
  $region6: #{residual_forward.3} parent=0 // loop_footer
    %s14 = sadd.s32 1, %s10
  $region7: #{residual_forward.3} parent=0 // loop_footer_branch
    %9 = sbr.rel target = $region3
  $region8: #{residual_forward.3} parent=0 // loop_exit
    _

// kernel: residual_forward.4
$region0: #{residual_forward.4}
  #allocation0 [shape = 'u32[]', space=smem, size = 0x4, offset = 0x4, fixed_abs, tag = 'smem constant byte address 0x4 - core index']
  #allocation1 [shape = 'u32[144,128]{1,0:T(1,128)}', space=vmem, size = 0x12000, scoped, tag = 'internal scratch']
  %s0 = inlined_call_operand.vmem [shape: f32[2,16,16,4], index: 0, kind: input, shape index: {}]
  %s1 = inlined_call_operand.vmem [shape: f32[1,1,1,4], index: 1, kind: input, shape index: {}]
  %s2 = inlined_call_operand.vmem [shape: f32[1,1,1,4], index: 2, kind: input, shape index: {}]
  %s3 = inlined_call_operand.vmem [shape: f32[36,4], index: 3, kind: input, shape index: {}]
  %s4 = inlined_call_operand.vmem [shape: f32[2,16,16,4], index: 4, kind: output, shape index: {0}]
  %s5 = inlined_call_operand.vmem [shape: f32[2,2,4], index: 5, kind: output, shape index: {1}]
  %6 = xla_tuple %s4, %s5
  %s7 = sld [smem:[#allocation0]]
  $region57: #{residual_forward.4} parent=0
    _
  %s9 = ssub.s32 1, %s7
  %s10 = scalar_select 0, %s9, %s7
  loop: start=0, step=1, limit=4
  $region2: #{residual_forward.4} parent=0 // loop_pre_header
    _
  $region3: #{residual_forward.4} parent=0 // loop_header
    %s12 = sphi 0, %s16
    %p13 = scmp.ge.s32.totalorder %s12, 4
    %s22 = sphi 0, %s24
    %s25 = sphi 0, %s22
    %s26 = sphi 0, %s25
    %s42 = sphi 0, %s26
    %s46 = sphi 0, %s46
    %s48 = sphi 0, %s46
    %s49 = sphi 0, %s48
    %s63 = sphi 0, %s49
    %s67 = sphi 0, %s67
    %s69 = sphi 0, %s67
    %s70 = sphi 0, %s69
    %s84 = sphi 0, %s70
    %s88 = sphi 0, %s88
    %s90 = sphi 0, %s88
    %s91 = sphi 0, %s90
    %s105 = sphi 0, %s91
    %s111 = sphi 0, %s113
    %s114 = sphi 0, %s111
    %s115 = sphi 0, %s114
    %s131 = sphi 0, %s115
    %s137 = sphi 0, %s139
    %s140 = sphi 0, %s137
    %s141 = sphi 0, %s140
    %s157 = sphi 0, %s141
  $region4: #{residual_forward.4} parent=0 // loop_header_branch
    %15 = sbr.rel (%p13) target = $region8
  $region5: #{residual_forward.4} parent=0 // loop_body
    %s17 = ssub.s32 %s12, 1
    %s18 = ssub.s32 %s12, 2
    %s19 = sadd.s32 %s12, 1
    %s20 = ssub.s32 %s12, %s19
    %p21 = scmp.eq.s32.totalorder %s20, 0
    %s23 = sadd.s32 %s22, 1
    %s24 = scalar_select %p21, %s22, %s23
    %p27 = pneg %p21
    %p28 = scmp.eq.s32.totalorder %s12, 1
    %p29 = por %p27, %p28
    %p30 = scmp.ne.s32.totalorder %s22, %s25
    %p31 = scmp.eq.s32.totalorder %s12, 0
    %p32 = por %p30, %p31
    %p33 = scmp.ne.s32.totalorder %s22, %s25
    %p34 = scmp.eq.s32.totalorder %s17, 1
    %p35 = por %p33, %p34
    %p36 = scmp.ne.s32.totalorder %s25, %s26
    %p37 = scmp.eq.s32.totalorder %s17, 0
    %p38 = por %p36, %p37
    %p39 = scmp.ne.s32.totalorder %s25, %s26
    %p40 = scmp.eq.s32.totalorder %s18, 1
    %p41 = por %p39, %p40
    %p43 = scmp.ne.s32.totalorder %s26, %s42
    %p44 = scmp.eq.s32.totalorder %s18, 0
    %p45 = por %p43, %p44
    %s47 = sadd.s32 %s46, 1
    %p50 = scmp.eq.s32.totalorder %s12, 1
    %p51 = scmp.ne.s32.totalorder %s46, %s48
    %p52 = scmp.eq.s32.totalorder %s12, 0
    %p53 = por %p51, %p52
    %p54 = scmp.ne.s32.totalorder %s46, %s48
    %p55 = scmp.eq.s32.totalorder %s17, 1
    %p56 = por %p54, %p55
    %p57 = scmp.ne.s32.totalorder %s48, %s49
    %p58 = scmp.eq.s32.totalorder %s17, 0
    %p59 = por %p57, %p58
    %p60 = scmp.ne.s32.totalorder %s48, %s49
    %p61 = scmp.eq.s32.totalorder %s18, 1
    %p62 = por %p60, %p61
    %p64 = scmp.ne.s32.totalorder %s49, %s63
    %p65 = scmp.eq.s32.totalorder %s18, 0
    %p66 = por %p64, %p65
    %s68 = sadd.s32 %s67, 1
    %p71 = scmp.eq.s32.totalorder %s12, 1
    %p72 = scmp.ne.s32.totalorder %s67, %s69
    %p73 = scmp.eq.s32.totalorder %s12, 0
    %p74 = por %p72, %p73
    %p75 = scmp.ne.s32.totalorder %s67, %s69
    %p76 = scmp.eq.s32.totalorder %s17, 1
    %p77 = por %p75, %p76
    %p78 = scmp.ne.s32.totalorder %s69, %s70
    %p79 = scmp.eq.s32.totalorder %s17, 0
    %p80 = por %p78, %p79
    %p81 = scmp.ne.s32.totalorder %s69, %s70
    %p82 = scmp.eq.s32.totalorder %s18, 1
    %p83 = por %p81, %p82
    %p85 = scmp.ne.s32.totalorder %s70, %s84
    %p86 = scmp.eq.s32.totalorder %s18, 0
    %p87 = por %p85, %p86
    %s89 = sadd.s32 %s88, 1
    %p92 = scmp.eq.s32.totalorder %s12, 1
    %p93 = scmp.ne.s32.totalorder %s88, %s90
    %p94 = scmp.eq.s32.totalorder %s12, 0
    %p95 = por %p93, %p94
    %p96 = scmp.ne.s32.totalorder %s88, %s90
    %p97 = scmp.eq.s32.totalorder %s17, 1
    %p98 = por %p96, %p97
    %p99 = scmp.ne.s32.totalorder %s90, %s91
    %p100 = scmp.eq.s32.totalorder %s17, 0
    %p101 = por %p99, %p100
    %p102 = scmp.ne.s32.totalorder %s90, %s91
    %p103 = scmp.eq.s32.totalorder %s18, 1
    %p104 = por %p102, %p103
    %p106 = scmp.ne.s32.totalorder %s91, %s105
    %p107 = scmp.eq.s32.totalorder %s18, 0
    %p108 = por %p106, %p107
    %s109 = ssub.s32 %s12, %s19
    %p110 = scmp.eq.s32.totalorder %s109, 0
    %s112 = sadd.s32 %s111, 1
    %s113 = scalar_select %p110, %s111, %s112
    %p116 = pneg %p110
    %p117 = scmp.eq.s32.totalorder %s12, 1
    %p118 = por %p116, %p117
    %p119 = scmp.ne.s32.totalorder %s111, %s114
    %p120 = scmp.eq.s32.totalorder %s12, 0
    %p121 = por %p119, %p120
    %p122 = scmp.ne.s32.totalorder %s111, %s114
    %p123 = scmp.eq.s32.totalorder %s17, 1
    %p124 = por %p122, %p123
    %p125 = scmp.ne.s32.totalorder %s114, %s115
    %p126 = scmp.eq.s32.totalorder %s17, 0
    %p127 = por %p125, %p126
    %p128 = scmp.ne.s32.totalorder %s114, %s115
    %p129 = scmp.eq.s32.totalorder %s18, 1
    %p130 = por %p128, %p129
    %p132 = scmp.ne.s32.totalorder %s115, %s131
    %p133 = scmp.eq.s32.totalorder %s18, 0
    %p134 = por %p132, %p133
    %s135 = ssub.s32 %s12, %s19
    %p136 = scmp.eq.s32.totalorder %s135, 0
    %s138 = sadd.s32 %s137, 1
    %s139 = scalar_select %p136, %s137, %s138
    %p142 = pneg %p136
    %p143 = scmp.eq.s32.totalorder %s12, 1
    %p144 = por %p142, %p143
    %p145 = scmp.ne.s32.totalorder %s137, %s140
    %p146 = scmp.eq.s32.totalorder %s12, 0
    %p147 = por %p145, %p146
    %p148 = scmp.ne.s32.totalorder %s137, %s140
    %p149 = scmp.eq.s32.totalorder %s17, 1
    %p150 = por %p148, %p149
    %p151 = scmp.ne.s32.totalorder %s140, %s141
    %p152 = scmp.eq.s32.totalorder %s17, 0
    %p153 = por %p151, %p152
    %p154 = scmp.ne.s32.totalorder %s140, %s141
    %p155 = scmp.eq.s32.totalorder %s18, 1
    %p156 = por %p154, %p155
    %p158 = scmp.ne.s32.totalorder %s141, %s157
    %p159 = scmp.eq.s32.totalorder %s18, 0
    %p160 = por %p158, %p159
    %p161 = scmp.le.s32.totalorder 1, %s12
    %p162 = scmp.lt.s32.totalorder %s12, 3
    %p163 = pnand %p161, %p162
    %p164 = pneg %p163
    // Predicated region
    $region9: #{residual_forward.4} parent=5 // pred_check
      _
    $region10: #{residual_forward.4} parent=5 // pred_check_branch
      %166 = sbr.rel (%p163) target = $region12
    $region11: #{residual_forward.4} parent=5 // pred_region
      %s167 = ssub.s32 %s12, 1
      // Predicated region
      $region13: #{residual_forward.4} parent=11 // pred_check
        %p168 = pneg %p59
      $region14: #{residual_forward.4} parent=11 // pred_check_branch
        %170 = sbr.rel (%p168) target = $region16
      $region15: #{residual_forward.4} parent=11 // pred_region
        _
      $region16: #{residual_forward.4} parent=11 // pred_fallthru
        _
      // Predicated region
      $region17: #{residual_forward.4} parent=11 // pred_check
        %p171 = pneg %p80
      $region18: #{residual_forward.4} parent=11 // pred_check_branch
        %173 = sbr.rel (%p171) target = $region20
      $region19: #{residual_forward.4} parent=11 // pred_region
        _
      $region20: #{residual_forward.4} parent=11 // pred_fallthru
        _
      // Predicated region
      $region21: #{residual_forward.4} parent=11 // pred_check
        %p174 = pneg %p101
      $region22: #{residual_forward.4} parent=11 // pred_check_branch
        %176 = sbr.rel (%p174) target = $region24
      $region23: #{residual_forward.4} parent=11 // pred_region
        _
      $region24: #{residual_forward.4} parent=11 // pred_fallthru
        _
    $region12: #{residual_forward.4} parent=5 // pred_fallthru
      _
    %p177 = scmp.lt.s32.totalorder %s12, 2
    // Predicated region
    $region25: #{residual_forward.4} parent=5 // pred_check
      %p178 = pneg %p177
    $region26: #{residual_forward.4} parent=5 // pred_check_branch
      %180 = sbr.rel (%p178) target = $region28
    $region27: #{residual_forward.4} parent=5 // pred_region
      // Predicated region
      $region29: #{residual_forward.4} parent=27 // pred_check
        %p181 = pneg %p32
      $region30: #{residual_forward.4} parent=27 // pred_check_branch
        %183 = sbr.rel (%p181) target = $region32
      $region31: #{residual_forward.4} parent=27 // pred_region
        %p184 = scmp.lt.s32.totalorder %s12, 1
        %s185 = scalar_select %p184, %s12, 1
        %s186 = smul.addr %s185, 32
        %s187 = smul.addr %s186, 8
        %s188 = scalar_lea.vmem %s0, %s187
      $region32: #{residual_forward.4} parent=27 // pred_fallthru
        _
    $region28: #{residual_forward.4} parent=5 // pred_fallthru
      _
    %p189 = scmp.le.s32.totalorder 1, %s12
    %p190 = scmp.lt.s32.totalorder %s12, 3
    %p191 = pnand %p189, %p190
    %p192 = pneg %p191
    // Predicated region
    $region33: #{residual_forward.4} parent=5 // pred_check
      _
    $region34: #{residual_forward.4} parent=5 // pred_check_branch
      %194 = sbr.rel (%p191) target = $region36
    $region35: #{residual_forward.4} parent=5 // pred_region
      %s195 = ssub.s32 %s12, 1
      %p196 = scmp.lt.s32.totalorder %s17, 1
      %s197 = scalar_select %p196, %s17, 1
      %s198 = smul.addr %s197, 32
      %s199 = smul.addr %s198, 8
      %s200 = scalar_lea.vmem %s0, %s199
      %p201 = pneg %p38
      %p202 = pneg %p35
      %p203 = pneg %p59
      %p204 = pneg %p56
      %p205 = pneg %p80
      %p206 = pneg %p77
      %p207 = pneg %p101
      %p208 = pneg %p98
      %p209 = pneg %p127
      %p210 = pneg %p124
      %p211 = scmp.lt.s32.totalorder %s17, 1
      %s212 = scalar_select %p211, %s17, 1
      %s213 = smul.addr %s212, 32
      %s214 = smul.addr %s213, 8
      %s215 = scalar_lea.vmem %s4, %s214
      %p216 = pneg %p153
      %p217 = pneg %p150
      %p218 = scmp.lt.s32.totalorder %s17, 1
      %s219 = scalar_select %p218, %s17, 1
      %s220 = smul.addr %s219, 2
      %s221 = scalar_lea.vmem %s5, %s220
      %p222 = scmp.lt.s32.totalorder %s17, 1
      %s223 = scalar_select %p222, %s17, 1
      %s224 = smul.addr %s223, 32
      %s225 = smul.addr %s224, 8
      %s226 = scalar_lea.vmem %s0, %s225
      %p227 = scmp.lt.s32.totalorder %s17, 1
      %s228 = scalar_select %p227, %s17, 1
      %s229 = smul.addr %s228, 32
      %s230 = smul.addr %s229, 8
      %s231 = scalar_lea.vmem %s4, %s230
      %p232 = scmp.lt.s32.totalorder %s17, 1
      %s233 = scalar_select %p232, %s17, 1
      %s234 = smul.addr %s233, 2
      %s235 = scalar_lea.vmem %s5, %s234
      %v236 = vld [vmem:[%s226] sm:$0xff]
      %v237 = vld [vmem:[%s226 + $0x8] sm:$0xff]
      %v238 = vld [vmem:[%s226 + $0x10] sm:$0xff]
      %v239 = vld [vmem:[%s226 + $0x18] sm:$0xff]
      %v240 = vld [vmem:[%s226 + $0x20] sm:$0xff]
      %v241 = vld [vmem:[%s226 + $0x28] sm:$0xff]
      %v242 = vld [vmem:[%s226 + $0x30] sm:$0xff]
      %v243 = vld [vmem:[%s226 + $0x38] sm:$0xff]
      %v244 = vld [vmem:[%s226 + $0x40] sm:$0xff]
      %v245 = vld [vmem:[%s226 + $0x48] sm:$0xff]
      %v246 = vld [vmem:[%s226 + $0x50] sm:$0xff]
      %v247 = vld [vmem:[%s226 + $0x58] sm:$0xff]
      %v248 = vld [vmem:[%s226 + $0x60] sm:$0xff]
      %v249 = vld [vmem:[%s226 + $0x68] sm:$0xff]
      %v250 = vld [vmem:[%s226 + $0x70] sm:$0xff]
      %v251 = vld [vmem:[%s226 + $0x78] sm:$0xff]
      %v252 = vld [vmem:[%s226 + $0x80] sm:$0xff]
      %v253 = vld [vmem:[%s226 + $0x88] sm:$0xff]
      %v254 = vld [vmem:[%s226 + $0x90] sm:$0xff]
      %v255 = vld [vmem:[%s226 + $0x98] sm:$0xff]
      %v256 = vld [vmem:[%s226 + $0xa0] sm:$0xff]
      %v257 = vld [vmem:[%s226 + $0xa8] sm:$0xff]
      %v258 = vld [vmem:[%s226 + $0xb0] sm:$0xff]
      %v259 = vld [vmem:[%s226 + $0xb8] sm:$0xff]
      %v260 = vld [vmem:[%s226 + $0xc0] sm:$0xff]
      %v261 = vld [vmem:[%s226 + $0xc8] sm:$0xff]
      %v262 = vld [vmem:[%s226 + $0xd0] sm:$0xff]
      %v263 = vld [vmem:[%s226 + $0xd8] sm:$0xff]
      %v264 = vld [vmem:[%s226 + $0xe0] sm:$0xff]
      %v265 = vld [vmem:[%s226 + $0xe8] sm:$0xff]
      %v266 = vld [vmem:[%s226 + $0xf0] sm:$0xff]
      %v267 = vld [vmem:[%s226 + $0xf8] sm:$0xff]
      %v268 = vld [vmem:[%s1] sm:$0x1]
      %v270 = vlaneseq
      %v271 = vshrl.u32 %v270, 7
      %v272 = vsub.s32 0, %v271
      %v273 = vrot.slane %v268, %v272
      %v275 = vmul.f32 %v236, %v273
      %v276 = vmul.f32 %v237, %v273
      %v277 = vmul.f32 %v238, %v273
      %v278 = vmul.f32 %v239, %v273
      %v279 = vmul.f32 %v240, %v273
      %v280 = vmul.f32 %v241, %v273
      %v281 = vmul.f32 %v242, %v273
      %v282 = vmul.f32 %v243, %v273
      %v283 = vmul.f32 %v244, %v273
      %v284 = vmul.f32 %v245, %v273
      %v285 = vmul.f32 %v246, %v273
      %v286 = vmul.f32 %v247, %v273
      %v287 = vmul.f32 %v248, %v273
      %v288 = vmul.f32 %v249, %v273
      %v289 = vmul.f32 %v250, %v273
      %v290 = vmul.f32 %v251, %v273
      %v291 = vmul.f32 %v252, %v273
      %v292 = vmul.f32 %v253, %v273
      %v293 = vmul.f32 %v254, %v273
      %v294 = vmul.f32 %v255, %v273
      %v295 = vmul.f32 %v256, %v273
      %v296 = vmul.f32 %v257, %v273
      %v297 = vmul.f32 %v258, %v273
      %v298 = vmul.f32 %v259, %v273
      %v299 = vmul.f32 %v260, %v273
      %v300 = vmul.f32 %v261, %v273
      %v301 = vmul.f32 %v262, %v273
      %v302 = vmul.f32 %v263, %v273
      %v303 = vmul.f32 %v264, %v273
      %v304 = vmul.f32 %v265, %v273
      %v305 = vmul.f32 %v266, %v273
      %v306 = vmul.f32 %v267, %v273
      %v307 = vld [vmem:[%s2] sm:$0x1]
      %v309 = vlaneseq
      %v310 = vshrl.u32 %v309, 7
      %v311 = vsub.s32 0, %v310
      %v312 = vrot.slane %v307, %v311
      %v314 = vadd.f32 %v275, %v312
      %v315 = vadd.f32 %v276, %v312
      %v316 = vadd.f32 %v277, %v312
      %v317 = vadd.f32 %v278, %v312
      %v318 = vadd.f32 %v279, %v312
      %v319 = vadd.f32 %v280, %v312
      %v320 = vadd.f32 %v281, %v312
      %v321 = vadd.f32 %v282, %v312
      %v322 = vadd.f32 %v283, %v312
      %v323 = vadd.f32 %v284, %v312
      %v324 = vadd.f32 %v285, %v312
      %v325 = vadd.f32 %v286, %v312
      %v326 = vadd.f32 %v287, %v312
      %v327 = vadd.f32 %v288, %v312
      %v328 = vadd.f32 %v289, %v312
      %v329 = vadd.f32 %v290, %v312
      %v330 = vadd.f32 %v291, %v312
      %v331 = vadd.f32 %v292, %v312
      %v332 = vadd.f32 %v293, %v312
      %v333 = vadd.f32 %v294, %v312
      %v334 = vadd.f32 %v295, %v312
      %v335 = vadd.f32 %v296, %v312
      %v336 = vadd.f32 %v297, %v312
      %v337 = vadd.f32 %v298, %v312
      %v338 = vadd.f32 %v299, %v312
      %v339 = vadd.f32 %v300, %v312
      %v340 = vadd.f32 %v301, %v312
      %v341 = vadd.f32 %v302, %v312
      %v342 = vadd.f32 %v303, %v312
      %v343 = vadd.f32 %v304, %v312
      %v344 = vadd.f32 %v305, %v312
      %v345 = vadd.f32 %v306, %v312
      %v346 = vmax.f32 %v314, 0.0
      %v347 = vmax.f32 %v315, 0.0
      %v348 = vmax.f32 %v316, 0.0
      %v349 = vmax.f32 %v317, 0.0
      %v350 = vmax.f32 %v318, 0.0
      %v351 = vmax.f32 %v319, 0.0
      %v352 = vmax.f32 %v320, 0.0
      %v353 = vmax.f32 %v321, 0.0
      %v354 = vmax.f32 %v322, 0.0
      %v355 = vmax.f32 %v323, 0.0
      %v356 = vmax.f32 %v324, 0.0
      %v357 = vmax.f32 %v325, 0.0
      %v358 = vmax.f32 %v326, 0.0
      %v359 = vmax.f32 %v327, 0.0
      %v360 = vmax.f32 %v328, 0.0
      %v361 = vmax.f32 %v329, 0.0
      %v362 = vmax.f32 %v330, 0.0
      %v363 = vmax.f32 %v331, 0.0
      %v364 = vmax.f32 %v332, 0.0
      %v365 = vmax.f32 %v333, 0.0
      %v366 = vmax.f32 %v334, 0.0
      %v367 = vmax.f32 %v335, 0.0
      %v368 = vmax.f32 %v336, 0.0
      %v369 = vmax.f32 %v337, 0.0
      %v370 = vmax.f32 %v338, 0.0
      %v371 = vmax.f32 %v339, 0.0
      %v372 = vmax.f32 %v340, 0.0
      %v373 = vmax.f32 %v341, 0.0
      %v374 = vmax.f32 %v342, 0.0
      %v375 = vmax.f32 %v343, 0.0
      %v376 = vmax.f32 %v344, 0.0
      %v377 = vmax.f32 %v345, 0.0
      %v378 = vld [vmem:[%s3] sm:$0xff]
      %v379 = vld [vmem:[%s3 + $0x8] sm:$0xff]
      %v380 = vld [vmem:[%s3 + $0x10] sm:$0xff]
      %v381 = vld [vmem:[%s3 + $0x18] sm:$0xff]
      %v382 = vld [vmem:[%s3 + $0x20] sm:$0xf]
      %vm416 = vcmask 1040384
      %v417 = vrot.slane 0.0, 7
      %v418 = vsel %vm416, %v417, %v417
      %v419 = vrot.slane %v346, 7
      %v420 = vrot.slane %v347, 7
      %v421 = vsel %vm416, %v419, %v420
      %v422 = vrot.slane %v348, 7
      %v423 = vrot.slane %v349, 7
      %v424 = vsel %vm416, %v422, %v423
      %v425 = vrot.slane %v350, 7
      %v426 = vrot.slane %v351, 7
      %v427 = vsel %vm416, %v425, %v426
      %v428 = vrot.slane %v352, 7
      %v429 = vrot.slane %v353, 7
      %v430 = vsel %vm416, %v428, %v429
      %v431 = vrot.slane %v354, 7
      %v432 = vrot.slane %v355, 7
      %v433 = vsel %vm416, %v431, %v432
      %v434 = vrot.slane %v356, 7
      %v435 = vrot.slane %v357, 7
      %v436 = vsel %vm416, %v434, %v435
      %v437 = vrot.slane %v358, 7
      %v438 = vrot.slane %v359, 7
      %v439 = vsel %vm416, %v437, %v438
      %v440 = vrot.slane %v360, 7
      %v441 = vrot.slane %v361, 7
      %v442 = vsel %vm416, %v440, %v441
      %v443 = vrot.slane %v362, 7
      %v444 = vrot.slane %v363, 7
      %v445 = vsel %vm416, %v443, %v444
      %v446 = vrot.slane %v364, 7
      %v447 = vrot.slane %v365, 7
      %v448 = vsel %vm416, %v446, %v447
      %v449 = vrot.slane %v366, 7
      %v450 = vrot.slane %v367, 7
      %v451 = vsel %vm416, %v449, %v450
      %v452 = vrot.slane %v368, 7
      %v453 = vrot.slane %v369, 7
      %v454 = vsel %vm416, %v452, %v453
      %v455 = vrot.slane %v370, 7
      %v456 = vrot.slane %v371, 7
      %v457 = vsel %vm416, %v455, %v456
      %v458 = vrot.slane %v372, 7
      %v459 = vrot.slane %v373, 7
      %v460 = vsel %vm416, %v458, %v459
      %v461 = vrot.slane %v374, 7
      %v462 = vrot.slane %v375, 7
      %v463 = vsel %vm416, %v461, %v462
      %v464 = vrot.slane %v376, 7
      %v465 = vrot.slane %v377, 7
      %v466 = vsel %vm416, %v464, %v465
      %v516 = vsel %vm416, 0.0, %v417
      %v517 = vsel %vm416, 0.0, %v419
      %v518 = vsel %vm416, 0.0, %v422
      %v519 = vsel %vm416, 0.0, %v425
      %v520 = vsel %vm416, 0.0, %v428
      %v521 = vsel %vm416, 0.0, %v431
      %v522 = vsel %vm416, 0.0, %v434
      %v523 = vsel %vm416, 0.0, %v437
      %v524 = vsel %vm416, 0.0, %v440
      %v525 = vsel %vm416, 0.0, %v443
      %v526 = vsel %vm416, 0.0, %v446
      %v527 = vsel %vm416, 0.0, %v449
      %v528 = vsel %vm416, 0.0, %v452
      %v529 = vsel %vm416, 0.0, %v455
      %v530 = vsel %vm416, 0.0, %v458
      %v531 = vsel %vm416, 0.0, %v461
      %v532 = vsel %vm416, 0.0, %v464
      %v533 = vsel %vm416, %v417, 0.0
      %v534 = vsel %vm416, %v420, 0.0
      %v535 = vsel %vm416, %v423, 0.0
      %v536 = vsel %vm416, %v426, 0.0
      %v537 = vsel %vm416, %v429, 0.0
      %v538 = vsel %vm416, %v432, 0.0
      %v539 = vsel %vm416, %v435, 0.0
      %v540 = vsel %vm416, %v438, 0.0
      %v541 = vsel %vm416, %v441, 0.0
      %v542 = vsel %vm416, %v444, 0.0
      %v543 = vsel %vm416, %v447, 0.0
      %v544 = vsel %vm416, %v450, 0.0
      %v545 = vsel %vm416, %v453, 0.0
      %v546 = vsel %vm416, %v456, 0.0
      %v547 = vsel %vm416, %v459, 0.0
      %v548 = vsel %vm416, %v462, 0.0
      %v549 = vsel %vm416, %v465, 0.0
      %vm582 = vcmask 1046528
      %v583 = vrot.slane %v516, 1
      %v584 = vrot.slane %v418, 1
      %v585 = vsel %vm582, %v583, %v584
      %v586 = vrot.slane %v533, 1
      %v587 = vsel %vm582, %v584, %v586
      %v588 = vrot.slane %v517, 1
      %v589 = vrot.slane %v421, 1
      %v590 = vsel %vm582, %v588, %v589
      %v591 = vrot.slane %v534, 1
      %v592 = vsel %vm582, %v589, %v591
      %v593 = vrot.slane %v518, 1
      %v594 = vrot.slane %v424, 1
      %v595 = vsel %vm582, %v593, %v594
      %v596 = vrot.slane %v535, 1
      %v597 = vsel %vm582, %v594, %v596
      %v598 = vrot.slane %v519, 1
      %v599 = vrot.slane %v427, 1
      %v600 = vsel %vm582, %v598, %v599
      %v601 = vrot.slane %v536, 1
      %v602 = vsel %vm582, %v599, %v601
      %v603 = vrot.slane %v520, 1
      %v604 = vrot.slane %v430, 1
      %v605 = vsel %vm582, %v603, %v604
      %v606 = vrot.slane %v537, 1
      %v607 = vsel %vm582, %v604, %v606
      %v608 = vrot.slane %v521, 1
      %v609 = vrot.slane %v433, 1
      %v610 = vsel %vm582, %v608, %v609
      %v611 = vrot.slane %v538, 1
      %v612 = vsel %vm582, %v609, %v611
      %v613 = vrot.slane %v522, 1
      %v614 = vrot.slane %v436, 1
      %v615 = vsel %vm582, %v613, %v614
      %v616 = vrot.slane %v539, 1
      %v617 = vsel %vm582, %v614, %v616
      %v618 = vrot.slane %v523, 1
      %v619 = vrot.slane %v439, 1
      %v620 = vsel %vm582, %v618, %v619
      %v621 = vrot.slane %v540, 1
      %v622 = vsel %vm582, %v619, %v621
      %v623 = vrot.slane %v524, 1
      %v624 = vrot.slane %v442, 1
      %v625 = vsel %vm582, %v623, %v624
      %v626 = vrot.slane %v541, 1
      %v627 = vsel %vm582, %v624, %v626
      %v628 = vrot.slane %v525, 1
      %v629 = vrot.slane %v445, 1
      %v630 = vsel %vm582, %v628, %v629
      %v631 = vrot.slane %v542, 1
      %v632 = vsel %vm582, %v629, %v631
      %v633 = vrot.slane %v526, 1
      %v634 = vrot.slane %v448, 1
      %v635 = vsel %vm582, %v633, %v634
      %v636 = vrot.slane %v543, 1
      %v637 = vsel %vm582, %v634, %v636
      %v638 = vrot.slane %v527, 1
      %v639 = vrot.slane %v451, 1
      %v640 = vsel %vm582, %v638, %v639
      %v641 = vrot.slane %v544, 1
      %v642 = vsel %vm582, %v639, %v641
      %v643 = vrot.slane %v528, 1
      %v644 = vrot.slane %v454, 1
      %v645 = vsel %vm582, %v643, %v644
      %v646 = vrot.slane %v545, 1
      %v647 = vsel %vm582, %v644, %v646
      %v648 = vrot.slane %v529, 1
      %v649 = vrot.slane %v457, 1
      %v650 = vsel %vm582, %v648, %v649
      %v651 = vrot.slane %v546, 1
      %v652 = vsel %vm582, %v649, %v651
      %v653 = vrot.slane %v530, 1
      %v654 = vrot.slane %v460, 1
      %v655 = vsel %vm582, %v653, %v654
      %v656 = vrot.slane %v547, 1
      %v657 = vsel %vm582, %v654, %v656
      %v658 = vrot.slane %v531, 1
      %v659 = vrot.slane %v463, 1
      %v660 = vsel %vm582, %v658, %v659
      %v661 = vrot.slane %v548, 1
      %v662 = vsel %vm582, %v659, %v661
      %663 = vrot.lane.b32.xlu0 %v585, 4
      %v664 = vpop.permute.xlu0 %663
      %665 = vrot.lane.b32.xlu0 %v587, 4
      %v666 = vpop.permute.xlu0 %665
      %667 = vrot.lane.b32.xlu0 %v590, 4
      %v668 = vpop.permute.xlu0 %667
      %669 = vrot.lane.b32.xlu0 %v592, 4
      %v670 = vpop.permute.xlu0 %669
      %671 = vrot.lane.b32.xlu0 %v595, 4
      %v672 = vpop.permute.xlu0 %671
      %673 = vrot.lane.b32.xlu0 %v597, 4
      %v674 = vpop.permute.xlu0 %673
      %675 = vrot.lane.b32.xlu0 %v600, 4
      %v676 = vpop.permute.xlu0 %675
      %677 = vrot.lane.b32.xlu0 %v602, 4
      %v678 = vpop.permute.xlu0 %677
      %679 = vrot.lane.b32.xlu0 %v605, 4
      %v680 = vpop.permute.xlu0 %679
      %681 = vrot.lane.b32.xlu0 %v607, 4
      %v682 = vpop.permute.xlu0 %681
      %683 = vrot.lane.b32.xlu0 %v610, 4
      %v684 = vpop.permute.xlu0 %683
      %685 = vrot.lane.b32.xlu0 %v612, 4
      %v686 = vpop.permute.xlu0 %685
      %687 = vrot.lane.b32.xlu0 %v615, 4
      %v688 = vpop.permute.xlu0 %687
      %689 = vrot.lane.b32.xlu0 %v617, 4
      %v690 = vpop.permute.xlu0 %689
      %691 = vrot.lane.b32.xlu0 %v620, 4
      %v692 = vpop.permute.xlu0 %691
      %693 = vrot.lane.b32.xlu0 %v622, 4
      %v694 = vpop.permute.xlu0 %693
      %695 = vrot.lane.b32.xlu0 %v625, 4
      %v696 = vpop.permute.xlu0 %695
      %697 = vrot.lane.b32.xlu0 %v627, 4
      %v698 = vpop.permute.xlu0 %697
      %699 = vrot.lane.b32.xlu0 %v630, 4
      %v700 = vpop.permute.xlu0 %699
      %701 = vrot.lane.b32.xlu0 %v632, 4
      %v702 = vpop.permute.xlu0 %701
      %703 = vrot.lane.b32.xlu0 %v635, 4
      %v704 = vpop.permute.xlu0 %703
      %705 = vrot.lane.b32.xlu0 %v637, 4
      %v706 = vpop.permute.xlu0 %705
      %707 = vrot.lane.b32.xlu0 %v640, 4
      %v708 = vpop.permute.xlu0 %707
      %709 = vrot.lane.b32.xlu0 %v642, 4
      %v710 = vpop.permute.xlu0 %709
      %711 = vrot.lane.b32.xlu0 %v645, 4
      %v712 = vpop.permute.xlu0 %711
      %713 = vrot.lane.b32.xlu0 %v647, 4
      %v714 = vpop.permute.xlu0 %713
      %715 = vrot.lane.b32.xlu0 %v650, 4
      %v716 = vpop.permute.xlu0 %715
      %717 = vrot.lane.b32.xlu0 %v652, 4
      %v718 = vpop.permute.xlu0 %717
      %719 = vrot.lane.b32.xlu0 %v655, 4
      %v720 = vpop.permute.xlu0 %719
      %721 = vrot.lane.b32.xlu0 %v657, 4
      %v722 = vpop.permute.xlu0 %721
      %723 = vrot.lane.b32.xlu0 %v660, 4
      %v724 = vpop.permute.xlu0 %723
      %725 = vrot.lane.b32.xlu0 %v662, 4
      %v726 = vpop.permute.xlu0 %725
      %vm759 = vcmask 1045504
      %v760 = vrot.slane %v516, 2
      %v761 = vrot.slane %v418, 2
      %v762 = vsel %vm759, %v760, %v761
      %v763 = vrot.slane %v533, 2
      %v764 = vsel %vm759, %v761, %v763
      %v765 = vrot.slane %v517, 2
      %v766 = vrot.slane %v421, 2
      %v767 = vsel %vm759, %v765, %v766
      %v768 = vrot.slane %v534, 2
      %v769 = vsel %vm759, %v766, %v768
      %v770 = vrot.slane %v518, 2
      %v771 = vrot.slane %v424, 2
      %v772 = vsel %vm759, %v770, %v771
      %v773 = vrot.slane %v535, 2
      %v774 = vsel %vm759, %v771, %v773
      %v775 = vrot.slane %v519, 2
      %v776 = vrot.slane %v427, 2
      %v777 = vsel %vm759, %v775, %v776
      %v778 = vrot.slane %v536, 2
      %v779 = vsel %vm759, %v776, %v778
      %v780 = vrot.slane %v520, 2
      %v781 = vrot.slane %v430, 2
      %v782 = vsel %vm759, %v780, %v781
      %v783 = vrot.slane %v537, 2
      %v784 = vsel %vm759, %v781, %v783
      %v785 = vrot.slane %v521, 2
      %v786 = vrot.slane %v433, 2
      %v787 = vsel %vm759, %v785, %v786
      %v788 = vrot.slane %v538, 2
      %v789 = vsel %vm759, %v786, %v788
      %v790 = vrot.slane %v522, 2
      %v791 = vrot.slane %v436, 2
      %v792 = vsel %vm759, %v790, %v791
      %v793 = vrot.slane %v539, 2
      %v794 = vsel %vm759, %v791, %v793
      %v795 = vrot.slane %v523, 2
      %v796 = vrot.slane %v439, 2
      %v797 = vsel %vm759, %v795, %v796
      %v798 = vrot.slane %v540, 2
      %v799 = vsel %vm759, %v796, %v798
      %v800 = vrot.slane %v524, 2
      %v801 = vrot.slane %v442, 2
      %v802 = vsel %vm759, %v800, %v801
      %v803 = vrot.slane %v541, 2
      %v804 = vsel %vm759, %v801, %v803
      %v805 = vrot.slane %v525, 2
      %v806 = vrot.slane %v445, 2
      %v807 = vsel %vm759, %v805, %v806
      %v808 = vrot.slane %v542, 2
      %v809 = vsel %vm759, %v806, %v808
      %v810 = vrot.slane %v526, 2
      %v811 = vrot.slane %v448, 2
      %v812 = vsel %vm759, %v810, %v811
      %v813 = vrot.slane %v543, 2
      %v814 = vsel %vm759, %v811, %v813
      %v815 = vrot.slane %v527, 2
      %v816 = vrot.slane %v451, 2
      %v817 = vsel %vm759, %v815, %v816
      %v818 = vrot.slane %v544, 2
      %v819 = vsel %vm759, %v816, %v818
      %v820 = vrot.slane %v528, 2
      %v821 = vrot.slane %v454, 2
      %v822 = vsel %vm759, %v820, %v821
      %v823 = vrot.slane %v545, 2
      %v824 = vsel %vm759, %v821, %v823
      %v825 = vrot.slane %v529, 2
      %v826 = vrot.slane %v457, 2
      %v827 = vsel %vm759, %v825, %v826
      %v828 = vrot.slane %v546, 2
      %v829 = vsel %vm759, %v826, %v828
      %v830 = vrot.slane %v530, 2
      %v831 = vrot.slane %v460, 2
      %v832 = vsel %vm759, %v830, %v831
      %v833 = vrot.slane %v547, 2
      %v834 = vsel %vm759, %v831, %v833
      %v835 = vrot.slane %v531, 2
      %v836 = vrot.slane %v463, 2
      %v837 = vsel %vm759, %v835, %v836
      %v838 = vrot.slane %v548, 2
      %v839 = vsel %vm759, %v836, %v838
      %840 = vrot.lane.b32.xlu0 %v762, 8
      %v841 = vpop.permute.xlu0 %840
      %842 = vrot.lane.b32.xlu0 %v764, 8
      %v843 = vpop.permute.xlu0 %842
      %844 = vrot.lane.b32.xlu0 %v767, 8
      %v845 = vpop.permute.xlu0 %844
      %846 = vrot.lane.b32.xlu0 %v769, 8
      %v847 = vpop.permute.xlu0 %846
      %848 = vrot.lane.b32.xlu0 %v772, 8
      %v849 = vpop.permute.xlu0 %848
      %850 = vrot.lane.b32.xlu0 %v774, 8
      %v851 = vpop.permute.xlu0 %850
      %852 = vrot.lane.b32.xlu0 %v777, 8
      %v853 = vpop.permute.xlu0 %852
      %854 = vrot.lane.b32.xlu0 %v779, 8
      %v855 = vpop.permute.xlu0 %854
      %856 = vrot.lane.b32.xlu0 %v782, 8
      %v857 = vpop.permute.xlu0 %856
      %858 = vrot.lane.b32.xlu0 %v784, 8
      %v859 = vpop.permute.xlu0 %858
      %860 = vrot.lane.b32.xlu0 %v787, 8
      %v861 = vpop.permute.xlu0 %860
      %862 = vrot.lane.b32.xlu0 %v789, 8
      %v863 = vpop.permute.xlu0 %862
      %864 = vrot.lane.b32.xlu0 %v792, 8
      %v865 = vpop.permute.xlu0 %864
      %866 = vrot.lane.b32.xlu0 %v794, 8
      %v867 = vpop.permute.xlu0 %866
      %868 = vrot.lane.b32.xlu0 %v797, 8
      %v869 = vpop.permute.xlu0 %868
      %870 = vrot.lane.b32.xlu0 %v799, 8
      %v871 = vpop.permute.xlu0 %870
      %872 = vrot.lane.b32.xlu0 %v802, 8
      %v873 = vpop.permute.xlu0 %872
      %874 = vrot.lane.b32.xlu0 %v804, 8
      %v875 = vpop.permute.xlu0 %874
      %876 = vrot.lane.b32.xlu0 %v807, 8
      %v877 = vpop.permute.xlu0 %876
      %878 = vrot.lane.b32.xlu0 %v809, 8
      %v879 = vpop.permute.xlu0 %878
      %880 = vrot.lane.b32.xlu0 %v812, 8
      %v881 = vpop.permute.xlu0 %880
      %882 = vrot.lane.b32.xlu0 %v814, 8
      %v883 = vpop.permute.xlu0 %882
      %884 = vrot.lane.b32.xlu0 %v817, 8
      %v885 = vpop.permute.xlu0 %884
      %886 = vrot.lane.b32.xlu0 %v819, 8
      %v887 = vpop.permute.xlu0 %886
      %888 = vrot.lane.b32.xlu0 %v822, 8
      %v889 = vpop.permute.xlu0 %888
      %890 = vrot.lane.b32.xlu0 %v824, 8
      %v891 = vpop.permute.xlu0 %890
      %892 = vrot.lane.b32.xlu0 %v827, 8
      %v893 = vpop.permute.xlu0 %892
      %894 = vrot.lane.b32.xlu0 %v829, 8
      %v895 = vpop.permute.xlu0 %894
      %896 = vrot.lane.b32.xlu0 %v832, 8
      %v897 = vpop.permute.xlu0 %896
      %898 = vrot.lane.b32.xlu0 %v834, 8
      %v899 = vpop.permute.xlu0 %898
      %900 = vrot.lane.b32.xlu0 %v837, 8
      %v901 = vpop.permute.xlu0 %900
      %902 = vrot.lane.b32.xlu0 %v839, 8
      %v903 = vpop.permute.xlu0 %902
      %937 = vrot.lane.b32.xlu0 %v517, 12
      %v938 = vpop.permute.xlu0 %937
      %939 = vrot.lane.b32.xlu0 %v421, 12
      %v940 = vpop.permute.xlu0 %939
      %941 = vrot.lane.b32.xlu0 %v518, 12
      %v942 = vpop.permute.xlu0 %941
      %943 = vrot.lane.b32.xlu0 %v424, 12
      %v944 = vpop.permute.xlu0 %943
      %945 = vrot.lane.b32.xlu0 %v519, 12
      %v946 = vpop.permute.xlu0 %945
      %947 = vrot.lane.b32.xlu0 %v427, 12
      %v948 = vpop.permute.xlu0 %947
      %949 = vrot.lane.b32.xlu0 %v520, 12
      %v950 = vpop.permute.xlu0 %949
      %951 = vrot.lane.b32.xlu0 %v430, 12
      %v952 = vpop.permute.xlu0 %951
      %953 = vrot.lane.b32.xlu0 %v521, 12
      %v954 = vpop.permute.xlu0 %953
      %955 = vrot.lane.b32.xlu0 %v433, 12
      %v956 = vpop.permute.xlu0 %955
      %957 = vrot.lane.b32.xlu0 %v522, 12
      %v958 = vpop.permute.xlu0 %957
      %959 = vrot.lane.b32.xlu0 %v436, 12
      %v960 = vpop.permute.xlu0 %959
      %961 = vrot.lane.b32.xlu0 %v523, 12
      %v962 = vpop.permute.xlu0 %961
      %963 = vrot.lane.b32.xlu0 %v439, 12
      %v964 = vpop.permute.xlu0 %963
      %965 = vrot.lane.b32.xlu0 %v524, 12
      %v966 = vpop.permute.xlu0 %965
      %967 = vrot.lane.b32.xlu0 %v442, 12
      %v968 = vpop.permute.xlu0 %967
      %969 = vrot.lane.b32.xlu0 %v525, 12
      %v970 = vpop.permute.xlu0 %969
      %971 = vrot.lane.b32.xlu0 %v445, 12
      %v972 = vpop.permute.xlu0 %971
      %973 = vrot.lane.b32.xlu0 %v526, 12
      %v974 = vpop.permute.xlu0 %973
      %975 = vrot.lane.b32.xlu0 %v448, 12
      %v976 = vpop.permute.xlu0 %975
      %977 = vrot.lane.b32.xlu0 %v527, 12
      %v978 = vpop.permute.xlu0 %977
      %979 = vrot.lane.b32.xlu0 %v451, 12
      %v980 = vpop.permute.xlu0 %979
      %981 = vrot.lane.b32.xlu0 %v528, 12
      %v982 = vpop.permute.xlu0 %981
      %983 = vrot.lane.b32.xlu0 %v454, 12
      %v984 = vpop.permute.xlu0 %983
      %985 = vrot.lane.b32.xlu0 %v529, 12
      %v986 = vpop.permute.xlu0 %985
      %987 = vrot.lane.b32.xlu0 %v457, 12
      %v988 = vpop.permute.xlu0 %987
      %989 = vrot.lane.b32.xlu0 %v530, 12
      %v990 = vpop.permute.xlu0 %989
      %991 = vrot.lane.b32.xlu0 %v460, 12
      %v992 = vpop.permute.xlu0 %991
      %993 = vrot.lane.b32.xlu0 %v531, 12
      %v994 = vpop.permute.xlu0 %993
      %995 = vrot.lane.b32.xlu0 %v463, 12
      %v996 = vpop.permute.xlu0 %995
      %997 = vrot.lane.b32.xlu0 %v532, 12
      %v998 = vpop.permute.xlu0 %997
      %999 = vrot.lane.b32.xlu0 %v466, 12
      %v1000 = vpop.permute.xlu0 %999
      %v1034 = vrot.slane %v532, 1
      %v1035 = vrot.slane %v466, 1
      %v1036 = vsel %vm582, %v1034, %v1035
      %v1037 = vrot.slane %v549, 1
      %v1038 = vsel %vm582, %v1035, %v1037
      %1039 = vrot.lane.b32.xlu0 %v590, 16
      %v1040 = vpop.permute.xlu0 %1039
      %1041 = vrot.lane.b32.xlu0 %v592, 16
      %v1042 = vpop.permute.xlu0 %1041
      %1043 = vrot.lane.b32.xlu0 %v595, 16
      %v1044 = vpop.permute.xlu0 %1043
      %1045 = vrot.lane.b32.xlu0 %v597, 16
      %v1046 = vpop.permute.xlu0 %1045
      %1047 = vrot.lane.b32.xlu0 %v600, 16
      %v1048 = vpop.permute.xlu0 %1047
      %1049 = vrot.lane.b32.xlu0 %v602, 16
      %v1050 = vpop.permute.xlu0 %1049
      %1051 = vrot.lane.b32.xlu0 %v605, 16
      %v1052 = vpop.permute.xlu0 %1051
      %1053 = vrot.lane.b32.xlu0 %v607, 16
      %v1054 = vpop.permute.xlu0 %1053
      %1055 = vrot.lane.b32.xlu0 %v610, 16
      %v1056 = vpop.permute.xlu0 %1055
      %1057 = vrot.lane.b32.xlu0 %v612, 16
      %v1058 = vpop.permute.xlu0 %1057
      %1059 = vrot.lane.b32.xlu0 %v615, 16
      %v1060 = vpop.permute.xlu0 %1059
      %1061 = vrot.lane.b32.xlu0 %v617, 16
      %v1062 = vpop.permute.xlu0 %1061
      %1063 = vrot.lane.b32.xlu0 %v620, 16
      %v1064 = vpop.permute.xlu0 %1063
      %1065 = vrot.lane.b32.xlu0 %v622, 16
      %v1066 = vpop.permute.xlu0 %1065
      %1067 = vrot.lane.b32.xlu0 %v625, 16
      %v1068 = vpop.permute.xlu0 %1067
      %1069 = vrot.lane.b32.xlu0 %v627, 16
      %v1070 = vpop.permute.xlu0 %1069
      %1071 = vrot.lane.b32.xlu0 %v630, 16
      %v1072 = vpop.permute.xlu0 %1071
      %1073 = vrot.lane.b32.xlu0 %v632, 16
      %v1074 = vpop.permute.xlu0 %1073
      %1075 = vrot.lane.b32.xlu0 %v635, 16
      %v1076 = vpop.permute.xlu0 %1075
      %1077 = vrot.lane.b32.xlu0 %v637, 16
      %v1078 = vpop.permute.xlu0 %1077
      %1079 = vrot.lane.b32.xlu0 %v640, 16
      %v1080 = vpop.permute.xlu0 %1079
      %1081 = vrot.lane.b32.xlu0 %v642, 16
      %v1082 = vpop.permute.xlu0 %1081
      %1083 = vrot.lane.b32.xlu0 %v645, 16
      %v1084 = vpop.permute.xlu0 %1083
      %1085 = vrot.lane.b32.xlu0 %v647, 16
      %v1086 = vpop.permute.xlu0 %1085
      %1087 = vrot.lane.b32.xlu0 %v650, 16
      %v1088 = vpop.permute.xlu0 %1087
      %1089 = vrot.lane.b32.xlu0 %v652, 16
      %v1090 = vpop.permute.xlu0 %1089
      %1091 = vrot.lane.b32.xlu0 %v655, 16
      %v1092 = vpop.permute.xlu0 %1091
      %1093 = vrot.lane.b32.xlu0 %v657, 16
      %v1094 = vpop.permute.xlu0 %1093
      %1095 = vrot.lane.b32.xlu0 %v660, 16
      %v1096 = vpop.permute.xlu0 %1095
      %1097 = vrot.lane.b32.xlu0 %v662, 16
      %v1098 = vpop.permute.xlu0 %1097
      %1099 = vrot.lane.b32.xlu0 %v1036, 16
      %v1100 = vpop.permute.xlu0 %1099
      %1101 = vrot.lane.b32.xlu0 %v1038, 16
      %v1102 = vpop.permute.xlu0 %1101
      %v1135 = vrot.slane %v532, 2
      %v1136 = vrot.slane %v466, 2
      %v1137 = vsel %vm759, %v1135, %v1136
      %v1138 = vrot.slane %v549, 2
      %v1139 = vsel %vm759, %v1136, %v1138
      %1140 = vrot.lane.b32.xlu0 %v767, 20
      %v1141 = vpop.permute.xlu0 %1140
      %1142 = vrot.lane.b32.xlu0 %v769, 20
      %v1143 = vpop.permute.xlu0 %1142
      %1144 = vrot.lane.b32.xlu0 %v772, 20
      %v1145 = vpop.permute.xlu0 %1144
      %1146 = vrot.lane.b32.xlu0 %v774, 20
      %v1147 = vpop.permute.xlu0 %1146
      %1148 = vrot.lane.b32.xlu0 %v777, 20
      %v1149 = vpop.permute.xlu0 %1148
      %1150 = vrot.lane.b32.xlu0 %v779, 20
      %v1151 = vpop.permute.xlu0 %1150
      %1152 = vrot.lane.b32.xlu0 %v782, 20
      %v1153 = vpop.permute.xlu0 %1152
      %1154 = vrot.lane.b32.xlu0 %v784, 20
      %v1155 = vpop.permute.xlu0 %1154
      %1156 = vrot.lane.b32.xlu0 %v787, 20
      %v1157 = vpop.permute.xlu0 %1156
      %1158 = vrot.lane.b32.xlu0 %v789, 20
      %v1159 = vpop.permute.xlu0 %1158
      %1160 = vrot.lane.b32.xlu0 %v792, 20
      %v1161 = vpop.permute.xlu0 %1160
      %1162 = vrot.lane.b32.xlu0 %v794, 20
      %v1163 = vpop.permute.xlu0 %1162
      %1164 = vrot.lane.b32.xlu0 %v797, 20
      %v1165 = vpop.permute.xlu0 %1164
      %1166 = vrot.lane.b32.xlu0 %v799, 20
      %v1167 = vpop.permute.xlu0 %1166
      %1168 = vrot.lane.b32.xlu0 %v802, 20
      %v1169 = vpop.permute.xlu0 %1168
      %1170 = vrot.lane.b32.xlu0 %v804, 20
      %v1171 = vpop.permute.xlu0 %1170
      %1172 = vrot.lane.b32.xlu0 %v807, 20
      %v1173 = vpop.permute.xlu0 %1172
      %1174 = vrot.lane.b32.xlu0 %v809, 20
      %v1175 = vpop.permute.xlu0 %1174
      %1176 = vrot.lane.b32.xlu0 %v812, 20
      %v1177 = vpop.permute.xlu0 %1176
      %1178 = vrot.lane.b32.xlu0 %v814, 20
      %v1179 = vpop.permute.xlu0 %1178
      %1180 = vrot.lane.b32.xlu0 %v817, 20
      %v1181 = vpop.permute.xlu0 %1180
      %1182 = vrot.lane.b32.xlu0 %v819, 20
      %v1183 = vpop.permute.xlu0 %1182
      %1184 = vrot.lane.b32.xlu0 %v822, 20
      %v1185 = vpop.permute.xlu0 %1184
      %1186 = vrot.lane.b32.xlu0 %v824, 20
      %v1187 = vpop.permute.xlu0 %1186
      %1188 = vrot.lane.b32.xlu0 %v827, 20
      %v1189 = vpop.permute.xlu0 %1188
      %1190 = vrot.lane.b32.xlu0 %v829, 20
      %v1191 = vpop.permute.xlu0 %1190
      %1192 = vrot.lane.b32.xlu0 %v832, 20
      %v1193 = vpop.permute.xlu0 %1192
      %1194 = vrot.lane.b32.xlu0 %v834, 20
      %v1195 = vpop.permute.xlu0 %1194
      %1196 = vrot.lane.b32.xlu0 %v837, 20
      %v1197 = vpop.permute.xlu0 %1196
      %1198 = vrot.lane.b32.xlu0 %v839, 20
      %v1199 = vpop.permute.xlu0 %1198
      %1200 = vrot.lane.b32.xlu0 %v1137, 20
      %v1201 = vpop.permute.xlu0 %1200
      %1202 = vrot.lane.b32.xlu0 %v1139, 20
      %v1203 = vpop.permute.xlu0 %1202
      %1236 = vrot.lane.b32.xlu0 %v518, 24
      %v1237 = vpop.permute.xlu0 %1236
      %1238 = vrot.lane.b32.xlu0 %v424, 24
      %v1239 = vpop.permute.xlu0 %1238
      %1240 = vrot.lane.b32.xlu0 %v519, 24
      %v1241 = vpop.permute.xlu0 %1240
      %1242 = vrot.lane.b32.xlu0 %v427, 24
      %v1243 = vpop.permute.xlu0 %1242
      %1244 = vrot.lane.b32.xlu0 %v520, 24
      %v1245 = vpop.permute.xlu0 %1244
      %1246 = vrot.lane.b32.xlu0 %v430, 24
      %v1247 = vpop.permute.xlu0 %1246
      %1248 = vrot.lane.b32.xlu0 %v521, 24
      %v1249 = vpop.permute.xlu0 %1248
      %1250 = vrot.lane.b32.xlu0 %v433, 24
      %v1251 = vpop.permute.xlu0 %1250
      %1252 = vrot.lane.b32.xlu0 %v522, 24
      %v1253 = vpop.permute.xlu0 %1252
      %1254 = vrot.lane.b32.xlu0 %v436, 24
      %v1255 = vpop.permute.xlu0 %1254
      %1256 = vrot.lane.b32.xlu0 %v523, 24
      %v1257 = vpop.permute.xlu0 %1256
      %1258 = vrot.lane.b32.xlu0 %v439, 24
      %v1259 = vpop.permute.xlu0 %1258
      %1260 = vrot.lane.b32.xlu0 %v524, 24
      %v1261 = vpop.permute.xlu0 %1260
      %1262 = vrot.lane.b32.xlu0 %v442, 24
      %v1263 = vpop.permute.xlu0 %1262
      %1264 = vrot.lane.b32.xlu0 %v525, 24
      %v1265 = vpop.permute.xlu0 %1264
      %1266 = vrot.lane.b32.xlu0 %v445, 24
      %v1267 = vpop.permute.xlu0 %1266
      %1268 = vrot.lane.b32.xlu0 %v526, 24
      %v1269 = vpop.permute.xlu0 %1268
      %1270 = vrot.lane.b32.xlu0 %v448, 24
      %v1271 = vpop.permute.xlu0 %1270
      %1272 = vrot.lane.b32.xlu0 %v527, 24
      %v1273 = vpop.permute.xlu0 %1272
      %1274 = vrot.lane.b32.xlu0 %v451, 24
      %v1275 = vpop.permute.xlu0 %1274
      %1276 = vrot.lane.b32.xlu0 %v528, 24
      %v1277 = vpop.permute.xlu0 %1276
      %1278 = vrot.lane.b32.xlu0 %v454, 24
      %v1279 = vpop.permute.xlu0 %1278
      %1280 = vrot.lane.b32.xlu0 %v529, 24
      %v1281 = vpop.permute.xlu0 %1280
      %1282 = vrot.lane.b32.xlu0 %v457, 24
      %v1283 = vpop.permute.xlu0 %1282
      %1284 = vrot.lane.b32.xlu0 %v530, 24
      %v1285 = vpop.permute.xlu0 %1284
      %1286 = vrot.lane.b32.xlu0 %v460, 24
      %v1287 = vpop.permute.xlu0 %1286
      %1288 = vrot.lane.b32.xlu0 %v531, 24
      %v1289 = vpop.permute.xlu0 %1288
      %1290 = vrot.lane.b32.xlu0 %v463, 24
      %v1291 = vpop.permute.xlu0 %1290
      %1292 = vrot.lane.b32.xlu0 %v532, 24
      %v1293 = vpop.permute.xlu0 %1292
      %1294 = vrot.lane.b32.xlu0 %v466, 24
      %v1295 = vpop.permute.xlu0 %1294
      %1296 = vrot.lane.b32.xlu0 %v516, 24
      %v1297 = vpop.permute.xlu0 %1296
      %1298 = vrot.lane.b32.xlu0 %v418, 24
      %v1299 = vpop.permute.xlu0 %1298
      %1332 = vrot.lane.b32.xlu0 %v595, 28
      %v1333 = vpop.permute.xlu0 %1332
      %1334 = vrot.lane.b32.xlu0 %v597, 28
      %v1335 = vpop.permute.xlu0 %1334
      %1336 = vrot.lane.b32.xlu0 %v600, 28
      %v1337 = vpop.permute.xlu0 %1336
      %1338 = vrot.lane.b32.xlu0 %v602, 28
      %v1339 = vpop.permute.xlu0 %1338
      %1340 = vrot.lane.b32.xlu0 %v605, 28
      %v1341 = vpop.permute.xlu0 %1340
      %1342 = vrot.lane.b32.xlu0 %v607, 28
      %v1343 = vpop.permute.xlu0 %1342
      %1344 = vrot.lane.b32.xlu0 %v610, 28
      %v1345 = vpop.permute.xlu0 %1344
      %1346 = vrot.lane.b32.xlu0 %v612, 28
      %v1347 = vpop.permute.xlu0 %1346
      %1348 = vrot.lane.b32.xlu0 %v615, 28
      %v1349 = vpop.permute.xlu0 %1348
      %1350 = vrot.lane.b32.xlu0 %v617, 28
      %v1351 = vpop.permute.xlu0 %1350
      %1352 = vrot.lane.b32.xlu0 %v620, 28
      %v1353 = vpop.permute.xlu0 %1352
      %1354 = vrot.lane.b32.xlu0 %v622, 28
      %v1355 = vpop.permute.xlu0 %1354
      %1356 = vrot.lane.b32.xlu0 %v625, 28
      %v1357 = vpop.permute.xlu0 %1356
      %1358 = vrot.lane.b32.xlu0 %v627, 28
      %v1359 = vpop.permute.xlu0 %1358
      %1360 = vrot.lane.b32.xlu0 %v630, 28
      %v1361 = vpop.permute.xlu0 %1360
      %1362 = vrot.lane.b32.xlu0 %v632, 28
      %v1363 = vpop.permute.xlu0 %1362
      %1364 = vrot.lane.b32.xlu0 %v635, 28
      %v1365 = vpop.permute.xlu0 %1364
      %1366 = vrot.lane.b32.xlu0 %v637, 28
      %v1367 = vpop.permute.xlu0 %1366
      %1368 = vrot.lane.b32.xlu0 %v640, 28
      %v1369 = vpop.permute.xlu0 %1368
      %1370 = vrot.lane.b32.xlu0 %v642, 28
      %v1371 = vpop.permute.xlu0 %1370
      %1372 = vrot.lane.b32.xlu0 %v645, 28
      %v1373 = vpop.permute.xlu0 %1372
      %1374 = vrot.lane.b32.xlu0 %v647, 28
      %v1375 = vpop.permute.xlu0 %1374
      %1376 = vrot.lane.b32.xlu0 %v650, 28
      %v1377 = vpop.permute.xlu0 %1376
      %1378 = vrot.lane.b32.xlu0 %v652, 28
      %v1379 = vpop.permute.xlu0 %1378
      %1380 = vrot.lane.b32.xlu0 %v655, 28
      %v1381 = vpop.permute.xlu0 %1380
      %1382 = vrot.lane.b32.xlu0 %v657, 28
      %v1383 = vpop.permute.xlu0 %1382
      %1384 = vrot.lane.b32.xlu0 %v660, 28
      %v1385 = vpop.permute.xlu0 %1384
      %1386 = vrot.lane.b32.xlu0 %v662, 28
      %v1387 = vpop.permute.xlu0 %1386
      %1388 = vrot.lane.b32.xlu0 %v1036, 28
      %v1389 = vpop.permute.xlu0 %1388
      %1390 = vrot.lane.b32.xlu0 %v1038, 28
      %v1391 = vpop.permute.xlu0 %1390
      %1392 = vrot.lane.b32.xlu0 %v585, 28
      %v1393 = vpop.permute.xlu0 %1392
      %1394 = vrot.lane.b32.xlu0 %v587, 28
      %v1395 = vpop.permute.xlu0 %1394
      %1428 = vrot.lane.b32.xlu0 %v772, 32
      %v1429 = vpop.permute.xlu0 %1428
      %1430 = vrot.lane.b32.xlu0 %v774, 32
      %v1431 = vpop.permute.xlu0 %1430
      %1432 = vrot.lane.b32.xlu0 %v777, 32
      %v1433 = vpop.permute.xlu0 %1432
      %1434 = vrot.lane.b32.xlu0 %v779, 32
      %v1435 = vpop.permute.xlu0 %1434
      %1436 = vrot.lane.b32.xlu0 %v782, 32
      %v1437 = vpop.permute.xlu0 %1436
      %1438 = vrot.lane.b32.xlu0 %v784, 32
      %v1439 = vpop.permute.xlu0 %1438
      %1440 = vrot.lane.b32.xlu0 %v787, 32
      %v1441 = vpop.permute.xlu0 %1440
      %1442 = vrot.lane.b32.xlu0 %v789, 32
      %v1443 = vpop.permute.xlu0 %1442
      %1444 = vrot.lane.b32.xlu0 %v792, 32
      %v1445 = vpop.permute.xlu0 %1444
      %1446 = vrot.lane.b32.xlu0 %v794, 32
      %v1447 = vpop.permute.xlu0 %1446
      %1448 = vrot.lane.b32.xlu0 %v797, 32
      %v1449 = vpop.permute.xlu0 %1448
      %1450 = vrot.lane.b32.xlu0 %v799, 32
      %v1451 = vpop.permute.xlu0 %1450
      %1452 = vrot.lane.b32.xlu0 %v802, 32
      %v1453 = vpop.permute.xlu0 %1452
      %1454 = vrot.lane.b32.xlu0 %v804, 32
      %v1455 = vpop.permute.xlu0 %1454
      %1456 = vrot.lane.b32.xlu0 %v807, 32
      %v1457 = vpop.permute.xlu0 %1456
      %1458 = vrot.lane.b32.xlu0 %v809, 32
      %v1459 = vpop.permute.xlu0 %1458
      %1460 = vrot.lane.b32.xlu0 %v812, 32
      %v1461 = vpop.permute.xlu0 %1460
      %1462 = vrot.lane.b32.xlu0 %v814, 32
      %v1463 = vpop.permute.xlu0 %1462
      %1464 = vrot.lane.b32.xlu0 %v817, 32
      %v1465 = vpop.permute.xlu0 %1464
      %1466 = vrot.lane.b32.xlu0 %v819, 32
      %v1467 = vpop.permute.xlu0 %1466
      %1468 = vrot.lane.b32.xlu0 %v822, 32
      %v1469 = vpop.permute.xlu0 %1468
      %1470 = vrot.lane.b32.xlu0 %v824, 32
      %v1471 = vpop.permute.xlu0 %1470
      %1472 = vrot.lane.b32.xlu0 %v827, 32
      %v1473 = vpop.permute.xlu0 %1472
      %1474 = vrot.lane.b32.xlu0 %v829, 32
      %v1475 = vpop.permute.xlu0 %1474
      %1476 = vrot.lane.b32.xlu0 %v832, 32
      %v1477 = vpop.permute.xlu0 %1476
      %1478 = vrot.lane.b32.xlu0 %v834, 32
      %v1479 = vpop.permute.xlu0 %1478
      %1480 = vrot.lane.b32.xlu0 %v837, 32
      %v1481 = vpop.permute.xlu0 %1480
      %1482 = vrot.lane.b32.xlu0 %v839, 32
      %v1483 = vpop.permute.xlu0 %1482
      %1484 = vrot.lane.b32.xlu0 %v1137, 32
      %v1485 = vpop.permute.xlu0 %1484
      %1486 = vrot.lane.b32.xlu0 %v1139, 32
      %v1487 = vpop.permute.xlu0 %1486
      %1488 = vrot.lane.b32.xlu0 %v762, 32
      %v1489 = vpop.permute.xlu0 %1488
      %1490 = vrot.lane.b32.xlu0 %v764, 32
      %v1491 = vpop.permute.xlu0 %1490
      %vm1524 = vcmask 31744
      %v1525 = vsel %vm1524, %v516, %v664
      %v1526 = vsel %vm1524, %v418, %v666
      %v1527 = vsel %vm1524, %v517, %v668
      %v1528 = vsel %vm1524, %v421, %v670
      %v1529 = vsel %vm1524, %v518, %v672
      %v1530 = vsel %vm1524, %v424, %v674
      %v1531 = vsel %vm1524, %v519, %v676
      %v1532 = vsel %vm1524, %v427, %v678
      %v1533 = vsel %vm1524, %v520, %v680
      %v1534 = vsel %vm1524, %v430, %v682
      %v1535 = vsel %vm1524, %v521, %v684
      %v1536 = vsel %vm1524, %v433, %v686
      %v1537 = vsel %vm1524, %v522, %v688
      %v1538 = vsel %vm1524, %v436, %v690
      %v1539 = vsel %vm1524, %v523, %v692
      %v1540 = vsel %vm1524, %v439, %v694
      %v1541 = vsel %vm1524, %v524, %v696
      %v1542 = vsel %vm1524, %v442, %v698
      %v1543 = vsel %vm1524, %v525, %v700
      %v1544 = vsel %vm1524, %v445, %v702
      %v1545 = vsel %vm1524, %v526, %v704
      %v1546 = vsel %vm1524, %v448, %v706
      %v1547 = vsel %vm1524, %v527, %v708
      %v1548 = vsel %vm1524, %v451, %v710
      %v1549 = vsel %vm1524, %v528, %v712
      %v1550 = vsel %vm1524, %v454, %v714
      %v1551 = vsel %vm1524, %v529, %v716
      %v1552 = vsel %vm1524, %v457, %v718
      %v1553 = vsel %vm1524, %v530, %v720
      %v1554 = vsel %vm1524, %v460, %v722
      %v1555 = vsel %vm1524, %v531, %v724
      %v1556 = vsel %vm1524, %v463, %v726
      %vm1557 = vcmask 64512
      %v1558 = vsel %vm1557, %v1525, %v841
      %v1559 = vsel %vm1557, %v1526, %v843
      %v1560 = vsel %vm1557, %v1527, %v845
      %v1561 = vsel %vm1557, %v1528, %v847
      %v1562 = vsel %vm1557, %v1529, %v849
      %v1563 = vsel %vm1557, %v1530, %v851
      %v1564 = vsel %vm1557, %v1531, %v853
      %v1565 = vsel %vm1557, %v1532, %v855
      %v1566 = vsel %vm1557, %v1533, %v857
      %v1567 = vsel %vm1557, %v1534, %v859
      %v1568 = vsel %vm1557, %v1535, %v861
      %v1569 = vsel %vm1557, %v1536, %v863
      %v1570 = vsel %vm1557, %v1537, %v865
      %v1571 = vsel %vm1557, %v1538, %v867
      %v1572 = vsel %vm1557, %v1539, %v869
      %v1573 = vsel %vm1557, %v1540, %v871
      %v1574 = vsel %vm1557, %v1541, %v873
      %v1575 = vsel %vm1557, %v1542, %v875
      %v1576 = vsel %vm1557, %v1543, %v877
      %v1577 = vsel %vm1557, %v1544, %v879
      %v1578 = vsel %vm1557, %v1545, %v881
      %v1579 = vsel %vm1557, %v1546, %v883
      %v1580 = vsel %vm1557, %v1547, %v885
      %v1581 = vsel %vm1557, %v1548, %v887
      %v1582 = vsel %vm1557, %v1549, %v889
      %v1583 = vsel %vm1557, %v1550, %v891
      %v1584 = vsel %vm1557, %v1551, %v893
      %v1585 = vsel %vm1557, %v1552, %v895
      %v1586 = vsel %vm1557, %v1553, %v897
      %v1587 = vsel %vm1557, %v1554, %v899
      %v1588 = vsel %vm1557, %v1555, %v901
      %v1589 = vsel %vm1557, %v1556, %v903
      %vm1590 = vcmask 97280
      %v1591 = vsel %vm1590, %v1558, %v938
      %v1592 = vsel %vm1590, %v1559, %v940
      %v1593 = vsel %vm1590, %v1560, %v942
      %v1594 = vsel %vm1590, %v1561, %v944
      %v1595 = vsel %vm1590, %v1562, %v946
      %v1596 = vsel %vm1590, %v1563, %v948
      %v1597 = vsel %vm1590, %v1564, %v950
      %v1598 = vsel %vm1590, %v1565, %v952
      %v1599 = vsel %vm1590, %v1566, %v954
      %v1600 = vsel %vm1590, %v1567, %v956
      %v1601 = vsel %vm1590, %v1568, %v958
      %v1602 = vsel %vm1590, %v1569, %v960
      %v1603 = vsel %vm1590, %v1570, %v962
      %v1604 = vsel %vm1590, %v1571, %v964
      %v1605 = vsel %vm1590, %v1572, %v966
      %v1606 = vsel %vm1590, %v1573, %v968
      %v1607 = vsel %vm1590, %v1574, %v970
      %v1608 = vsel %vm1590, %v1575, %v972
      %v1609 = vsel %vm1590, %v1576, %v974
      %v1610 = vsel %vm1590, %v1577, %v976
      %v1611 = vsel %vm1590, %v1578, %v978
      %v1612 = vsel %vm1590, %v1579, %v980
      %v1613 = vsel %vm1590, %v1580, %v982
      %v1614 = vsel %vm1590, %v1581, %v984
      %v1615 = vsel %vm1590, %v1582, %v986
      %v1616 = vsel %vm1590, %v1583, %v988
      %v1617 = vsel %vm1590, %v1584, %v990
      %v1618 = vsel %vm1590, %v1585, %v992
      %v1619 = vsel %vm1590, %v1586, %v994
      %v1620 = vsel %vm1590, %v1587, %v996
      %v1621 = vsel %vm1590, %v1588, %v998
      %v1622 = vsel %vm1590, %v1589, %v1000
      %vm1623 = vcmask 130048
      %v1624 = vsel %vm1623, %v1591, %v1040
      %v1625 = vsel %vm1623, %v1592, %v1042
      %v1626 = vsel %vm1623, %v1593, %v1044
      %v1627 = vsel %vm1623, %v1594, %v1046
      %v1628 = vsel %vm1623, %v1595, %v1048
      %v1629 = vsel %vm1623, %v1596, %v1050
      %v1630 = vsel %vm1623, %v1597, %v1052
      %v1631 = vsel %vm1623, %v1598, %v1054
      %v1632 = vsel %vm1623, %v1599, %v1056
      %v1633 = vsel %vm1623, %v1600, %v1058
      %v1634 = vsel %vm1623, %v1601, %v1060
      %v1635 = vsel %vm1623, %v1602, %v1062
      %v1636 = vsel %vm1623, %v1603, %v1064
      %v1637 = vsel %vm1623, %v1604, %v1066
      %v1638 = vsel %vm1623, %v1605, %v1068
      %v1639 = vsel %vm1623, %v1606, %v1070
      %v1640 = vsel %vm1623, %v1607, %v1072
      %v1641 = vsel %vm1623, %v1608, %v1074
      %v1642 = vsel %vm1623, %v1609, %v1076
      %v1643 = vsel %vm1623, %v1610, %v1078
      %v1644 = vsel %vm1623, %v1611, %v1080
      %v1645 = vsel %vm1623, %v1612, %v1082
      %v1646 = vsel %vm1623, %v1613, %v1084
      %v1647 = vsel %vm1623, %v1614, %v1086
      %v1648 = vsel %vm1623, %v1615, %v1088
      %v1649 = vsel %vm1623, %v1616, %v1090
      %v1650 = vsel %vm1623, %v1617, %v1092
      %v1651 = vsel %vm1623, %v1618, %v1094
      %v1652 = vsel %vm1623, %v1619, %v1096
      %v1653 = vsel %vm1623, %v1620, %v1098
      %v1654 = vsel %vm1623, %v1621, %v1100
      %v1655 = vsel %vm1623, %v1622, %v1102
      %vm1656 = vcmask 162816
      %v1657 = vsel %vm1656, %v1624, %v1141
      %v1658 = vsel %vm1656, %v1625, %v1143
      %v1659 = vsel %vm1656, %v1626, %v1145
      %v1660 = vsel %vm1656, %v1627, %v1147
      %v1661 = vsel %vm1656, %v1628, %v1149
      %v1662 = vsel %vm1656, %v1629, %v1151
      %v1663 = vsel %vm1656, %v1630, %v1153
      %v1664 = vsel %vm1656, %v1631, %v1155
      %v1665 = vsel %vm1656, %v1632, %v1157
      %v1666 = vsel %vm1656, %v1633, %v1159
      %v1667 = vsel %vm1656, %v1634, %v1161
      %v1668 = vsel %vm1656, %v1635, %v1163
      %v1669 = vsel %vm1656, %v1636, %v1165
      %v1670 = vsel %vm1656, %v1637, %v1167
      %v1671 = vsel %vm1656, %v1638, %v1169
      %v1672 = vsel %vm1656, %v1639, %v1171
      %v1673 = vsel %vm1656, %v1640, %v1173
      %v1674 = vsel %vm1656, %v1641, %v1175
      %v1675 = vsel %vm1656, %v1642, %v1177
      %v1676 = vsel %vm1656, %v1643, %v1179
      %v1677 = vsel %vm1656, %v1644, %v1181
      %v1678 = vsel %vm1656, %v1645, %v1183
      %v1679 = vsel %vm1656, %v1646, %v1185
      %v1680 = vsel %vm1656, %v1647, %v1187
      %v1681 = vsel %vm1656, %v1648, %v1189
      %v1682 = vsel %vm1656, %v1649, %v1191
      %v1683 = vsel %vm1656, %v1650, %v1193
      %v1684 = vsel %vm1656, %v1651, %v1195
      %v1685 = vsel %vm1656, %v1652, %v1197
      %v1686 = vsel %vm1656, %v1653, %v1199
      %v1687 = vsel %vm1656, %v1654, %v1201
      %v1688 = vsel %vm1656, %v1655, %v1203
      %vm1689 = vcmask 195584
      %v1690 = vsel %vm1689, %v1657, %v1237
      %v1691 = vsel %vm1689, %v1658, %v1239
      %v1692 = vsel %vm1689, %v1659, %v1241
      %v1693 = vsel %vm1689, %v1660, %v1243
      %v1694 = vsel %vm1689, %v1661, %v1245
      %v1695 = vsel %vm1689, %v1662, %v1247
      %v1696 = vsel %vm1689, %v1663, %v1249
      %v1697 = vsel %vm1689, %v1664, %v1251
      %v1698 = vsel %vm1689, %v1665, %v1253
      %v1699 = vsel %vm1689, %v1666, %v1255
      %v1700 = vsel %vm1689, %v1667, %v1257
      %v1701 = vsel %vm1689, %v1668, %v1259
      %v1702 = vsel %vm1689, %v1669, %v1261
      %v1703 = vsel %vm1689, %v1670, %v1263
      %v1704 = vsel %vm1689, %v1671, %v1265
      %v1705 = vsel %vm1689, %v1672, %v1267
      %v1706 = vsel %vm1689, %v1673, %v1269
      %v1707 = vsel %vm1689, %v1674, %v1271
      %v1708 = vsel %vm1689, %v1675, %v1273
      %v1709 = vsel %vm1689, %v1676, %v1275
      %v1710 = vsel %vm1689, %v1677, %v1277
      %v1711 = vsel %vm1689, %v1678, %v1279
      %v1712 = vsel %vm1689, %v1679, %v1281
      %v1713 = vsel %vm1689, %v1680, %v1283
      %v1714 = vsel %vm1689, %v1681, %v1285
      %v1715 = vsel %vm1689, %v1682, %v1287
      %v1716 = vsel %vm1689, %v1683, %v1289
      %v1717 = vsel %vm1689, %v1684, %v1291
      %v1718 = vsel %vm1689, %v1685, %v1293
      %v1719 = vsel %vm1689, %v1686, %v1295
      %v1720 = vsel %vm1689, %v1687, %v1297
      %v1721 = vsel %vm1689, %v1688, %v1299
      %vm1722 = vcmask 228352
      %v1723 = vsel %vm1722, %v1690, %v1333
      %v1724 = vsel %vm1722, %v1691, %v1335
      %v1725 = vsel %vm1722, %v1692, %v1337
      %v1726 = vsel %vm1722, %v1693, %v1339
      %v1727 = vsel %vm1722, %v1694, %v1341
      %v1728 = vsel %vm1722, %v1695, %v1343
      %v1729 = vsel %vm1722, %v1696, %v1345
      %v1730 = vsel %vm1722, %v1697, %v1347
      %v1731 = vsel %vm1722, %v1698, %v1349
      %v1732 = vsel %vm1722, %v1699, %v1351
      %v1733 = vsel %vm1722, %v1700, %v1353
      %v1734 = vsel %vm1722, %v1701, %v1355
      %v1735 = vsel %vm1722, %v1702, %v1357
      %v1736 = vsel %vm1722, %v1703, %v1359
      %v1737 = vsel %vm1722, %v1704, %v1361
      %v1738 = vsel %vm1722, %v1705, %v1363
      %v1739 = vsel %vm1722, %v1706, %v1365
      %v1740 = vsel %vm1722, %v1707, %v1367
      %v1741 = vsel %vm1722, %v1708, %v1369
      %v1742 = vsel %vm1722, %v1709, %v1371
      %v1743 = vsel %vm1722, %v1710, %v1373
      %v1744 = vsel %vm1722, %v1711, %v1375
      %v1745 = vsel %vm1722, %v1712, %v1377
      %v1746 = vsel %vm1722, %v1713, %v1379
      %v1747 = vsel %vm1722, %v1714, %v1381
      %v1748 = vsel %vm1722, %v1715, %v1383
      %v1749 = vsel %vm1722, %v1716, %v1385
      %v1750 = vsel %vm1722, %v1717, %v1387
      %v1751 = vsel %vm1722, %v1718, %v1389
      %v1752 = vsel %vm1722, %v1719, %v1391
      %v1753 = vsel %vm1722, %v1720, %v1393
      %v1754 = vsel %vm1722, %v1721, %v1395
      %vm1755 = vcmask 261120
      %v1756 = vsel %vm1755, %v1723, %v1429
      %v1757 = vsel %vm1755, %v1724, %v1431
      %v1758 = vsel %vm1755, %v1725, %v1433
      %v1759 = vsel %vm1755, %v1726, %v1435
      %v1760 = vsel %vm1755, %v1727, %v1437
      %v1761 = vsel %vm1755, %v1728, %v1439
      %v1762 = vsel %vm1755, %v1729, %v1441
      %v1763 = vsel %vm1755, %v1730, %v1443
      %v1764 = vsel %vm1755, %v1731, %v1445
      %v1765 = vsel %vm1755, %v1732, %v1447
      %v1766 = vsel %vm1755, %v1733, %v1449
      %v1767 = vsel %vm1755, %v1734, %v1451
      %v1768 = vsel %vm1755, %v1735, %v1453
      %v1769 = vsel %vm1755, %v1736, %v1455
      %v1770 = vsel %vm1755, %v1737, %v1457
      %v1771 = vsel %vm1755, %v1738, %v1459
      %v1772 = vsel %vm1755, %v1739, %v1461
      %v1773 = vsel %vm1755, %v1740, %v1463
      %v1774 = vsel %vm1755, %v1741, %v1465
      %v1775 = vsel %vm1755, %v1742, %v1467
      %v1776 = vsel %vm1755, %v1743, %v1469
      %v1777 = vsel %vm1755, %v1744, %v1471
      %v1778 = vsel %vm1755, %v1745, %v1473
      %v1779 = vsel %vm1755, %v1746, %v1475
      %v1780 = vsel %vm1755, %v1747, %v1477
      %v1781 = vsel %vm1755, %v1748, %v1479
      %v1782 = vsel %vm1755, %v1749, %v1481
      %v1783 = vsel %vm1755, %v1750, %v1483
      %v1784 = vsel %vm1755, %v1751, %v1485
      %v1785 = vsel %vm1755, %v1752, %v1487
      %v1786 = vsel %vm1755, %v1753, %v1489
      %v1787 = vsel %vm1755, %v1754, %v1491
      %vm1788 = vcmask 293888
      %v1790 = vsel %vm1788, %v1756, 0
      %v1793 = vsel %vm1788, %v1757, 0
      %v1796 = vsel %vm1788, %v1758, 0
      %v1799 = vsel %vm1788, %v1759, 0
      %v1802 = vsel %vm1788, %v1760, 0
      %v1805 = vsel %vm1788, %v1761, 0
      %v1808 = vsel %vm1788, %v1762, 0
      %v1811 = vsel %vm1788, %v1763, 0
      %v1814 = vsel %vm1788, %v1764, 0
      %v1817 = vsel %vm1788, %v1765, 0
      %v1820 = vsel %vm1788, %v1766, 0
      %v1823 = vsel %vm1788, %v1767, 0
      %v1826 = vsel %vm1788, %v1768, 0
      %v1829 = vsel %vm1788, %v1769, 0
      %v1832 = vsel %vm1788, %v1770, 0
      %v1835 = vsel %vm1788, %v1771, 0
      %v1838 = vsel %vm1788, %v1772, 0
      %v1841 = vsel %vm1788, %v1773, 0
      %v1844 = vsel %vm1788, %v1774, 0
      %v1847 = vsel %vm1788, %v1775, 0
      %v1850 = vsel %vm1788, %v1776, 0
      %v1853 = vsel %vm1788, %v1777, 0
      %v1856 = vsel %vm1788, %v1778, 0
      %v1859 = vsel %vm1788, %v1779, 0
      %v1862 = vsel %vm1788, %v1780, 0
      %v1865 = vsel %vm1788, %v1781, 0
      %v1868 = vsel %vm1788, %v1782, 0
      %v1871 = vsel %vm1788, %v1783, 0
      %v1874 = vsel %vm1788, %v1784, 0
      %v1877 = vsel %vm1788, %v1785, 0
      %v1880 = vsel %vm1788, %v1786, 0
      %v1883 = vsel %vm1788, %v1787, 0
      %vm1885 = vcmask 1043456
      %v1887 = vsel %vm1885, %v382, 0
      %1889 = vmatprep.subr.mxu0 0.0
      %1890 = vmatpush1.msra.mxu0 0.0
      %1891 = vmatprep.subr.mxu0 0.0
      %1892 = vmatpush1.msra.mxu0 0.0
      %1893 = vmatprep.subr.mxu0 0.0
      %1894 = vmatpush1.msra.mxu0 0.0
      %1895 = vmatprep.subr.mxu0 0.0
      %1896 = vmatpush1.msra.mxu0 0.0
      %1897 = vmatprep.subr.mxu0 0.0
      %1898 = vmatpush1.msra.mxu0 0.0
      %1899 = vmatprep.subr.mxu0 0.0
      %1900 = vmatpush1.msra.mxu0 0.0
      %1901 = vmatprep.subr.mxu0 0.0
      %1902 = vmatpush1.msra.mxu0 0.0
      %1903 = vmatprep.subr.mxu0 0.0
      %1904 = vmatpush1.msra.mxu0 0.0
      %1905 = vmatprep.subr.mxu0 0.0
      %1906 = vmatpush1.msra.mxu0 0.0
      %1907 = vmatprep.subr.mxu0 0.0
      %1908 = vmatpush1.msra.mxu0 0.0
      %1909 = vmatprep.subr.mxu0 0.0
      %1910 = vmatpush1.msra.mxu0 0.0
      %1911 = vmatprep.subr.mxu0 0.0
      %1912 = vmatpush1.msra.mxu0 %v1887
      %1913 = vmatprep.subr.mxu0 0.0
      %1914 = vmatpush1.msra.mxu0 %v381
      %1915 = vmatprep.subr.mxu0 0.0
      %1916 = vmatpush1.msra.mxu0 %v380
      %1917 = vmatprep.subr.mxu0 0.0
      %1918 = vmatpush1.msra.mxu0 %v379
      %1919 = vmatprep.subr.mxu0 0.0
      %1920 = vmatpush1.msra.mxu0 %v378
      %1921 = vmatprep.subr.mxu0 0.0
      %1922 = vmatpush2.msra.mxu0 0.0
      %1923 = vmatprep.subr.mxu0 0.0
      %1924 = vmatpush2.msra.mxu0 0.0
      %1925 = vmatprep.subr.mxu0 0.0
      %1926 = vmatpush2.msra.mxu0 0.0
      %1927 = vmatprep.subr.mxu0 0.0
      %1928 = vmatpush2.msra.mxu0 0.0
      %1929 = vmatprep.subr.mxu0 0.0
      %1930 = vmatpush2.msra.mxu0 0.0
      %1931 = vmatprep.subr.mxu0 0.0
      %1932 = vmatpush2.msra.mxu0 0.0
      %1933 = vmatprep.subr.mxu0 0.0
      %1934 = vmatpush2.msra.mxu0 0.0
      %1935 = vmatprep.subr.mxu0 0.0
      %1936 = vmatpush2.msra.mxu0 0.0
      %1937 = vmatprep.subr.mxu0 0.0
      %1938 = vmatpush2.msra.mxu0 0.0
      %1939 = vmatprep.subr.mxu0 0.0
      %1940 = vmatpush2.msra.mxu0 0.0
      %1941 = vmatprep.subr.mxu0 0.0
      %1942 = vmatpush2.msra.mxu0 0.0
      %1943 = vmatprep.subr.mxu0 0.0
      %1944 = vmatpush2.msra.mxu0 0.0
      %1945 = vmatprep.subr.mxu0 0.0
      %1946 = vmatpush2.msra.mxu0 0.0
      %1947 = vmatprep.subr.mxu0 0.0
      %1948 = vmatpush2.msra.mxu0 0.0
      %1949 = vmatprep.subr.mxu0 0.0
      %1950 = vmatpush2.msra.mxu0 0.0
      %1951 = vmatprep.subr.mxu0 0.0
      %1952 = vmatpush2.msra.mxu0 0.0
      %1953 = vmatprep.mubr.f32.mxu0 0.0
      %1954 = vmatmul.mubr.f32.gmra.mxu0 %v1790
      %v1955 = vpop.f32.mrf.mxu0
      %v1956 = vadd.f32 0.0, %v1955
      %v1957 = vpop.f32.mrf.mxu0
      %1958 = vmatprep.mubr.f32.mxu0 0.0
      %1959 = vmatmul.mubr.f32.gmra.mxu0 %v1793
      %v1960 = vpop.f32.mrf.mxu0
      %v1961 = vadd.f32 0.0, %v1960
      %v1962 = vpop.f32.mrf.mxu0
      %1963 = vmatprep.mubr.f32.mxu0 0.0
      %1964 = vmatmul.mubr.f32.gmra.mxu0 %v1796
      %v1965 = vpop.f32.mrf.mxu0
      %v1966 = vadd.f32 0.0, %v1965
      %v1967 = vpop.f32.mrf.mxu0
      %1968 = vmatprep.mubr.f32.mxu0 0.0
      %1969 = vmatmul.mubr.f32.gmra.mxu0 %v1799
      %v1970 = vpop.f32.mrf.mxu0
      %v1971 = vadd.f32 0.0, %v1970
      %v1972 = vpop.f32.mrf.mxu0
      %1973 = vmatprep.mubr.f32.mxu0 0.0
      %1974 = vmatmul.mubr.f32.gmra.mxu0 %v1802
      %v1975 = vpop.f32.mrf.mxu0
      %v1976 = vadd.f32 0.0, %v1975
      %v1977 = vpop.f32.mrf.mxu0
      %1978 = vmatprep.mubr.f32.mxu0 0.0
      %1979 = vmatmul.mubr.f32.gmra.mxu0 %v1805
      %v1980 = vpop.f32.mrf.mxu0
      %v1981 = vadd.f32 0.0, %v1980
      %v1982 = vpop.f32.mrf.mxu0
      %1983 = vmatprep.mubr.f32.mxu0 0.0
      %1984 = vmatmul.mubr.f32.gmra.mxu0 %v1808
      %v1985 = vpop.f32.mrf.mxu0
      %v1986 = vadd.f32 0.0, %v1985
      %v1987 = vpop.f32.mrf.mxu0
      %1988 = vmatprep.mubr.f32.mxu0 0.0
      %1989 = vmatmul.mubr.f32.gmra.mxu0 %v1811
      %v1990 = vpop.f32.mrf.mxu0
      %v1991 = vadd.f32 0.0, %v1990
      %v1992 = vpop.f32.mrf.mxu0
      %1993 = vmatprep.mubr.f32.mxu0 0.0
      %1994 = vmatmul.mubr.f32.gmra.mxu0 %v1814
      %v1995 = vpop.f32.mrf.mxu0
      %v1996 = vadd.f32 0.0, %v1995
      %v1997 = vpop.f32.mrf.mxu0
      %1998 = vmatprep.mubr.f32.mxu0 0.0
      %1999 = vmatmul.mubr.f32.gmra.mxu0 %v1817
      %v2000 = vpop.f32.mrf.mxu0
      %v2001 = vadd.f32 0.0, %v2000
      %v2002 = vpop.f32.mrf.mxu0
      %2003 = vmatprep.mubr.f32.mxu0 0.0
      %2004 = vmatmul.mubr.f32.gmra.mxu0 %v1820
      %v2005 = vpop.f32.mrf.mxu0
      %v2006 = vadd.f32 0.0, %v2005
      %v2007 = vpop.f32.mrf.mxu0
      %2008 = vmatprep.mubr.f32.mxu0 0.0
      %2009 = vmatmul.mubr.f32.gmra.mxu0 %v1823
      %v2010 = vpop.f32.mrf.mxu0
      %v2011 = vadd.f32 0.0, %v2010
      %v2012 = vpop.f32.mrf.mxu0
      %2013 = vmatprep.mubr.f32.mxu0 0.0
      %2014 = vmatmul.mubr.f32.gmra.mxu0 %v1826
      %v2015 = vpop.f32.mrf.mxu0
      %v2016 = vadd.f32 0.0, %v2015
      %v2017 = vpop.f32.mrf.mxu0
      %2018 = vmatprep.mubr.f32.mxu0 0.0
      %2019 = vmatmul.mubr.f32.gmra.mxu0 %v1829
      %v2020 = vpop.f32.mrf.mxu0
      %v2021 = vadd.f32 0.0, %v2020
      %v2022 = vpop.f32.mrf.mxu0
      %2023 = vmatprep.mubr.f32.mxu0 0.0
      %2024 = vmatmul.mubr.f32.gmra.mxu0 %v1832
      %v2025 = vpop.f32.mrf.mxu0
      %v2026 = vadd.f32 0.0, %v2025
      %v2027 = vpop.f32.mrf.mxu0
      %2028 = vmatprep.mubr.f32.mxu0 0.0
      %2029 = vmatmul.mubr.f32.gmra.mxu0 %v1835
      %v2030 = vpop.f32.mrf.mxu0
      %v2031 = vadd.f32 0.0, %v2030
      %v2032 = vpop.f32.mrf.mxu0
      %2033 = vmatprep.mubr.f32.mxu0 0.0
      %2034 = vmatmul.mubr.f32.gmra.mxu0 %v1838
      %v2035 = vpop.f32.mrf.mxu0
      %v2036 = vadd.f32 0.0, %v2035
      %v2037 = vpop.f32.mrf.mxu0
      %2038 = vmatprep.mubr.f32.mxu0 0.0
      %2039 = vmatmul.mubr.f32.gmra.mxu0 %v1841
      %v2040 = vpop.f32.mrf.mxu0
      %v2041 = vadd.f32 0.0, %v2040
      %v2042 = vpop.f32.mrf.mxu0
      %2043 = vmatprep.mubr.f32.mxu0 0.0
      %2044 = vmatmul.mubr.f32.gmra.mxu0 %v1844
      %v2045 = vpop.f32.mrf.mxu0
      %v2046 = vadd.f32 0.0, %v2045
      %v2047 = vpop.f32.mrf.mxu0
      %2048 = vmatprep.mubr.f32.mxu0 0.0
      %2049 = vmatmul.mubr.f32.gmra.mxu0 %v1847
      %v2050 = vpop.f32.mrf.mxu0
      %v2051 = vadd.f32 0.0, %v2050
      %v2052 = vpop.f32.mrf.mxu0
      %2053 = vmatprep.mubr.f32.mxu0 0.0
      %2054 = vmatmul.mubr.f32.gmra.mxu0 %v1850
      %v2055 = vpop.f32.mrf.mxu0
      %v2056 = vadd.f32 0.0, %v2055
      %v2057 = vpop.f32.mrf.mxu0
      %2058 = vmatprep.mubr.f32.mxu0 0.0
      %2059 = vmatmul.mubr.f32.gmra.mxu0 %v1853
      %v2060 = vpop.f32.mrf.mxu0
      %v2061 = vadd.f32 0.0, %v2060
      %v2062 = vpop.f32.mrf.mxu0
      %2063 = vmatprep.mubr.f32.mxu0 0.0
      %2064 = vmatmul.mubr.f32.gmra.mxu0 %v1856
      %v2065 = vpop.f32.mrf.mxu0
      %v2066 = vadd.f32 0.0, %v2065
      %v2067 = vpop.f32.mrf.mxu0
      %2068 = vmatprep.mubr.f32.mxu0 0.0
      %2069 = vmatmul.mubr.f32.gmra.mxu0 %v1859
      %v2070 = vpop.f32.mrf.mxu0
      %v2071 = vadd.f32 0.0, %v2070
      %v2072 = vpop.f32.mrf.mxu0
      %2073 = vmatprep.mubr.f32.mxu0 0.0
      %2074 = vmatmul.mubr.f32.gmra.mxu0 %v1862
      %v2075 = vpop.f32.mrf.mxu0
      %v2076 = vadd.f32 0.0, %v2075
      %v2077 = vpop.f32.mrf.mxu0
      %2078 = vmatprep.mubr.f32.mxu0 0.0
      %2079 = vmatmul.mubr.f32.gmra.mxu0 %v1865
      %v2080 = vpop.f32.mrf.mxu0
      %v2081 = vadd.f32 0.0, %v2080
      %v2082 = vpop.f32.mrf.mxu0
      %2083 = vmatprep.mubr.f32.mxu0 0.0
      %2084 = vmatmul.mubr.f32.gmra.mxu0 %v1868
      %v2085 = vpop.f32.mrf.mxu0
      %v2086 = vadd.f32 0.0, %v2085
      %v2087 = vpop.f32.mrf.mxu0
      %2088 = vmatprep.mubr.f32.mxu0 0.0
      %2089 = vmatmul.mubr.f32.gmra.mxu0 %v1871
      %v2090 = vpop.f32.mrf.mxu0
      %v2091 = vadd.f32 0.0, %v2090
      %v2092 = vpop.f32.mrf.mxu0
      %2093 = vmatprep.mubr.f32.mxu0 0.0
      %2094 = vmatmul.mubr.f32.gmra.mxu0 %v1874
      %v2095 = vpop.f32.mrf.mxu0
      %v2096 = vadd.f32 0.0, %v2095
      %v2097 = vpop.f32.mrf.mxu0
      %2098 = vmatprep.mubr.f32.mxu0 0.0
      %2099 = vmatmul.mubr.f32.gmra.mxu0 %v1877
      %v2100 = vpop.f32.mrf.mxu0
      %v2101 = vadd.f32 0.0, %v2100
      %v2102 = vpop.f32.mrf.mxu0
      %2103 = vmatprep.mubr.f32.mxu0 0.0
      %2104 = vmatmul.mubr.f32.gmra.mxu0 %v1880
      %v2105 = vpop.f32.mrf.mxu0
      %v2106 = vadd.f32 0.0, %v2105
      %v2107 = vpop.f32.mrf.mxu0
      %2108 = vmatprep.mubr.f32.mxu0 0.0
      %2109 = vmatmul.mubr.f32.gmra.mxu0 %v1883
      %v2110 = vpop.f32.mrf.mxu0
      %v2111 = vadd.f32 0.0, %v2110
      %v2112 = vpop.f32.mrf.mxu0
      %2113 = vdwg.mxu0
      %2114 = vst.msk [vmem:[%s231] sm:$0xff] %vm1524, %v1956
      %2115 = vst.msk [vmem:[%s231 + $0x8] sm:$0xff] %vm1524, %v1961
      %2116 = vst.msk [vmem:[%s231 + $0x10] sm:$0xff] %vm1524, %v1966
      %2117 = vst.msk [vmem:[%s231 + $0x18] sm:$0xff] %vm1524, %v1971
      %2118 = vst.msk [vmem:[%s231 + $0x20] sm:$0xff] %vm1524, %v1976
      %2119 = vst.msk [vmem:[%s231 + $0x28] sm:$0xff] %vm1524, %v1981
      %2120 = vst.msk [vmem:[%s231 + $0x30] sm:$0xff] %vm1524, %v1986
      %2121 = vst.msk [vmem:[%s231 + $0x38] sm:$0xff] %vm1524, %v1991
      %2122 = vst.msk [vmem:[%s231 + $0x40] sm:$0xff] %vm1524, %v1996
      %2123 = vst.msk [vmem:[%s231 + $0x48] sm:$0xff] %vm1524, %v2001
      %2124 = vst.msk [vmem:[%s231 + $0x50] sm:$0xff] %vm1524, %v2006
      %2125 = vst.msk [vmem:[%s231 + $0x58] sm:$0xff] %vm1524, %v2011
      %2126 = vst.msk [vmem:[%s231 + $0x60] sm:$0xff] %vm1524, %v2016
      %2127 = vst.msk [vmem:[%s231 + $0x68] sm:$0xff] %vm1524, %v2021
      %2128 = vst.msk [vmem:[%s231 + $0x70] sm:$0xff] %vm1524, %v2026
      %2129 = vst.msk [vmem:[%s231 + $0x78] sm:$0xff] %vm1524, %v2031
      %2130 = vst.msk [vmem:[%s231 + $0x80] sm:$0xff] %vm1524, %v2036
      %2131 = vst.msk [vmem:[%s231 + $0x88] sm:$0xff] %vm1524, %v2041
      %2132 = vst.msk [vmem:[%s231 + $0x90] sm:$0xff] %vm1524, %v2046
      %2133 = vst.msk [vmem:[%s231 + $0x98] sm:$0xff] %vm1524, %v2051
      %2134 = vst.msk [vmem:[%s231 + $0xa0] sm:$0xff] %vm1524, %v2056
      %2135 = vst.msk [vmem:[%s231 + $0xa8] sm:$0xff] %vm1524, %v2061
      %2136 = vst.msk [vmem:[%s231 + $0xb0] sm:$0xff] %vm1524, %v2066
      %2137 = vst.msk [vmem:[%s231 + $0xb8] sm:$0xff] %vm1524, %v2071
      %2138 = vst.msk [vmem:[%s231 + $0xc0] sm:$0xff] %vm1524, %v2076
      %2139 = vst.msk [vmem:[%s231 + $0xc8] sm:$0xff] %vm1524, %v2081
      %2140 = vst.msk [vmem:[%s231 + $0xd0] sm:$0xff] %vm1524, %v2086
      %2141 = vst.msk [vmem:[%s231 + $0xd8] sm:$0xff] %vm1524, %v2091
      %2142 = vst.msk [vmem:[%s231 + $0xe0] sm:$0xff] %vm1524, %v2096
      %2143 = vst.msk [vmem:[%s231 + $0xe8] sm:$0xff] %vm1524, %v2101
      %2144 = vst.msk [vmem:[%s231 + $0xf0] sm:$0xff] %vm1524, %v2106
      %2145 = vst.msk [vmem:[%s231 + $0xf8] sm:$0xff] %vm1524, %v2111
      %v2146 = vsel %vm1524, %v1956, 0.0
      %v2147 = vsel %vm1524, %v1961, 0.0
      %v2148 = vadd.f32 %v2146, %v2147
      %v2149 = vsel %vm1524, %v1966, 0.0
      %v2150 = vadd.f32 %v2148, %v2149
      %v2151 = vsel %vm1524, %v1971, 0.0
      %v2152 = vadd.f32 %v2150, %v2151
      %v2153 = vsel %vm1524, %v1976, 0.0
      %v2154 = vadd.f32 %v2152, %v2153
      %v2155 = vsel %vm1524, %v1981, 0.0
      %v2156 = vadd.f32 %v2154, %v2155
      %v2157 = vsel %vm1524, %v1986, 0.0
      %v2158 = vadd.f32 %v2156, %v2157
      %v2159 = vsel %vm1524, %v1991, 0.0
      %v2160 = vadd.f32 %v2158, %v2159
      %v2161 = vsel %vm1524, %v1996, 0.0
      %v2162 = vadd.f32 %v2160, %v2161
      %v2163 = vsel %vm1524, %v2001, 0.0
      %v2164 = vadd.f32 %v2162, %v2163
      %v2165 = vsel %vm1524, %v2006, 0.0
      %v2166 = vadd.f32 %v2164, %v2165
      %v2167 = vsel %vm1524, %v2011, 0.0
      %v2168 = vadd.f32 %v2166, %v2167
      %v2169 = vsel %vm1524, %v2016, 0.0
      %v2170 = vadd.f32 %v2168, %v2169
      %v2171 = vsel %vm1524, %v2021, 0.0
      %v2172 = vadd.f32 %v2170, %v2171
      %v2173 = vsel %vm1524, %v2026, 0.0
      %v2174 = vadd.f32 %v2172, %v2173
      %v2175 = vsel %vm1524, %v2031, 0.0
      %v2176 = vadd.f32 %v2174, %v2175
      %v2177 = vsel %vm1524, %v2036, 0.0
      %v2178 = vadd.f32 %v2176, %v2177
      %v2179 = vsel %vm1524, %v2041, 0.0
      %v2180 = vadd.f32 %v2178, %v2179
      %v2181 = vsel %vm1524, %v2046, 0.0
      %v2182 = vadd.f32 %v2180, %v2181
      %v2183 = vsel %vm1524, %v2051, 0.0
      %v2184 = vadd.f32 %v2182, %v2183
      %v2185 = vsel %vm1524, %v2056, 0.0
      %v2186 = vadd.f32 %v2184, %v2185
      %v2187 = vsel %vm1524, %v2061, 0.0
      %v2188 = vadd.f32 %v2186, %v2187
      %v2189 = vsel %vm1524, %v2066, 0.0
      %v2190 = vadd.f32 %v2188, %v2189
      %v2191 = vsel %vm1524, %v2071, 0.0
      %v2192 = vadd.f32 %v2190, %v2191
      %v2193 = vsel %vm1524, %v2076, 0.0
      %v2194 = vadd.f32 %v2192, %v2193
      %v2195 = vsel %vm1524, %v2081, 0.0
      %v2196 = vadd.f32 %v2194, %v2195
      %v2197 = vsel %vm1524, %v2086, 0.0
      %v2198 = vadd.f32 %v2196, %v2197
      %v2199 = vsel %vm1524, %v2091, 0.0
      %v2200 = vadd.f32 %v2198, %v2199
      %v2201 = vsel %vm1524, %v2096, 0.0
      %v2202 = vadd.f32 %v2200, %v2201
      %v2203 = vsel %vm1524, %v2101, 0.0
      %v2204 = vadd.f32 %v2202, %v2203
      %v2205 = vsel %vm1524, %v2106, 0.0
      %v2206 = vadd.f32 %v2204, %v2205
      %v2207 = vsel %vm1524, %v2111, 0.0
      %v2208 = vadd.f32 %v2206, %v2207
      %v2209 = vrot.slane %v2208, 4
      %v2210 = vadd.f32 %v2208, %v2209
      %v2211 = vrot.slane %v2210, 2
      %v2212 = vadd.f32 %v2210, %v2211
      %v2213 = vrot.slane %v2212, 1
      %v2214 = vadd.f32 %v2212, %v2213
      %v2215 = vmul.f32 %v1956, %v1956
      %v2216 = vmul.f32 %v1961, %v1961
      %v2217 = vmul.f32 %v1966, %v1966
      %v2218 = vmul.f32 %v1971, %v1971
      %v2219 = vmul.f32 %v1976, %v1976
      %v2220 = vmul.f32 %v1981, %v1981
      %v2221 = vmul.f32 %v1986, %v1986
      %v2222 = vmul.f32 %v1991, %v1991
      %v2223 = vmul.f32 %v1996, %v1996
      %v2224 = vmul.f32 %v2001, %v2001
      %v2225 = vmul.f32 %v2006, %v2006
      %v2226 = vmul.f32 %v2011, %v2011
      %v2227 = vmul.f32 %v2016, %v2016
      %v2228 = vmul.f32 %v2021, %v2021
      %v2229 = vmul.f32 %v2026, %v2026
      %v2230 = vmul.f32 %v2031, %v2031
      %v2231 = vmul.f32 %v2036, %v2036
      %v2232 = vmul.f32 %v2041, %v2041
      %v2233 = vmul.f32 %v2046, %v2046
      %v2234 = vmul.f32 %v2051, %v2051
      %v2235 = vmul.f32 %v2056, %v2056
      %v2236 = vmul.f32 %v2061, %v2061
      %v2237 = vmul.f32 %v2066, %v2066
      %v2238 = vmul.f32 %v2071, %v2071
      %v2239 = vmul.f32 %v2076, %v2076
      %v2240 = vmul.f32 %v2081, %v2081
      %v2241 = vmul.f32 %v2086, %v2086
      %v2242 = vmul.f32 %v2091, %v2091
      %v2243 = vmul.f32 %v2096, %v2096
      %v2244 = vmul.f32 %v2101, %v2101
      %v2245 = vmul.f32 %v2106, %v2106
      %v2246 = vmul.f32 %v2111, %v2111
      %v2247 = vsel %vm1524, %v2215, 0.0
      %v2248 = vsel %vm1524, %v2216, 0.0
      %v2249 = vadd.f32 %v2247, %v2248
      %v2250 = vsel %vm1524, %v2217, 0.0
      %v2251 = vadd.f32 %v2249, %v2250
      %v2252 = vsel %vm1524, %v2218, 0.0
      %v2253 = vadd.f32 %v2251, %v2252
      %v2254 = vsel %vm1524, %v2219, 0.0
      %v2255 = vadd.f32 %v2253, %v2254
      %v2256 = vsel %vm1524, %v2220, 0.0
      %v2257 = vadd.f32 %v2255, %v2256
      %v2258 = vsel %vm1524, %v2221, 0.0
      %v2259 = vadd.f32 %v2257, %v2258
      %v2260 = vsel %vm1524, %v2222, 0.0
      %v2261 = vadd.f32 %v2259, %v2260
      %v2262 = vsel %vm1524, %v2223, 0.0
      %v2263 = vadd.f32 %v2261, %v2262
      %v2264 = vsel %vm1524, %v2224, 0.0
      %v2265 = vadd.f32 %v2263, %v2264
      %v2266 = vsel %vm1524, %v2225, 0.0
      %v2267 = vadd.f32 %v2265, %v2266
      %v2268 = vsel %vm1524, %v2226, 0.0
      %v2269 = vadd.f32 %v2267, %v2268
      %v2270 = vsel %vm1524, %v2227, 0.0
      %v2271 = vadd.f32 %v2269, %v2270
      %v2272 = vsel %vm1524, %v2228, 0.0
      %v2273 = vadd.f32 %v2271, %v2272
      %v2274 = vsel %vm1524, %v2229, 0.0
      %v2275 = vadd.f32 %v2273, %v2274
      %v2276 = vsel %vm1524, %v2230, 0.0
      %v2277 = vadd.f32 %v2275, %v2276
      %v2278 = vsel %vm1524, %v2231, 0.0
      %v2279 = vadd.f32 %v2277, %v2278
      %v2280 = vsel %vm1524, %v2232, 0.0
      %v2281 = vadd.f32 %v2279, %v2280
      %v2282 = vsel %vm1524, %v2233, 0.0
      %v2283 = vadd.f32 %v2281, %v2282
      %v2284 = vsel %vm1524, %v2234, 0.0
      %v2285 = vadd.f32 %v2283, %v2284
      %v2286 = vsel %vm1524, %v2235, 0.0
      %v2287 = vadd.f32 %v2285, %v2286
      %v2288 = vsel %vm1524, %v2236, 0.0
      %v2289 = vadd.f32 %v2287, %v2288
      %v2290 = vsel %vm1524, %v2237, 0.0
      %v2291 = vadd.f32 %v2289, %v2290
      %v2292 = vsel %vm1524, %v2238, 0.0
      %v2293 = vadd.f32 %v2291, %v2292
      %v2294 = vsel %vm1524, %v2239, 0.0
      %v2295 = vadd.f32 %v2293, %v2294
      %v2296 = vsel %vm1524, %v2240, 0.0
      %v2297 = vadd.f32 %v2295, %v2296
      %v2298 = vsel %vm1524, %v2241, 0.0
      %v2299 = vadd.f32 %v2297, %v2298
      %v2300 = vsel %vm1524, %v2242, 0.0
      %v2301 = vadd.f32 %v2299, %v2300
      %v2302 = vsel %vm1524, %v2243, 0.0
      %v2303 = vadd.f32 %v2301, %v2302
      %v2304 = vsel %vm1524, %v2244, 0.0
      %v2305 = vadd.f32 %v2303, %v2304
      %v2306 = vsel %vm1524, %v2245, 0.0
      %v2307 = vadd.f32 %v2305, %v2306
      %v2308 = vsel %vm1524, %v2246, 0.0
      %v2309 = vadd.f32 %v2307, %v2308
      %v2310 = vrot.slane %v2309, 4
      %v2311 = vadd.f32 %v2309, %v2310
      %v2312 = vrot.slane %v2311, 2
      %v2313 = vadd.f32 %v2311, %v2312
      %v2314 = vrot.slane %v2313, 1
      %v2315 = vadd.f32 %v2313, %v2314
      %v2316 = vsel %vm416, %v2214, %v2315
      %vm2317 = vcmask 25600
      %2318 = vst.msk [vmem:[%s235] sm:$0x3] %vm2317, %v2316
      %p2319 = scmp.lt.s32.totalorder %s17, 1
      %s2320 = scalar_select %p2319, %s17, 1
      %s2321 = smul.addr %s2320, 32
      %s2322 = smul.addr %s2321, 8
      %s2323 = scalar_lea.vmem %s4, %s2322
      %p2324 = scmp.lt.s32.totalorder %s17, 1
      %s2325 = scalar_select %p2324, %s17, 1
      %s2326 = smul.addr %s2325, 2
      %s2327 = scalar_lea.vmem %s5, %s2326
      // Predicated region
      $region37: #{residual_forward.4} parent=35 // pred_check
        %p2328 = pneg %p124
      $region38: #{residual_forward.4} parent=35 // pred_check_branch
        %2330 = sbr.rel (%p2328) target = $region40
      $region39: #{residual_forward.4} parent=35 // pred_region
        _
      $region40: #{residual_forward.4} parent=35 // pred_fallthru
        _
      // Predicated region
      $region41: #{residual_forward.4} parent=35 // pred_check
        %p2331 = pneg %p150
      $region42: #{residual_forward.4} parent=35 // pred_check_branch
        %2333 = sbr.rel (%p2331) target = $region44
      $region43: #{residual_forward.4} parent=35 // pred_region
        _
      $region44: #{residual_forward.4} parent=35 // pred_fallthru
        _
    $region36: #{residual_forward.4} parent=5 // pred_fallthru
      _
    %p2334 = scmp.le.s32.totalorder 2, %s12
    // Predicated region
    $region45: #{residual_forward.4} parent=5 // pred_check
      %p2335 = pneg %p2334
    $region46: #{residual_forward.4} parent=5 // pred_check_branch
      %2337 = sbr.rel (%p2335) target = $region48
    $region47: #{residual_forward.4} parent=5 // pred_region
      %s2338 = ssub.s32 %s12, 2
      // Predicated region
      $region49: #{residual_forward.4} parent=47 // pred_check
        %p2339 = pneg %p130
      $region50: #{residual_forward.4} parent=47 // pred_check_branch
        %2341 = sbr.rel (%p2339) target = $region52
      $region51: #{residual_forward.4} parent=47 // pred_region
        %p2342 = scmp.lt.s32.totalorder %s18, 1
        %s2343 = scalar_select %p2342, %s18, 1
        %s2344 = smul.addr %s2343, 32
        %s2345 = smul.addr %s2344, 8
        %s2346 = scalar_lea.vmem %s4, %s2345
      $region52: #{residual_forward.4} parent=47 // pred_fallthru
        _
      // Predicated region
      $region53: #{residual_forward.4} parent=47 // pred_check
        %p2347 = pneg %p156
      $region54: #{residual_forward.4} parent=47 // pred_check_branch
        %2349 = sbr.rel (%p2347) target = $region56
      $region55: #{residual_forward.4} parent=47 // pred_region
        %p2350 = scmp.lt.s32.totalorder %s18, 1
        %s2351 = scalar_select %p2350, %s18, 1
        %s2352 = smul.addr %s2351, 2
        %s2353 = scalar_lea.vmem %s5, %s2352
      $region56: #{residual_forward.4} parent=47 // pred_fallthru
        _
    $region48: #{residual_forward.4} parent=5 // pred_fallthru
      _
  $region6: #{residual_forward.4} parent=0 // loop_footer
    %s16 = sadd.s32 1, %s12
  $region7: #{residual_forward.4} parent=0 // loop_footer_branch
    %11 = sbr.rel target = $region3
  $region8: #{residual_forward.4} parent=0 // loop_exit
    _

</llo_original>
